<compile_context>
chip_gen: v7x
topology: tpu7x:2x2x1
jax: 0.10.0
libtpu: 0.0.40
codegen_flags: <defaults>
</compile_context>

<pallas_src>
import functools

import numpy as np
import jax
import jax.numpy as jnp
from jax import lax
from jax.experimental import pallas as pl
from jax.experimental.pallas import tpu as pltpu


def _round_up(x, m):
    return (x + m - 1) // m * m


def _padded_block_bytes(shape, dtype):
    """Rough VMEM footprint of one block, accounting for (sublane, lane) layout padding."""
    s = list(shape)
    if len(s) >= 1:
        s[-1] = _round_up(int(s[-1]), 128)
    if len(s) >= 2:
        s[-2] = _round_up(int(s[-2]), 8)
    n = 1
    for d in s:
        n *= int(d)
    return n * np.dtype(dtype).itemsize


def _vmem_limit(block_specs):
    """block_specs: iterable of (shape, dtype). Double-buffered sum + margin, HW-capped."""
    need = sum(2 * _padded_block_bytes(s, d) for s, d in block_specs) + (4 << 20)
    try:
        cap = int(getattr(pltpu.get_tpu_info(), "vmem_capacity_bytes", 64 << 20))
    except Exception:
        cap = 64 << 20  # v7x has the smallest physical VMEM (64 MiB); be conservative.
    return int(min(max(need, 32 << 20), int(0.75 * cap)))


# ----------------------------- Pallas kernels --------------------------------

def conv_stats_kernel(x_ref, w_ref, conv_ref, stats_ref, *, k, stride, tr, ow):
    """Direct conv for one (image, row-block, cout-block) tile + BN partial stats.

    x_ref    : (Hp, Wp, Cin)   bf16  -- whole zero-padded image (VMEM resident per image)
    w_ref    : (k, k, Cin, TC) bf16  -- VMEM-resident weight block
    conv_ref : (tr, ow, TC)    bf16  -- conv output tile
    stats_ref: (2, TC)         f32   -- [sum; sum-of-squares] over this tile's tr*ow pixels
    """
    cin = x_ref.shape[-1]
    tc = w_ref.shape[-1]
    row0 = pl.program_id(1) * (tr * stride)

    acc = jnp.zeros((tr * ow, tc), jnp.float32)
    for dy in range(k):
        if stride == 1:
            rows = x_ref[pl.ds(row0 + dy, tr)]                         # (tr, Wp, Cin)
        else:
            rows = x_ref[pl.ds(row0 + dy, tr, stride=stride)]
        for dx in range(k):
            if stride == 1:
                tap = rows[:, dx:dx + ow, :]                            # (tr, ow, Cin)
            else:
                tap = rows[:, dx:dx + (ow - 1) * stride + 1:stride, :]
            acc = acc + jnp.dot(tap.reshape(tr * ow, cin), w_ref[dy, dx],
                                preferred_element_type=jnp.float32)

    conv_ref[...] = acc.reshape(tr, ow, tc).astype(conv_ref.dtype)
    # Padded output rows (beyond OH) read all-zero input and contribute exactly 0 here.
    # TODO(synk): sum / sum-of-squares partials can cancel catastrophically for very large
    # N*OH*OW with large |mean|; switch to mean-shifted (Chan) partials if that regime matters.
    stats_ref[0:1, :] = jnp.sum(acc, axis=0, keepdims=True)
    stats_ref[1:2, :] = jnp.sum(acc * acc, axis=0, keepdims=True)


def scale_shift_relu_kernel(x_ref, scale_ref, shift_ref, o_ref):
    """y = max(x * scale + shift, 0) with f32 math over a bf16 conv tile."""
    x = x_ref[...].astype(jnp.float32)
    s = scale_ref[...].reshape(1, 1, -1)
    b = shift_ref[...].reshape(1, 1, -1)
    o_ref[...] = jnp.maximum(x * s + b, 0.0)


# ------------------------------ host wrapper ----------------------------------

def conv_bn_relu(x_nchw, conv_w, conv_b, bn_gamma, bn_beta, *, stride=1, eps=1e-5):
    """Forward pass of ConvBnRelu. x_nchw: (N, Cin, H, W) f32 -> (N, Cout, OH, OW) f32."""
    # Training-mode BN cancels the per-channel conv bias exactly (see header note).
    del conv_b

    N, Cin, H, W = x_nchw.shape
    Cout, _, kh, kw = conv_w.shape
    assert kh == kw
    k = kh
    pad = (k - 1) // 2
    OH = (H + 2 * pad - k) // stride + 1
    OW = (W + 2 * pad - k) // stride + 1
    M = N * OH * OW  # real output pixels per channel

    # ---- channel tiling: lane-dense; 256-wide when it divides (v6e/v7x MXU width) ----
    Cpad = _round_up(Cout, 128)
    TC = 256 if Cpad % 256 == 0 else 128
    CB = Cpad // TC

    # ---- output-row tiling: keep the f32 accumulator register-resident (~16 vregs) ----
    TR = max(1, min(OH, max(1, 128 // max(OW, 1))))
    R = -(-OH // TR)
    OHpad = R * TR

    # ---- zero-padded NHWC input; extra bottom rows so padded output rows see zeros ----
    Hp = max(H + 2 * pad, (OHpad - 1) * stride + k)
    Wp = max(W + 2 * pad, (OW - 1) * stride + k)
    x = jnp.transpose(x_nchw, (0, 2, 3, 1)).astype(jnp.bfloat16)          # (N, H, W, Cin)
    xp = jnp.pad(x, ((0, 0), (pad, Hp - H - pad), (pad, Wp - W - pad), (0, 0)))

    # Weights -> (k, k, Cin, Cpad), zero-padded channels, bf16 (MXU fast path).
    w4 = jnp.transpose(conv_w, (2, 3, 1, 0))
    w4 = jnp.pad(w4, ((0, 0), (0, 0), (0, 0), (0, Cpad - Cout))).astype(jnp.bfloat16)

    vmem1 = _vmem_limit([
        ((Hp, Wp, Cin), jnp.bfloat16),
        ((k, k, Cin, TC), jnp.bfloat16),
        ((TR, OW, TC), jnp.bfloat16),
        ((2, TC), jnp.float32),
        ((TR * OW, TC), jnp.float32),   # accumulator / spill headroom
    ])

    # --- kernel 1: direct conv (all taps in one grid step) + BN partial stats ---
    conv_out, stats = pl.pallas_call(
        functools.partial(conv_stats_kernel, k=k, stride=stride, tr=TR, ow=OW),
        out_shape=(
            jax.ShapeDtypeStruct((N, OHpad, OW, Cpad), jnp.bfloat16),
            jax.ShapeDtypeStruct((N, R, 2, Cpad), jnp.float32),
        ),
        grid=(N, R, CB),
        in_specs=[
            pl.BlockSpec((None, Hp, Wp, Cin), lambda n, r, c: (n, 0, 0, 0)),
            pl.BlockSpec((k, k, Cin, TC), lambda n, r, c: (0, 0, 0, c)),
        ],
        out_specs=[
            pl.BlockSpec((None, TR, OW, TC), lambda n, r, c: (n, r, 0, c)),
            pl.BlockSpec((None, None, 2, TC), lambda n, r, c: (n, r, 0, c)),
        ],
        compiler_params=pltpu.CompilerParams(
            dimension_semantics=("parallel", "parallel", "parallel"),
            vmem_limit_bytes=vmem1,
        ),
    )(xp, w4)

    # --- tiny per-channel glue: reduce partials, precompute scale/shift (f32) ---
    # Padded rows / padded channels contribute exactly zero to both sums, so dividing by
    # the real M gives exact training-mode (biased) batch statistics.
    stats_sum = jnp.sum(stats, axis=(0, 1))                    # (2, Cpad)
    mean = stats_sum[0] / float(M)
    var = jnp.maximum(stats_sum[1] / float(M) - mean * mean, 0.0)
    gamma = jnp.pad(bn_gamma.astype(jnp.float32), (0, Cpad - Cout))
    beta = jnp.pad(bn_beta.astype(jnp.float32), (0, Cpad - Cout))
    g_inv = gamma * lax.rsqrt(var + eps)
    scale = g_inv.reshape(1, Cpad)
    shift = (beta - mean * g_inv).reshape(1, Cpad)

    vmem2 = _vmem_limit([
        ((TR, OW, TC), jnp.bfloat16),
        ((1, TC), jnp.float32),
        ((1, TC), jnp.float32),
        ((TR, OW, TC), jnp.float32),
    ])

    # --- kernel 2: streaming scale*x + shift, ReLU (lane-dense TC-wide stores) ---
    y = pl.pallas_call(
        scale_shift_relu_kernel,
        out_shape=jax.ShapeDtypeStruct((N, OHpad, OW, Cpad), jnp.float32),
        grid=(N, R, CB),
        in_specs=[
            pl.BlockSpec((None, TR, OW, TC), lambda n, r, c: (n, r, 0, c)),
            pl.BlockSpec((1, TC), lambda n, r, c: (0, c)),
            pl.BlockSpec((1, TC), lambda n, r, c: (0, c)),
        ],
        out_specs=pl.BlockSpec((None, TR, OW, TC), lambda n, r, c: (n, r, 0, c)),
        compiler_params=pltpu.CompilerParams(
            dimension_semantics=("parallel", "parallel", "parallel"),
            vmem_limit_bytes=vmem2,
        ),
    )(conv_out, scale, shift)

    # Strip padding, back to NCHW (module contract keeps the PyTorch layout/dtype).
    y = y[:, :OH, :, :Cout]
    return jnp.transpose(y, (0, 3, 1, 2))


# ------------------------------ reference (plain JAX, f32) --------------------

def conv_bn_relu_ref(x_nchw, conv_w, conv_b, bn_gamma, bn_beta, *, stride=1, eps=1e-5):
    k = conv_w.shape[2]
    pad = (k - 1) // 2
    conv = lax.conv_general_dilated(
        x_nchw, conv_w,
        window_strides=(stride, stride),
        padding=((pad, pad), (pad, pad)),
        dimension_numbers=("NCHW", "OIHW", "NCHW"),
    ) + conv_b.reshape(1, -1, 1, 1)
    mean = jnp.mean(conv, axis=(0, 2, 3), keepdims=True)
    var = jnp.mean((conv - mean) ** 2, axis=(0, 2, 3), keepdims=True)
    bn = (conv - mean) * lax.rsqrt(var + eps)
    bn = bn * bn_gamma.reshape(1, -1, 1, 1) + bn_beta.reshape(1, -1, 1, 1)
    return jnp.maximum(bn, 0.0)


# ------------------------------------ main ------------------------------------

if __name__ == "__main__":
    # ConvBnRelu(in_dim=4, out_dim=8, k=3, stride=1)
    N, Cin, H, W = 2, 4, 16, 16
    Cout, k, stride = 8, 3, 1

    key = jax.random.PRNGKey(0)
    kx, kw_, kb, kg, kbe = jax.random.split(key, 5)

    x = jax.random.normal(kx, (N, Cin, H, W), dtype=jnp.float32)
    conv_w = jax.random.normal(kw_, (Cout, Cin, k, k), dtype=jnp.float32) * 0.1
    conv_b = jax.random.normal(kb, (Cout,), dtype=jnp.float32) * 0.1
    bn_gamma = 1.0 + 0.1 * jax.random.normal(kg, (Cout,), dtype=jnp.float32)
    bn_beta = 0.1 * jax.random.normal(kbe, (Cout,), dtype=jnp.float32)

    fwd = jax.jit(functools.partial(conv_bn_relu, stride=stride))
    out = fwd(x, conv_w, conv_b, bn_gamma, bn_beta)
    out = jax.block_until_ready(out)

    ref = conv_bn_relu_ref(x, conv_w, conv_b, bn_gamma, bn_beta, stride=stride)
    assert out.shape == (N, Cout, H, W)
    # bf16 inputs/weights + bf16 conv intermediate -> compare against the f32 reference
    # at a bf16-appropriate tolerance.
    max_err = float(jnp.max(jnp.abs(out - ref)))
    assert jnp.allclose(out, ref, rtol=2e-2, atol=2e-2), max_err

    print("KERNEL_OK")
</pallas_src>

<mosaic_0001>
module attributes {stable_mosaic.version = 11 : i64} {
  func.func @conv_stats_kernel(%arg0: i32, %arg1: i32, %arg2: i32, %arg3: memref<1x18x18x4xbf16, #tpu.memory_space<vmem>>, %arg4: memref<3x3x4x128xbf16, #tpu.memory_space<vmem>>, %arg5: memref<1x8x16x128xbf16, #tpu.memory_space<vmem>>, %arg6: memref<1x1x2x128xf32, #tpu.memory_space<vmem>>) attributes {dimension_semantics = [#tpu.dimension_semantics<parallel>, #tpu.dimension_semantics<parallel>, #tpu.dimension_semantics<parallel>], iteration_bounds = array<i64: 2, 2, 1>, scalar_prefetch = 0 : i64, scratch_operands = 0 : i64, tpu.core_type = #tpu.core_type<tc>, window_params = [{transform_indices = @transform_0, window_bounds = array<i64: 1, 18, 18, 4>}, {transform_indices = @transform_1, window_bounds = array<i64: 3, 3, 4, 128>}, {transform_indices = @transform_2, window_bounds = array<i64: 1, 8, 16, 128>}, {transform_indices = @transform_3, window_bounds = array<i64: 1, 1, 2, 128>}]} {
    %c8_i32 = arith.constant 8 : i32
    %0 = arith.muli %arg1, %c8_i32 : i32
    %cst = arith.constant 0.000000e+00 : f32
    %1 = vector.broadcast %cst : f32 to vector<128x128xf32>
    %c0_i32 = arith.constant 0 : i32
    %2 = arith.addi %0, %c0_i32 : i32
    %c0 = arith.constant 0 : index
    %3 = arith.index_cast %2 : i32 to index
    %c0_0 = arith.constant 0 : index
    %c0_1 = arith.constant 0 : index
    %4 = vector.load %arg3[%c0, %3, %c0_0, %c0_1] : memref<1x18x18x4xbf16, #tpu.memory_space<vmem>>, vector<1x8x18x4xbf16>
    %5 = vector.shape_cast %4 : vector<1x8x18x4xbf16> to vector<8x18x4xbf16>
    %6 = vector.extract_strided_slice %5 {offsets = [0, 0, 0], sizes = [8, 16, 4], strides = [1, 1, 1]} : vector<8x18x4xbf16> to vector<8x16x4xbf16>
    %7 = vector.shape_cast %6 : vector<8x16x4xbf16> to vector<128x4xbf16>
    %c0_2 = arith.constant 0 : index
    %c0_3 = arith.constant 0 : index
    %c0_4 = arith.constant 0 : index
    %c0_5 = arith.constant 0 : index
    %8 = vector.load %arg4[%c0_2, %c0_3, %c0_4, %c0_5] : memref<3x3x4x128xbf16, #tpu.memory_space<vmem>>, vector<1x1x4x128xbf16>
    %9 = vector.shape_cast %8 : vector<1x1x4x128xbf16> to vector<4x128xbf16>
    %cst_6 = arith.constant dense<0.000000e+00> : vector<128x128xf32>
    %10 = tpu.matmul %7, %9, %cst_6 {dimension_numbers = #tpu.dot_dimension_numbers<[1], [0], [0], [1], [0, 0, 1, 1], [], []>} : vector<128x4xbf16>, vector<4x128xbf16>, vector<128x128xf32> -> vector<128x128xf32>
    %11 = arith.addf %1, %10 : vector<128x128xf32>
    %12 = vector.extract_strided_slice %5 {offsets = [0, 1, 0], sizes = [8, 16, 4], strides = [1, 1, 1]} : vector<8x18x4xbf16> to vector<8x16x4xbf16>
    %13 = vector.shape_cast %12 : vector<8x16x4xbf16> to vector<128x4xbf16>
    %c0_7 = arith.constant 0 : index
    %c1 = arith.constant 1 : index
    %c0_8 = arith.constant 0 : index
    %c0_9 = arith.constant 0 : index
    %14 = vector.load %arg4[%c0_7, %c1, %c0_8, %c0_9] : memref<3x3x4x128xbf16, #tpu.memory_space<vmem>>, vector<1x1x4x128xbf16>
    %15 = vector.shape_cast %14 : vector<1x1x4x128xbf16> to vector<4x128xbf16>
    %cst_10 = arith.constant dense<0.000000e+00> : vector<128x128xf32>
    %16 = tpu.matmul %13, %15, %cst_10 {dimension_numbers = #tpu.dot_dimension_numbers<[1], [0], [0], [1], [0, 0, 1, 1], [], []>} : vector<128x4xbf16>, vector<4x128xbf16>, vector<128x128xf32> -> vector<128x128xf32>
    %17 = arith.addf %11, %16 : vector<128x128xf32>
    %18 = vector.extract_strided_slice %5 {offsets = [0, 2, 0], sizes = [8, 16, 4], strides = [1, 1, 1]} : vector<8x18x4xbf16> to vector<8x16x4xbf16>
    %19 = vector.shape_cast %18 : vector<8x16x4xbf16> to vector<128x4xbf16>
    %c0_11 = arith.constant 0 : index
    %c2 = arith.constant 2 : index
    %c0_12 = arith.constant 0 : index
    %c0_13 = arith.constant 0 : index
    %20 = vector.load %arg4[%c0_11, %c2, %c0_12, %c0_13] : memref<3x3x4x128xbf16, #tpu.memory_space<vmem>>, vector<1x1x4x128xbf16>
    %21 = vector.shape_cast %20 : vector<1x1x4x128xbf16> to vector<4x128xbf16>
    %cst_14 = arith.constant dense<0.000000e+00> : vector<128x128xf32>
    %22 = tpu.matmul %19, %21, %cst_14 {dimension_numbers = #tpu.dot_dimension_numbers<[1], [0], [0], [1], [0, 0, 1, 1], [], []>} : vector<128x4xbf16>, vector<4x128xbf16>, vector<128x128xf32> -> vector<128x128xf32>
    %23 = arith.addf %17, %22 : vector<128x128xf32>
    %c1_i32 = arith.constant 1 : i32
    %24 = arith.addi %0, %c1_i32 : i32
    %c0_15 = arith.constant 0 : index
    %25 = arith.index_cast %24 : i32 to index
    %c0_16 = arith.constant 0 : index
    %c0_17 = arith.constant 0 : index
    %26 = vector.load %arg3[%c0_15, %25, %c0_16, %c0_17] : memref<1x18x18x4xbf16, #tpu.memory_space<vmem>>, vector<1x8x18x4xbf16>
    %27 = vector.shape_cast %26 : vector<1x8x18x4xbf16> to vector<8x18x4xbf16>
    %28 = vector.extract_strided_slice %27 {offsets = [0, 0, 0], sizes = [8, 16, 4], strides = [1, 1, 1]} : vector<8x18x4xbf16> to vector<8x16x4xbf16>
    %29 = vector.shape_cast %28 : vector<8x16x4xbf16> to vector<128x4xbf16>
    %c1_18 = arith.constant 1 : index
    %c0_19 = arith.constant 0 : index
    %c0_20 = arith.constant 0 : index
    %c0_21 = arith.constant 0 : index
    %30 = vector.load %arg4[%c1_18, %c0_19, %c0_20, %c0_21] : memref<3x3x4x128xbf16, #tpu.memory_space<vmem>>, vector<1x1x4x128xbf16>
    %31 = vector.shape_cast %30 : vector<1x1x4x128xbf16> to vector<4x128xbf16>
    %cst_22 = arith.constant dense<0.000000e+00> : vector<128x128xf32>
    %32 = tpu.matmul %29, %31, %cst_22 {dimension_numbers = #tpu.dot_dimension_numbers<[1], [0], [0], [1], [0, 0, 1, 1], [], []>} : vector<128x4xbf16>, vector<4x128xbf16>, vector<128x128xf32> -> vector<128x128xf32>
    %33 = arith.addf %23, %32 : vector<128x128xf32>
    %34 = vector.extract_strided_slice %27 {offsets = [0, 1, 0], sizes = [8, 16, 4], strides = [1, 1, 1]} : vector<8x18x4xbf16> to vector<8x16x4xbf16>
    %35 = vector.shape_cast %34 : vector<8x16x4xbf16> to vector<128x4xbf16>
    %c1_23 = arith.constant 1 : index
    %c1_24 = arith.constant 1 : index
    %c0_25 = arith.constant 0 : index
    %c0_26 = arith.constant 0 : index
    %36 = vector.load %arg4[%c1_23, %c1_24, %c0_25, %c0_26] : memref<3x3x4x128xbf16, #tpu.memory_space<vmem>>, vector<1x1x4x128xbf16>
    %37 = vector.shape_cast %36 : vector<1x1x4x128xbf16> to vector<4x128xbf16>
    %cst_27 = arith.constant dense<0.000000e+00> : vector<128x128xf32>
    %38 = tpu.matmul %35, %37, %cst_27 {dimension_numbers = #tpu.dot_dimension_numbers<[1], [0], [0], [1], [0, 0, 1, 1], [], []>} : vector<128x4xbf16>, vector<4x128xbf16>, vector<128x128xf32> -> vector<128x128xf32>
    %39 = arith.addf %33, %38 : vector<128x128xf32>
    %40 = vector.extract_strided_slice %27 {offsets = [0, 2, 0], sizes = [8, 16, 4], strides = [1, 1, 1]} : vector<8x18x4xbf16> to vector<8x16x4xbf16>
    %41 = vector.shape_cast %40 : vector<8x16x4xbf16> to vector<128x4xbf16>
    %c1_28 = arith.constant 1 : index
    %c2_29 = arith.constant 2 : index
    %c0_30 = arith.constant 0 : index
    %c0_31 = arith.constant 0 : index
    %42 = vector.load %arg4[%c1_28, %c2_29, %c0_30, %c0_31] : memref<3x3x4x128xbf16, #tpu.memory_space<vmem>>, vector<1x1x4x128xbf16>
    %43 = vector.shape_cast %42 : vector<1x1x4x128xbf16> to vector<4x128xbf16>
    %cst_32 = arith.constant dense<0.000000e+00> : vector<128x128xf32>
    %44 = tpu.matmul %41, %43, %cst_32 {dimension_numbers = #tpu.dot_dimension_numbers<[1], [0], [0], [1], [0, 0, 1, 1], [], []>} : vector<128x4xbf16>, vector<4x128xbf16>, vector<128x128xf32> -> vector<128x128xf32>
    %45 = arith.addf %39, %44 : vector<128x128xf32>
    %c2_i32 = arith.constant 2 : i32
    %46 = arith.addi %0, %c2_i32 : i32
    %c0_33 = arith.constant 0 : index
    %47 = arith.index_cast %46 : i32 to index
    %c0_34 = arith.constant 0 : index
    %c0_35 = arith.constant 0 : index
    %48 = vector.load %arg3[%c0_33, %47, %c0_34, %c0_35] : memref<1x18x18x4xbf16, #tpu.memory_space<vmem>>, vector<1x8x18x4xbf16>
    %49 = vector.shape_cast %48 : vector<1x8x18x4xbf16> to vector<8x18x4xbf16>
    %50 = vector.extract_strided_slice %49 {offsets = [0, 0, 0], sizes = [8, 16, 4], strides = [1, 1, 1]} : vector<8x18x4xbf16> to vector<8x16x4xbf16>
    %51 = vector.shape_cast %50 : vector<8x16x4xbf16> to vector<128x4xbf16>
    %c2_36 = arith.constant 2 : index
    %c0_37 = arith.constant 0 : index
    %c0_38 = arith.constant 0 : index
    %c0_39 = arith.constant 0 : index
    %52 = vector.load %arg4[%c2_36, %c0_37, %c0_38, %c0_39] : memref<3x3x4x128xbf16, #tpu.memory_space<vmem>>, vector<1x1x4x128xbf16>
    %53 = vector.shape_cast %52 : vector<1x1x4x128xbf16> to vector<4x128xbf16>
    %cst_40 = arith.constant dense<0.000000e+00> : vector<128x128xf32>
    %54 = tpu.matmul %51, %53, %cst_40 {dimension_numbers = #tpu.dot_dimension_numbers<[1], [0], [0], [1], [0, 0, 1, 1], [], []>} : vector<128x4xbf16>, vector<4x128xbf16>, vector<128x128xf32> -> vector<128x128xf32>
    %55 = arith.addf %45, %54 : vector<128x128xf32>
    %56 = vector.extract_strided_slice %49 {offsets = [0, 1, 0], sizes = [8, 16, 4], strides = [1, 1, 1]} : vector<8x18x4xbf16> to vector<8x16x4xbf16>
    %57 = vector.shape_cast %56 : vector<8x16x4xbf16> to vector<128x4xbf16>
    %c2_41 = arith.constant 2 : index
    %c1_42 = arith.constant 1 : index
    %c0_43 = arith.constant 0 : index
    %c0_44 = arith.constant 0 : index
    %58 = vector.load %arg4[%c2_41, %c1_42, %c0_43, %c0_44] : memref<3x3x4x128xbf16, #tpu.memory_space<vmem>>, vector<1x1x4x128xbf16>
    %59 = vector.shape_cast %58 : vector<1x1x4x128xbf16> to vector<4x128xbf16>
    %cst_45 = arith.constant dense<0.000000e+00> : vector<128x128xf32>
    %60 = tpu.matmul %57, %59, %cst_45 {dimension_numbers = #tpu.dot_dimension_numbers<[1], [0], [0], [1], [0, 0, 1, 1], [], []>} : vector<128x4xbf16>, vector<4x128xbf16>, vector<128x128xf32> -> vector<128x128xf32>
    %61 = arith.addf %55, %60 : vector<128x128xf32>
    %62 = vector.extract_strided_slice %49 {offsets = [0, 2, 0], sizes = [8, 16, 4], strides = [1, 1, 1]} : vector<8x18x4xbf16> to vector<8x16x4xbf16>
    %63 = vector.shape_cast %62 : vector<8x16x4xbf16> to vector<128x4xbf16>
    %c2_46 = arith.constant 2 : index
    %c2_47 = arith.constant 2 : index
    %c0_48 = arith.constant 0 : index
    %c0_49 = arith.constant 0 : index
    %64 = vector.load %arg4[%c2_46, %c2_47, %c0_48, %c0_49] : memref<3x3x4x128xbf16, #tpu.memory_space<vmem>>, vector<1x1x4x128xbf16>
    %65 = vector.shape_cast %64 : vector<1x1x4x128xbf16> to vector<4x128xbf16>
    %cst_50 = arith.constant dense<0.000000e+00> : vector<128x128xf32>
    %66 = tpu.matmul %63, %65, %cst_50 {dimension_numbers = #tpu.dot_dimension_numbers<[1], [0], [0], [1], [0, 0, 1, 1], [], []>} : vector<128x4xbf16>, vector<4x128xbf16>, vector<128x128xf32> -> vector<128x128xf32>
    %67 = arith.addf %61, %66 : vector<128x128xf32>
    %68 = vector.shape_cast %67 : vector<128x128xf32> to vector<8x16x128xf32>
    %69 = arith.truncf %68 : vector<8x16x128xf32> to vector<8x16x128xbf16>
    %c0_51 = arith.constant 0 : index
    %c0_52 = arith.constant 0 : index
    %c0_53 = arith.constant 0 : index
    %c0_54 = arith.constant 0 : index
    %70 = vector.load %arg5[%c0_51, %c0_52, %c0_53, %c0_54] : memref<1x8x16x128xbf16, #tpu.memory_space<vmem>>, vector<1x8x16x128xbf16>
    %71 = vector.shape_cast %70 : vector<1x8x16x128xbf16> to vector<8x16x128xbf16>
    %72 = vector.shape_cast %69 : vector<8x16x128xbf16> to vector<1x8x16x128xbf16>
    tpu.vector_store %arg5[%c0_51, %c0_52, %c0_53, %c0_54], %72 {strides = array<i32>} : memref<1x8x16x128xbf16, #tpu.memory_space<vmem>>, vector<1x8x16x128xbf16>,
    %cst_55 = arith.constant dense<0.000000e+00> : vector<128xf32>
    %73 = vector.multi_reduction <add>, %67, %cst_55 [0] : vector<128x128xf32> to vector<128xf32>
    %74 = vector.shape_cast %73 : vector<128xf32> to vector<1x128xf32>
    %c0_56 = arith.constant 0 : index
    %c0_57 = arith.constant 0 : index
    %c0_58 = arith.constant 0 : index
    %c0_59 = arith.constant 0 : index
    %75 = vector.load %arg6[%c0_56, %c0_57, %c0_58, %c0_59] : memref<1x1x2x128xf32, #tpu.memory_space<vmem>>, vector<1x1x1x128xf32>
    %76 = vector.shape_cast %75 : vector<1x1x1x128xf32> to vector<1x128xf32>
    %77 = vector.shape_cast %74 : vector<1x128xf32> to vector<1x1x1x128xf32>
    tpu.vector_store %arg6[%c0_56, %c0_57, %c0_58, %c0_59], %77 {strides = array<i32>} : memref<1x1x2x128xf32, #tpu.memory_space<vmem>>, vector<1x1x1x128xf32>,
    %78 = arith.mulf %67, %67 : vector<128x128xf32>
    %cst_60 = arith.constant dense<0.000000e+00> : vector<128xf32>
    %79 = vector.multi_reduction <add>, %78, %cst_60 [0] : vector<128x128xf32> to vector<128xf32>
    %80 = vector.shape_cast %79 : vector<128xf32> to vector<1x128xf32>
    %c0_61 = arith.constant 0 : index
    %c0_62 = arith.constant 0 : index
    %c1_63 = arith.constant 1 : index
    %c0_64 = arith.constant 0 : index
    %81 = vector.load %arg6[%c0_61, %c0_62, %c1_63, %c0_64] : memref<1x1x2x128xf32, #tpu.memory_space<vmem>>, vector<1x1x1x128xf32>
    %82 = vector.shape_cast %81 : vector<1x1x1x128xf32> to vector<1x128xf32>
    %83 = vector.shape_cast %80 : vector<1x128xf32> to vector<1x1x1x128xf32>
    tpu.vector_store %arg6[%c0_61, %c0_62, %c1_63, %c0_64], %83 {strides = array<i32>} : memref<1x1x2x128xf32, #tpu.memory_space<vmem>>, vector<1x1x1x128xf32>,
    return
  }
  func.func @transform_0(%arg0: i32, %arg1: i32, %arg2: i32) -> (i32, i32, i32, i32) {
    %c0_i32 = arith.constant 0 : i32
    %c0_i32_0 = arith.constant 0 : i32
    %c0_i32_1 = arith.constant 0 : i32
    %c0_i32_2 = arith.constant 0 : i32
    return %arg0, %c0_i32, %c0_i32_0, %c0_i32_1 : i32, i32, i32, i32
  }
  func.func @transform_1(%arg0: i32, %arg1: i32, %arg2: i32) -> (i32, i32, i32, i32) {
    %c0_i32 = arith.constant 0 : i32
    %c0_i32_0 = arith.constant 0 : i32
    %c0_i32_1 = arith.constant 0 : i32
    %c0_i32_2 = arith.constant 0 : i32
    return %c0_i32, %c0_i32_0, %c0_i32_1, %arg2 : i32, i32, i32, i32
  }
  func.func @transform_2(%arg0: i32, %arg1: i32, %arg2: i32) -> (i32, i32, i32, i32) {
    %c0_i32 = arith.constant 0 : i32
    %c0_i32_0 = arith.constant 0 : i32
    return %arg0, %arg1, %c0_i32, %arg2 : i32, i32, i32, i32
  }
  func.func @transform_3(%arg0: i32, %arg1: i32, %arg2: i32) -> (i32, i32, i32, i32) {
    %c0_i32 = arith.constant 0 : i32
    %c0_i32_0 = arith.constant 0 : i32
    return %arg0, %arg1, %c0_i32, %arg2 : i32, i32, i32, i32
  }
}

module attributes {stable_mosaic.version = 11 : i64} {
  func.func @scale_shift_relu_kernel(%arg0: i32, %arg1: i32, %arg2: i32, %arg3: memref<1x8x16x128xbf16, #tpu.memory_space<vmem>>, %arg4: memref<1x128xf32, #tpu.memory_space<vmem>>, %arg5: memref<1x128xf32, #tpu.memory_space<vmem>>, %arg6: memref<1x8x16x128xf32, #tpu.memory_space<vmem>>) attributes {dimension_semantics = [#tpu.dimension_semantics<parallel>, #tpu.dimension_semantics<parallel>, #tpu.dimension_semantics<parallel>], iteration_bounds = array<i64: 2, 2, 1>, scalar_prefetch = 0 : i64, scratch_operands = 0 : i64, tpu.core_type = #tpu.core_type<tc>, window_params = [{transform_indices = @transform_0, window_bounds = array<i64: 1, 8, 16, 128>}, {transform_indices = @transform_1, window_bounds = array<i64: 1, 128>}, {transform_indices = @transform_2, window_bounds = array<i64: 1, 128>}, {transform_indices = @transform_3, window_bounds = array<i64: 1, 8, 16, 128>}]} {
    %c0 = arith.constant 0 : index
    %c0_0 = arith.constant 0 : index
    %c0_1 = arith.constant 0 : index
    %c0_2 = arith.constant 0 : index
    %0 = vector.load %arg3[%c0, %c0_0, %c0_1, %c0_2] : memref<1x8x16x128xbf16, #tpu.memory_space<vmem>>, vector<1x8x16x128xbf16>
    %1 = vector.shape_cast %0 : vector<1x8x16x128xbf16> to vector<8x16x128xbf16>
    %2 = arith.extf %1 : vector<8x16x128xbf16> to vector<8x16x128xf32>
    %c0_3 = arith.constant 0 : index
    %c0_4 = arith.constant 0 : index
    %3 = vector.load %arg4[%c0_3, %c0_4] : memref<1x128xf32, #tpu.memory_space<vmem>>, vector<1x128xf32>
    %4 = vector.shape_cast %3 : vector<1x128xf32> to vector<1x1x128xf32>
    %c0_5 = arith.constant 0 : index
    %c0_6 = arith.constant 0 : index
    %5 = vector.load %arg5[%c0_5, %c0_6] : memref<1x128xf32, #tpu.memory_space<vmem>>, vector<1x128xf32>
    %6 = vector.shape_cast %5 : vector<1x128xf32> to vector<1x1x128xf32>
    %7 = vector.broadcast %4 : vector<1x1x128xf32> to vector<8x16x128xf32>
    %8 = arith.mulf %2, %7 : vector<8x16x128xf32>
    %9 = vector.broadcast %6 : vector<1x1x128xf32> to vector<8x16x128xf32>
    %10 = arith.addf %8, %9 : vector<8x16x128xf32>
    %cst = arith.constant 0.000000e+00 : f32
    %11 = vector.broadcast %cst : f32 to vector<8x16x128xf32>
    %12 = arith.maximumf %10, %11 : vector<8x16x128xf32>
    %c0_7 = arith.constant 0 : index
    %c0_8 = arith.constant 0 : index
    %c0_9 = arith.constant 0 : index
    %c0_10 = arith.constant 0 : index
    %13 = vector.load %arg6[%c0_7, %c0_8, %c0_9, %c0_10] : memref<1x8x16x128xf32, #tpu.memory_space<vmem>>, vector<1x8x16x128xf32>
    %14 = vector.shape_cast %13 : vector<1x8x16x128xf32> to vector<8x16x128xf32>
    %15 = vector.shape_cast %12 : vector<8x16x128xf32> to vector<1x8x16x128xf32>
    tpu.vector_store %arg6[%c0_7, %c0_8, %c0_9, %c0_10], %15 {strides = array<i32>} : memref<1x8x16x128xf32, #tpu.memory_space<vmem>>, vector<1x8x16x128xf32>,
    return
  }
  func.func @transform_0(%arg0: i32, %arg1: i32, %arg2: i32) -> (i32, i32, i32, i32) {
    %c0_i32 = arith.constant 0 : i32
    %c0_i32_0 = arith.constant 0 : i32
    return %arg0, %arg1, %c0_i32, %arg2 : i32, i32, i32, i32
  }
  func.func @transform_1(%arg0: i32, %arg1: i32, %arg2: i32) -> (i32, i32) {
    %c0_i32 = arith.constant 0 : i32
    %c0_i32_0 = arith.constant 0 : i32
    return %c0_i32, %arg2 : i32, i32
  }
  func.func @transform_2(%arg0: i32, %arg1: i32, %arg2: i32) -> (i32, i32) {
    %c0_i32 = arith.constant 0 : i32
    %c0_i32_0 = arith.constant 0 : i32
    return %c0_i32, %arg2 : i32, i32
  }
  func.func @transform_3(%arg0: i32, %arg1: i32, %arg2: i32) -> (i32, i32, i32, i32) {
    %c0_i32 = arith.constant 0 : i32
    %c0_i32_0 = arith.constant 0 : i32
    return %arg0, %arg1, %c0_i32, %arg2 : i32, i32, i32, i32
  }
}

</mosaic_0001>

<llo_original>
// kernel: conv_bn_relu.3
$region0: #{conv_bn_relu.3}
  #allocation0 [shape = 'u32[]', space=smem, size = 0x4, offset = 0x4, fixed_abs, tag = 'smem constant byte address 0x4 - core index']
  #allocation1 [shape = 'u32[144,128]{1,0:T(1,128)}', space=vmem, size = 0x12000, scoped, tag = 'internal scratch']
  %s0 = inlined_call_operand.vmem [shape: bf16[2,16,16,128], index: 0, kind: input, shape index: {}]
  %s1 = inlined_call_operand.vmem [shape: f32[1,128], index: 1, kind: input, shape index: {}]
  %s2 = inlined_call_operand.vmem [shape: f32[1,128], index: 2, kind: input, shape index: {}]
  %s3 = inlined_call_operand.vmem [shape: f32[2,16,16,128], index: 3, kind: output, shape index: {}]
  %s4 = sld [smem:[#allocation0]]
  $region45: #{conv_bn_relu.3} parent=0
    _
  %s6 = ssub.s32 1, %s4
  %s7 = scalar_select 0, %s6, %s4
  loop: start=0, step=1, limit=6
  $region2: #{conv_bn_relu.3} parent=0 // loop_pre_header
    _
  $region3: #{conv_bn_relu.3} parent=0 // loop_header
    %s9 = sphi 0, %s13
    %p10 = scmp.ge.s32.totalorder %s9, 6
    %s16 = sphi 0, %s35
    %s17 = sphi 0, %s31
    %s18 = sphi 0, %s27
    %s19 = sphi 0, %s16
    %s20 = sphi 0, %s17
    %s21 = sphi 0, %s18
    %s22 = sphi 0, %s19
    %s23 = sphi 0, %s20
    %s24 = sphi 0, %s21
    %s42 = sphi 0, %s44
    %s45 = sphi 0, %s42
    %s46 = sphi 0, %s45
    %s62 = sphi 0, %s46
    %s68 = sphi 0, %s70
    %s71 = sphi 0, %s68
    %s72 = sphi 0, %s71
    %s88 = sphi 0, %s72
    %s94 = sphi 0, %s96
    %s97 = sphi 0, %s94
    %s98 = sphi 0, %s97
    %s114 = sphi 0, %s98
    %s124 = sphi 0, %s126
    %s127 = sphi 0, %s124
    %s128 = sphi 0, %s127
    %s144 = sphi 0, %s128
  $region4: #{conv_bn_relu.3} parent=0 // loop_header_branch
    %12 = sbr.rel (%p10) target = $region8
  $region5: #{conv_bn_relu.3} parent=0 // loop_body
    %s14 = ssub.s32 %s9, 1
    %s15 = ssub.s32 %s9, 2
    %s25 = sadd.s32 1, %s18
    %p26 = scmp.ge.s32.totalorder %s25, 1
    %s27 = scalar_select %p26, 0, %s25
    %s28 = sadd.s32 1, %s17
    %s29 = scalar_select %p26, %s28, %s17
    %p30 = scmp.ge.s32.totalorder %s29, 2
    %s31 = scalar_select %p30, 0, %s29
    %s32 = sadd.s32 1, %s16
    %s33 = scalar_select %p30, %s32, %s16
    %p34 = scmp.ge.s32.totalorder %s33, 2
    %s35 = scalar_select %p34, 0, %s33
    %s36 = ssub.s32 %s16, %s35
    %s37 = ssub.s32 %s17, %s31
    %s38 = sor.u32 %s36, %s37
    %s39 = ssub.s32 %s18, %s27
    %s40 = sor.u32 %s38, %s39
    %p41 = scmp.eq.s32.totalorder %s40, 0
    %s43 = sadd.s32 %s42, 1
    %s44 = scalar_select %p41, %s42, %s43
    %p47 = pneg %p41
    %p48 = scmp.eq.s32.totalorder %s9, 3
    %p49 = por %p47, %p48
    %p50 = scmp.ne.s32.totalorder %s42, %s45
    %p51 = scmp.eq.s32.totalorder %s9, 0
    %p52 = por %p50, %p51
    %p53 = scmp.ne.s32.totalorder %s42, %s45
    %p54 = scmp.eq.s32.totalorder %s14, 3
    %p55 = por %p53, %p54
    %p56 = scmp.ne.s32.totalorder %s45, %s46
    %p57 = scmp.eq.s32.totalorder %s14, 0
    %p58 = por %p56, %p57
    %p59 = scmp.ne.s32.totalorder %s45, %s46
    %p60 = scmp.eq.s32.totalorder %s15, 3
    %p61 = por %p59, %p60
    %p63 = scmp.ne.s32.totalorder %s46, %s62
    %p64 = scmp.eq.s32.totalorder %s15, 0
    %p65 = por %p63, %p64
    %s66 = ssub.s32 %s18, %s27
    %p67 = scmp.eq.s32.totalorder %s66, 0
    %s69 = sadd.s32 %s68, 1
    %s70 = scalar_select %p67, %s68, %s69
    %p73 = pneg %p67
    %p74 = scmp.eq.s32.totalorder %s9, 3
    %p75 = por %p73, %p74
    %p76 = scmp.ne.s32.totalorder %s68, %s71
    %p77 = scmp.eq.s32.totalorder %s9, 0
    %p78 = por %p76, %p77
    %p79 = scmp.ne.s32.totalorder %s68, %s71
    %p80 = scmp.eq.s32.totalorder %s14, 3
    %p81 = por %p79, %p80
    %p82 = scmp.ne.s32.totalorder %s71, %s72
    %p83 = scmp.eq.s32.totalorder %s14, 0
    %p84 = por %p82, %p83
    %p85 = scmp.ne.s32.totalorder %s71, %s72
    %p86 = scmp.eq.s32.totalorder %s15, 3
    %p87 = por %p85, %p86
    %p89 = scmp.ne.s32.totalorder %s72, %s88
    %p90 = scmp.eq.s32.totalorder %s15, 0
    %p91 = por %p89, %p90
    %s92 = ssub.s32 %s18, %s27
    %p93 = scmp.eq.s32.totalorder %s92, 0
    %s95 = sadd.s32 %s94, 1
    %s96 = scalar_select %p93, %s94, %s95
    %p99 = pneg %p93
    %p100 = scmp.eq.s32.totalorder %s9, 3
    %p101 = por %p99, %p100
    %p102 = scmp.ne.s32.totalorder %s94, %s97
    %p103 = scmp.eq.s32.totalorder %s9, 0
    %p104 = por %p102, %p103
    %p105 = scmp.ne.s32.totalorder %s94, %s97
    %p106 = scmp.eq.s32.totalorder %s14, 3
    %p107 = por %p105, %p106
    %p108 = scmp.ne.s32.totalorder %s97, %s98
    %p109 = scmp.eq.s32.totalorder %s14, 0
    %p110 = por %p108, %p109
    %p111 = scmp.ne.s32.totalorder %s97, %s98
    %p112 = scmp.eq.s32.totalorder %s15, 3
    %p113 = por %p111, %p112
    %p115 = scmp.ne.s32.totalorder %s98, %s114
    %p116 = scmp.eq.s32.totalorder %s15, 0
    %p117 = por %p115, %p116
    %s118 = ssub.s32 %s16, %s35
    %s119 = ssub.s32 %s17, %s31
    %s120 = sor.u32 %s118, %s119
    %s121 = ssub.s32 %s18, %s27
    %s122 = sor.u32 %s120, %s121
    %p123 = scmp.eq.s32.totalorder %s122, 0
    %s125 = sadd.s32 %s124, 1
    %s126 = scalar_select %p123, %s124, %s125
    %p129 = pneg %p123
    %p130 = scmp.eq.s32.totalorder %s9, 3
    %p131 = por %p129, %p130
    %p132 = scmp.ne.s32.totalorder %s124, %s127
    %p133 = scmp.eq.s32.totalorder %s9, 0
    %p134 = por %p132, %p133
    %p135 = scmp.ne.s32.totalorder %s124, %s127
    %p136 = scmp.eq.s32.totalorder %s14, 3
    %p137 = por %p135, %p136
    %p138 = scmp.ne.s32.totalorder %s127, %s128
    %p139 = scmp.eq.s32.totalorder %s14, 0
    %p140 = por %p138, %p139
    %p141 = scmp.ne.s32.totalorder %s127, %s128
    %p142 = scmp.eq.s32.totalorder %s15, 3
    %p143 = por %p141, %p142
    %p145 = scmp.ne.s32.totalorder %s128, %s144
    %p146 = scmp.eq.s32.totalorder %s15, 0
    %p147 = por %p145, %p146
    %p148 = scmp.le.s32.totalorder 1, %s9
    %p149 = scmp.lt.s32.totalorder %s9, 5
    %p150 = pnand %p148, %p149
    %p151 = pneg %p150
    // Predicated region
    $region9: #{conv_bn_relu.3} parent=5 // pred_check
      _
    $region10: #{conv_bn_relu.3} parent=5 // pred_check_branch
      %153 = sbr.rel (%p150) target = $region12
    $region11: #{conv_bn_relu.3} parent=5 // pred_region
      %s154 = ssub.s32 %s9, 1
      // Predicated region
      $region13: #{conv_bn_relu.3} parent=11 // pred_check
        %p155 = pneg %p84
      $region14: #{conv_bn_relu.3} parent=11 // pred_check_branch
        %157 = sbr.rel (%p155) target = $region16
      $region15: #{conv_bn_relu.3} parent=11 // pred_region
        %p158 = scmp.lt.s32.totalorder %s21, 0
        %s159 = scalar_select %p158, %s21, 0
        %s160 = scalar_lea.vmem %s1, %s159
      $region16: #{conv_bn_relu.3} parent=11 // pred_fallthru
        _
      // Predicated region
      $region17: #{conv_bn_relu.3} parent=11 // pred_check
        %p161 = pneg %p110
      $region18: #{conv_bn_relu.3} parent=11 // pred_check_branch
        %163 = sbr.rel (%p161) target = $region20
      $region19: #{conv_bn_relu.3} parent=11 // pred_region
        %p164 = scmp.lt.s32.totalorder %s21, 0
        %s165 = scalar_select %p164, %s21, 0
        %s166 = scalar_lea.vmem %s2, %s165
      $region20: #{conv_bn_relu.3} parent=11 // pred_fallthru
        _
    $region12: #{conv_bn_relu.3} parent=5 // pred_fallthru
      _
    %p167 = scmp.lt.s32.totalorder %s9, 4
    // Predicated region
    $region21: #{conv_bn_relu.3} parent=5 // pred_check
      %p168 = pneg %p167
    $region22: #{conv_bn_relu.3} parent=5 // pred_check_branch
      %170 = sbr.rel (%p168) target = $region24
    $region23: #{conv_bn_relu.3} parent=5 // pred_region
      // Predicated region
      $region25: #{conv_bn_relu.3} parent=23 // pred_check
        %p171 = pneg %p52
      $region26: #{conv_bn_relu.3} parent=23 // pred_check_branch
        %173 = sbr.rel (%p171) target = $region28
      $region27: #{conv_bn_relu.3} parent=23 // pred_region
        %s174 = smul.u32 8, %s17
        %p175 = scmp.lt.s32.totalorder %s16, 1
        %s176 = scalar_select %p175, %s16, 1
        %p177 = scmp.lt.s32.totalorder %s174, 15
        %s178 = scalar_select %p177, %s174, 15
        %p179 = scmp.lt.s32.totalorder %s18, 0
        %s180 = scalar_select %p179, %s18, 0
        %s181 = smul.addr %s178, 2
        %s182 = sadd.s32 %s180, %s181
        %s183 = smul.addr %s176, 32
        %s184 = sadd.s32 %s182, %s183
        %s185 = smul.addr %s184, 4
        %s186 = scalar_lea.vmem %s0, %s185
        %s187 = smul.u32 8, %s17
      $region28: #{conv_bn_relu.3} parent=23 // pred_fallthru
        _
    $region24: #{conv_bn_relu.3} parent=5 // pred_fallthru
      _
    %p188 = scmp.le.s32.totalorder 1, %s9
    %p189 = scmp.lt.s32.totalorder %s9, 5
    %p190 = pnand %p188, %p189
    %p191 = pneg %p190
    // Predicated region
    $region29: #{conv_bn_relu.3} parent=5 // pred_check
      _
    $region30: #{conv_bn_relu.3} parent=5 // pred_check_branch
      %193 = sbr.rel (%p190) target = $region32
    $region31: #{conv_bn_relu.3} parent=5 // pred_region
      %s194 = ssub.s32 %s9, 1
      %s195 = smul.u32 8, %s20
      %p196 = scmp.lt.s32.totalorder %s19, 1
      %s197 = scalar_select %p196, %s19, 1
      %p198 = scmp.lt.s32.totalorder %s195, 15
      %s199 = scalar_select %p198, %s195, 15
      %p200 = scmp.lt.s32.totalorder %s21, 0
      %s201 = scalar_select %p200, %s21, 0
      %s202 = smul.addr %s199, 2
      %s203 = sadd.s32 %s201, %s202
      %s204 = smul.addr %s197, 32
      %s205 = sadd.s32 %s203, %s204
      %s206 = smul.addr %s205, 4
      %s207 = scalar_lea.vmem %s0, %s206
      %p208 = pneg %p58
      %p209 = pneg %p55
      %p210 = scmp.lt.s32.totalorder %s21, 0
      %s211 = scalar_select %p210, %s21, 0
      %s212 = scalar_lea.vmem %s1, %s211
      %p213 = pneg %p84
      %p214 = pneg %p81
      %p215 = scmp.lt.s32.totalorder %s21, 0
      %s216 = scalar_select %p215, %s21, 0
      %s217 = scalar_lea.vmem %s2, %s216
      %p218 = pneg %p110
      %p219 = pneg %p107
      %p220 = pneg %p140
      %p221 = pneg %p137
      %s222 = smul.u32 8, %s20
      %p223 = scmp.lt.s32.totalorder %s19, 1
      %s224 = scalar_select %p223, %s19, 1
      %p225 = scmp.lt.s32.totalorder %s222, 15
      %s226 = scalar_select %p225, %s222, 15
      %p227 = scmp.lt.s32.totalorder %s21, 0
      %s228 = scalar_select %p227, %s21, 0
      %s229 = smul.addr %s226, 2
      %s230 = sadd.s32 %s228, %s229
      %s231 = smul.addr %s224, 32
      %s232 = sadd.s32 %s230, %s231
      %s233 = smul.addr %s232, 8
      %s234 = scalar_lea.vmem %s3, %s233
      %s235 = smul.u32 8, %s20
      %p236 = scmp.lt.s32.totalorder %s19, 1
      %s237 = scalar_select %p236, %s19, 1
      %p238 = scmp.lt.s32.totalorder %s235, 15
      %s239 = scalar_select %p238, %s235, 15
      %p240 = scmp.lt.s32.totalorder %s21, 0
      %s241 = scalar_select %p240, %s21, 0
      %s242 = smul.addr %s239, 2
      %s243 = sadd.s32 %s241, %s242
      %s244 = smul.addr %s237, 32
      %s245 = sadd.s32 %s243, %s244
      %s246 = smul.addr %s245, 4
      %s247 = scalar_lea.vmem %s0, %s246
      %s248 = smul.u32 8, %s20
      %p249 = scmp.lt.s32.totalorder %s21, 0
      %s250 = scalar_select %p249, %s21, 0
      %s251 = scalar_lea.vmem %s1, %s250
      %p252 = scmp.lt.s32.totalorder %s21, 0
      %s253 = scalar_select %p252, %s21, 0
      %s254 = scalar_lea.vmem %s2, %s253
      %s255 = smul.u32 8, %s20
      %p256 = scmp.lt.s32.totalorder %s19, 1
      %s257 = scalar_select %p256, %s19, 1
      %p258 = scmp.lt.s32.totalorder %s255, 15
      %s259 = scalar_select %p258, %s255, 15
      %p260 = scmp.lt.s32.totalorder %s21, 0
      %s261 = scalar_select %p260, %s21, 0
      %s262 = smul.addr %s259, 2
      %s263 = sadd.s32 %s261, %s262
      %s264 = smul.addr %s257, 32
      %s265 = sadd.s32 %s263, %s264
      %s266 = smul.addr %s265, 8
      %s267 = scalar_lea.vmem %s3, %s266
      %s268 = smul.u32 8, %s20
      %v269 = vld [vmem:[%s247] sm:$0xf]
      %v270 = vld [vmem:[%s247 + $0x4] sm:$0xf]
      %v271 = vld [vmem:[%s247 + $0x8] sm:$0xf]
      %v272 = vld [vmem:[%s247 + $0xc] sm:$0xf]
      %v273 = vld [vmem:[%s247 + $0x10] sm:$0xf]
      %v274 = vld [vmem:[%s247 + $0x14] sm:$0xf]
      %v275 = vld [vmem:[%s247 + $0x18] sm:$0xf]
      %v276 = vld [vmem:[%s247 + $0x1c] sm:$0xf]
      %v277 = vld [vmem:[%s247 + $0x20] sm:$0xf]
      %v278 = vld [vmem:[%s247 + $0x24] sm:$0xf]
      %v279 = vld [vmem:[%s247 + $0x28] sm:$0xf]
      %v280 = vld [vmem:[%s247 + $0x2c] sm:$0xf]
      %v281 = vld [vmem:[%s247 + $0x30] sm:$0xf]
      %v282 = vld [vmem:[%s247 + $0x34] sm:$0xf]
      %v283 = vld [vmem:[%s247 + $0x38] sm:$0xf]
      %v284 = vld [vmem:[%s247 + $0x3c] sm:$0xf]
      %v285 = vunpack.c.l.bf16 %v269
      %v286 = vunpack.c.l.bf16 %v270
      %v287 = vunpack.c.l.bf16 %v271
      %v288 = vunpack.c.l.bf16 %v272
      %v289 = vunpack.c.l.bf16 %v273
      %v290 = vunpack.c.l.bf16 %v274
      %v291 = vunpack.c.l.bf16 %v275
      %v292 = vunpack.c.l.bf16 %v276
      %v293 = vunpack.c.l.bf16 %v277
      %v294 = vunpack.c.l.bf16 %v278
      %v295 = vunpack.c.l.bf16 %v279
      %v296 = vunpack.c.l.bf16 %v280
      %v297 = vunpack.c.l.bf16 %v281
      %v298 = vunpack.c.l.bf16 %v282
      %v299 = vunpack.c.l.bf16 %v283
      %v300 = vunpack.c.l.bf16 %v284
      %v301 = vld [vmem:[%s251] sm:$0x1]
      %v302 = vld [vmem:[%s254] sm:$0x1]
      %v304 = vlaneseq
      %v305 = vshrl.u32 %v304, 7
      %v306 = vsub.s32 0, %v305
      %v307 = vrot.slane %v301, %v306
      %v309 = vmul.f32 %v285, %v307
      %v310 = vmul.f32 %v286, %v307
      %v311 = vmul.f32 %v287, %v307
      %v312 = vmul.f32 %v288, %v307
      %v313 = vmul.f32 %v289, %v307
      %v314 = vmul.f32 %v290, %v307
      %v315 = vmul.f32 %v291, %v307
      %v316 = vmul.f32 %v292, %v307
      %v317 = vmul.f32 %v293, %v307
      %v318 = vmul.f32 %v294, %v307
      %v319 = vmul.f32 %v295, %v307
      %v320 = vmul.f32 %v296, %v307
      %v321 = vmul.f32 %v297, %v307
      %v322 = vmul.f32 %v298, %v307
      %v323 = vmul.f32 %v299, %v307
      %v324 = vmul.f32 %v300, %v307
      %v326 = vlaneseq
      %v327 = vshrl.u32 %v326, 7
      %v328 = vsub.s32 0, %v327
      %v329 = vrot.slane %v302, %v328
      %v331 = vadd.f32 %v309, %v329
      %v332 = vadd.f32 %v310, %v329
      %v333 = vadd.f32 %v311, %v329
      %v334 = vadd.f32 %v312, %v329
      %v335 = vadd.f32 %v313, %v329
      %v336 = vadd.f32 %v314, %v329
      %v337 = vadd.f32 %v315, %v329
      %v338 = vadd.f32 %v316, %v329
      %v339 = vadd.f32 %v317, %v329
      %v340 = vadd.f32 %v318, %v329
      %v341 = vadd.f32 %v319, %v329
      %v342 = vadd.f32 %v320, %v329
      %v343 = vadd.f32 %v321, %v329
      %v344 = vadd.f32 %v322, %v329
      %v345 = vadd.f32 %v323, %v329
      %v346 = vadd.f32 %v324, %v329
      %v347 = vmax.f32 %v331, 0.0
      %v348 = vmax.f32 %v332, 0.0
      %v349 = vmax.f32 %v333, 0.0
      %v350 = vmax.f32 %v334, 0.0
      %v351 = vmax.f32 %v335, 0.0
      %v352 = vmax.f32 %v336, 0.0
      %v353 = vmax.f32 %v337, 0.0
      %v354 = vmax.f32 %v338, 0.0
      %v355 = vmax.f32 %v339, 0.0
      %v356 = vmax.f32 %v340, 0.0
      %v357 = vmax.f32 %v341, 0.0
      %v358 = vmax.f32 %v342, 0.0
      %v359 = vmax.f32 %v343, 0.0
      %v360 = vmax.f32 %v344, 0.0
      %v361 = vmax.f32 %v345, 0.0
      %v362 = vmax.f32 %v346, 0.0
      %363 = vst [vmem:[%s267] sm:$0xff] %v347
      %364 = vst [vmem:[%s267 + $0x8] sm:$0xff] %v348
      %365 = vst [vmem:[%s267 + $0x10] sm:$0xff] %v349
      %366 = vst [vmem:[%s267 + $0x18] sm:$0xff] %v350
      %367 = vst [vmem:[%s267 + $0x20] sm:$0xff] %v351
      %368 = vst [vmem:[%s267 + $0x28] sm:$0xff] %v352
      %369 = vst [vmem:[%s267 + $0x30] sm:$0xff] %v353
      %370 = vst [vmem:[%s267 + $0x38] sm:$0xff] %v354
      %371 = vst [vmem:[%s267 + $0x40] sm:$0xff] %v355
      %372 = vst [vmem:[%s267 + $0x48] sm:$0xff] %v356
      %373 = vst [vmem:[%s267 + $0x50] sm:$0xff] %v357
      %374 = vst [vmem:[%s267 + $0x58] sm:$0xff] %v358
      %375 = vst [vmem:[%s267 + $0x60] sm:$0xff] %v359
      %376 = vst [vmem:[%s267 + $0x68] sm:$0xff] %v360
      %377 = vst [vmem:[%s267 + $0x70] sm:$0xff] %v361
      %378 = vst [vmem:[%s267 + $0x78] sm:$0xff] %v362
      %s379 = smul.u32 8, %s20
      %p380 = scmp.lt.s32.totalorder %s19, 1
      %s381 = scalar_select %p380, %s19, 1
      %p382 = scmp.lt.s32.totalorder %s379, 15
      %s383 = scalar_select %p382, %s379, 15
      %p384 = scmp.lt.s32.totalorder %s21, 0
      %s385 = scalar_select %p384, %s21, 0
      %s386 = smul.addr %s383, 2
      %s387 = sadd.s32 %s385, %s386
      %s388 = smul.addr %s381, 32
      %s389 = sadd.s32 %s387, %s388
      %s390 = smul.addr %s389, 8
      %s391 = scalar_lea.vmem %s3, %s390
      // Predicated region
      $region33: #{conv_bn_relu.3} parent=31 // pred_check
        %p392 = pneg %p137
      $region34: #{conv_bn_relu.3} parent=31 // pred_check_branch
        %394 = sbr.rel (%p392) target = $region36
      $region35: #{conv_bn_relu.3} parent=31 // pred_region
        %s395 = smul.u32 8, %s20
      $region36: #{conv_bn_relu.3} parent=31 // pred_fallthru
        _
    $region32: #{conv_bn_relu.3} parent=5 // pred_fallthru
      _
    %p396 = scmp.le.s32.totalorder 2, %s9
    // Predicated region
    $region37: #{conv_bn_relu.3} parent=5 // pred_check
      %p397 = pneg %p396
    $region38: #{conv_bn_relu.3} parent=5 // pred_check_branch
      %399 = sbr.rel (%p397) target = $region40
    $region39: #{conv_bn_relu.3} parent=5 // pred_region
      %s400 = ssub.s32 %s9, 2
      // Predicated region
      $region41: #{conv_bn_relu.3} parent=39 // pred_check
        %p401 = pneg %p143
      $region42: #{conv_bn_relu.3} parent=39 // pred_check_branch
        %403 = sbr.rel (%p401) target = $region44
      $region43: #{conv_bn_relu.3} parent=39 // pred_region
        %s404 = smul.u32 8, %s23
        %p405 = scmp.lt.s32.totalorder %s22, 1
        %s406 = scalar_select %p405, %s22, 1
        %p407 = scmp.lt.s32.totalorder %s404, 15
        %s408 = scalar_select %p407, %s404, 15
        %p409 = scmp.lt.s32.totalorder %s24, 0
        %s410 = scalar_select %p409, %s24, 0
        %s411 = smul.addr %s408, 2
        %s412 = sadd.s32 %s410, %s411
        %s413 = smul.addr %s406, 32
        %s414 = sadd.s32 %s412, %s413
        %s415 = smul.addr %s414, 8
        %s416 = scalar_lea.vmem %s3, %s415
      $region44: #{conv_bn_relu.3} parent=39 // pred_fallthru
        _
    $region40: #{conv_bn_relu.3} parent=5 // pred_fallthru
      _
  $region6: #{conv_bn_relu.3} parent=0 // loop_footer
    %s13 = sadd.s32 1, %s9
  $region7: #{conv_bn_relu.3} parent=0 // loop_footer_branch
    %8 = sbr.rel target = $region3
  $region8: #{conv_bn_relu.3} parent=0 // loop_exit
    _

// kernel: conv_bn_relu.2
$region0: #{conv_bn_relu.2}
  #allocation0 [shape = 'u32[]', space=smem, size = 0x4, offset = 0x4, fixed_abs, tag = 'smem constant byte address 0x4 - core index']
  #allocation1 [shape = 'u32[144,128]{1,0:T(1,128)}', space=vmem, size = 0x12000, scoped, tag = 'internal scratch']
  %s0 = inlined_call_operand.vmem [shape: bf16[2,18,18,4], index: 0, kind: input, shape index: {}]
  %s1 = inlined_call_operand.vmem [shape: bf16[3,3,4,128], index: 1, kind: input, shape index: {}]
  %s2 = inlined_call_operand.vmem [shape: bf16[2,16,16,128], index: 2, kind: output, shape index: {0}]
  %s3 = inlined_call_operand.vmem [shape: f32[2,2,2,128], index: 3, kind: output, shape index: {1}]
  %4 = xla_tuple %s2, %s3
  %s5 = sld [smem:[#allocation0]]
  $region49: #{conv_bn_relu.2} parent=0
    _
  %s7 = ssub.s32 1, %s5
  %s8 = scalar_select 0, %s7, %s5
  loop: start=0, step=1, limit=6
  $region2: #{conv_bn_relu.2} parent=0 // loop_pre_header
    _
  $region3: #{conv_bn_relu.2} parent=0 // loop_header
    %s10 = sphi 0, %s14
    %p11 = scmp.ge.s32.totalorder %s10, 6
    %s17 = sphi 0, %s36
    %s18 = sphi 0, %s32
    %s19 = sphi 0, %s28
    %s20 = sphi 0, %s17
    %s21 = sphi 0, %s18
    %s22 = sphi 0, %s19
    %s23 = sphi 0, %s20
    %s24 = sphi 0, %s21
    %s25 = sphi 0, %s22
    %s39 = sphi 0, %s41
    %s42 = sphi 0, %s39
    %s43 = sphi 0, %s42
    %s59 = sphi 0, %s43
    %s65 = sphi 0, %s67
    %s68 = sphi 0, %s65
    %s69 = sphi 0, %s68
    %s85 = sphi 0, %s69
    %s95 = sphi 0, %s97
    %s98 = sphi 0, %s95
    %s99 = sphi 0, %s98
    %s115 = sphi 0, %s99
    %s125 = sphi 0, %s127
    %s128 = sphi 0, %s125
    %s129 = sphi 0, %s128
    %s145 = sphi 0, %s129
  $region4: #{conv_bn_relu.2} parent=0 // loop_header_branch
    %13 = sbr.rel (%p11) target = $region8
  $region5: #{conv_bn_relu.2} parent=0 // loop_body
    %s15 = ssub.s32 %s10, 1
    %s16 = ssub.s32 %s10, 2
    %s26 = sadd.s32 1, %s19
    %p27 = scmp.ge.s32.totalorder %s26, 1
    %s28 = scalar_select %p27, 0, %s26
    %s29 = sadd.s32 1, %s18
    %s30 = scalar_select %p27, %s29, %s18
    %p31 = scmp.ge.s32.totalorder %s30, 2
    %s32 = scalar_select %p31, 0, %s30
    %s33 = sadd.s32 1, %s17
    %s34 = scalar_select %p31, %s33, %s17
    %p35 = scmp.ge.s32.totalorder %s34, 2
    %s36 = scalar_select %p35, 0, %s34
    %s37 = ssub.s32 %s17, %s36
    %p38 = scmp.eq.s32.totalorder %s37, 0
    %s40 = sadd.s32 %s39, 1
    %s41 = scalar_select %p38, %s39, %s40
    %p44 = pneg %p38
    %p45 = scmp.eq.s32.totalorder %s10, 3
    %p46 = por %p44, %p45
    %p47 = scmp.ne.s32.totalorder %s39, %s42
    %p48 = scmp.eq.s32.totalorder %s10, 0
    %p49 = por %p47, %p48
    %p50 = scmp.ne.s32.totalorder %s39, %s42
    %p51 = scmp.eq.s32.totalorder %s15, 3
    %p52 = por %p50, %p51
    %p53 = scmp.ne.s32.totalorder %s42, %s43
    %p54 = scmp.eq.s32.totalorder %s15, 0
    %p55 = por %p53, %p54
    %p56 = scmp.ne.s32.totalorder %s42, %s43
    %p57 = scmp.eq.s32.totalorder %s16, 3
    %p58 = por %p56, %p57
    %p60 = scmp.ne.s32.totalorder %s43, %s59
    %p61 = scmp.eq.s32.totalorder %s16, 0
    %p62 = por %p60, %p61
    %s63 = ssub.s32 %s19, %s28
    %p64 = scmp.eq.s32.totalorder %s63, 0
    %s66 = sadd.s32 %s65, 1
    %s67 = scalar_select %p64, %s65, %s66
    %p70 = pneg %p64
    %p71 = scmp.eq.s32.totalorder %s10, 3
    %p72 = por %p70, %p71
    %p73 = scmp.ne.s32.totalorder %s65, %s68
    %p74 = scmp.eq.s32.totalorder %s10, 0
    %p75 = por %p73, %p74
    %p76 = scmp.ne.s32.totalorder %s65, %s68
    %p77 = scmp.eq.s32.totalorder %s15, 3
    %p78 = por %p76, %p77
    %p79 = scmp.ne.s32.totalorder %s68, %s69
    %p80 = scmp.eq.s32.totalorder %s15, 0
    %p81 = por %p79, %p80
    %p82 = scmp.ne.s32.totalorder %s68, %s69
    %p83 = scmp.eq.s32.totalorder %s16, 3
    %p84 = por %p82, %p83
    %p86 = scmp.ne.s32.totalorder %s69, %s85
    %p87 = scmp.eq.s32.totalorder %s16, 0
    %p88 = por %p86, %p87
    %s89 = ssub.s32 %s17, %s36
    %s90 = ssub.s32 %s18, %s32
    %s91 = sor.u32 %s89, %s90
    %s92 = ssub.s32 %s19, %s28
    %s93 = sor.u32 %s91, %s92
    %p94 = scmp.eq.s32.totalorder %s93, 0
    %s96 = sadd.s32 %s95, 1
    %s97 = scalar_select %p94, %s95, %s96
    %p100 = pneg %p94
    %p101 = scmp.eq.s32.totalorder %s10, 3
    %p102 = por %p100, %p101
    %p103 = scmp.ne.s32.totalorder %s95, %s98
    %p104 = scmp.eq.s32.totalorder %s10, 0
    %p105 = por %p103, %p104
    %p106 = scmp.ne.s32.totalorder %s95, %s98
    %p107 = scmp.eq.s32.totalorder %s15, 3
    %p108 = por %p106, %p107
    %p109 = scmp.ne.s32.totalorder %s98, %s99
    %p110 = scmp.eq.s32.totalorder %s15, 0
    %p111 = por %p109, %p110
    %p112 = scmp.ne.s32.totalorder %s98, %s99
    %p113 = scmp.eq.s32.totalorder %s16, 3
    %p114 = por %p112, %p113
    %p116 = scmp.ne.s32.totalorder %s99, %s115
    %p117 = scmp.eq.s32.totalorder %s16, 0
    %p118 = por %p116, %p117
    %s119 = ssub.s32 %s17, %s36
    %s120 = ssub.s32 %s18, %s32
    %s121 = sor.u32 %s119, %s120
    %s122 = ssub.s32 %s19, %s28
    %s123 = sor.u32 %s121, %s122
    %p124 = scmp.eq.s32.totalorder %s123, 0
    %s126 = sadd.s32 %s125, 1
    %s127 = scalar_select %p124, %s125, %s126
    %p130 = pneg %p124
    %p131 = scmp.eq.s32.totalorder %s10, 3
    %p132 = por %p130, %p131
    %p133 = scmp.ne.s32.totalorder %s125, %s128
    %p134 = scmp.eq.s32.totalorder %s10, 0
    %p135 = por %p133, %p134
    %p136 = scmp.ne.s32.totalorder %s125, %s128
    %p137 = scmp.eq.s32.totalorder %s15, 3
    %p138 = por %p136, %p137
    %p139 = scmp.ne.s32.totalorder %s128, %s129
    %p140 = scmp.eq.s32.totalorder %s15, 0
    %p141 = por %p139, %p140
    %p142 = scmp.ne.s32.totalorder %s128, %s129
    %p143 = scmp.eq.s32.totalorder %s16, 3
    %p144 = por %p142, %p143
    %p146 = scmp.ne.s32.totalorder %s129, %s145
    %p147 = scmp.eq.s32.totalorder %s16, 0
    %p148 = por %p146, %p147
    %p149 = scmp.le.s32.totalorder 1, %s10
    %p150 = scmp.lt.s32.totalorder %s10, 5
    %p151 = pnand %p149, %p150
    %p152 = pneg %p151
    // Predicated region
    $region9: #{conv_bn_relu.2} parent=5 // pred_check
      _
    $region10: #{conv_bn_relu.2} parent=5 // pred_check_branch
      %154 = sbr.rel (%p151) target = $region12
    $region11: #{conv_bn_relu.2} parent=5 // pred_region
      %s155 = ssub.s32 %s10, 1
      // Predicated region
      $region13: #{conv_bn_relu.2} parent=11 // pred_check
        %p156 = pneg %p81
      $region14: #{conv_bn_relu.2} parent=11 // pred_check_branch
        %158 = sbr.rel (%p156) target = $region16
      $region15: #{conv_bn_relu.2} parent=11 // pred_region
        %p159 = scmp.lt.s32.totalorder %s22, 0
        %s160 = scalar_select %p159, %s22, 0
        %s161 = smul.addr %s160, 2
        %s162 = scalar_lea.vmem %s1, %s161
      $region16: #{conv_bn_relu.2} parent=11 // pred_fallthru
        _
    $region12: #{conv_bn_relu.2} parent=5 // pred_fallthru
      _
    %p163 = scmp.lt.s32.totalorder %s10, 4
    // Predicated region
    $region17: #{conv_bn_relu.2} parent=5 // pred_check
      %p164 = pneg %p163
    $region18: #{conv_bn_relu.2} parent=5 // pred_check_branch
      %166 = sbr.rel (%p164) target = $region20
    $region19: #{conv_bn_relu.2} parent=5 // pred_region
      // Predicated region
      $region21: #{conv_bn_relu.2} parent=19 // pred_check
        %p167 = pneg %p49
      $region22: #{conv_bn_relu.2} parent=19 // pred_check_branch
        %169 = sbr.rel (%p167) target = $region24
      $region23: #{conv_bn_relu.2} parent=19 // pred_region
        %p170 = scmp.lt.s32.totalorder %s17, 1
        %s171 = scalar_select %p170, %s17, 1
        %s172 = smul.addr %s171, 54
        %s173 = smul.addr %s172, 4
        %s174 = scalar_lea.vmem %s0, %s173
      $region24: #{conv_bn_relu.2} parent=19 // pred_fallthru
        _
    $region20: #{conv_bn_relu.2} parent=5 // pred_fallthru
      _
    %p175 = scmp.le.s32.totalorder 1, %s10
    %p176 = scmp.lt.s32.totalorder %s10, 5
    %p177 = pnand %p175, %p176
    %p178 = pneg %p177
    // Predicated region
    $region25: #{conv_bn_relu.2} parent=5 // pred_check
      _
    $region26: #{conv_bn_relu.2} parent=5 // pred_check_branch
      %180 = sbr.rel (%p177) target = $region28
    $region27: #{conv_bn_relu.2} parent=5 // pred_region
      %s181 = ssub.s32 %s10, 1
      %p182 = scmp.lt.s32.totalorder %s20, 1
      %s183 = scalar_select %p182, %s20, 1
      %s184 = smul.addr %s183, 54
      %s185 = smul.addr %s184, 4
      %s186 = scalar_lea.vmem %s0, %s185
      %p187 = pneg %p55
      %p188 = pneg %p52
      %p189 = scmp.lt.s32.totalorder %s22, 0
      %s190 = scalar_select %p189, %s22, 0
      %s191 = smul.addr %s190, 2
      %s192 = scalar_lea.vmem %s1, %s191
      %p193 = pneg %p81
      %p194 = pneg %p78
      %p195 = pneg %p111
      %p196 = pneg %p108
      %s197 = smul.u32 8, %s21
      %p198 = scmp.lt.s32.totalorder %s20, 1
      %s199 = scalar_select %p198, %s20, 1
      %p200 = scmp.lt.s32.totalorder %s197, 15
      %s201 = scalar_select %p200, %s197, 15
      %p202 = scmp.lt.s32.totalorder %s22, 0
      %s203 = scalar_select %p202, %s22, 0
      %s204 = smul.addr %s201, 2
      %s205 = sadd.s32 %s203, %s204
      %s206 = smul.addr %s199, 32
      %s207 = sadd.s32 %s205, %s206
      %s208 = smul.addr %s207, 4
      %s209 = scalar_lea.vmem %s2, %s208
      %p210 = pneg %p141
      %p211 = pneg %p138
      %p212 = scmp.lt.s32.totalorder %s20, 1
      %s213 = scalar_select %p212, %s20, 1
      %p214 = scmp.lt.s32.totalorder %s21, 1
      %s215 = scalar_select %p214, %s21, 1
      %p216 = scmp.lt.s32.totalorder %s22, 0
      %s217 = scalar_select %p216, %s22, 0
      %s218 = sadd.s32 %s217, %s215
      %s219 = smul.addr %s213, 2
      %s220 = sadd.s32 %s218, %s219
      %s221 = smul.addr %s220, 2
      %s222 = scalar_lea.vmem %s3, %s221
      %p223 = scmp.lt.s32.totalorder %s20, 1
      %s224 = scalar_select %p223, %s20, 1
      %s225 = smul.addr %s224, 54
      %s226 = smul.addr %s225, 4
      %s227 = scalar_lea.vmem %s0, %s226
      %p228 = scmp.lt.s32.totalorder %s22, 0
      %s229 = scalar_select %p228, %s22, 0
      %s230 = smul.addr %s229, 2
      %s231 = scalar_lea.vmem %s1, %s230
      %s232 = smul.u32 8, %s21
      %p233 = scmp.lt.s32.totalorder %s20, 1
      %s234 = scalar_select %p233, %s20, 1
      %p235 = scmp.lt.s32.totalorder %s232, 15
      %s236 = scalar_select %p235, %s232, 15
      %p237 = scmp.lt.s32.totalorder %s22, 0
      %s238 = scalar_select %p237, %s22, 0
      %s239 = smul.addr %s236, 2
      %s240 = sadd.s32 %s238, %s239
      %s241 = smul.addr %s234, 32
      %s242 = sadd.s32 %s240, %s241
      %s243 = smul.addr %s242, 4
      %s244 = scalar_lea.vmem %s2, %s243
      %s245 = smul.u32 8, %s21
      %p246 = scmp.lt.s32.totalorder %s20, 1
      %s247 = scalar_select %p246, %s20, 1
      %p248 = scmp.lt.s32.totalorder %s21, 1
      %s249 = scalar_select %p248, %s21, 1
      %p250 = scmp.lt.s32.totalorder %s22, 0
      %s251 = scalar_select %p250, %s22, 0
      %s252 = sadd.s32 %s251, %s249
      %s253 = smul.addr %s247, 2
      %s254 = sadd.s32 %s252, %s253
      %s255 = smul.addr %s254, 2
      %s256 = scalar_lea.vmem %s3, %s255
      %s258 = smul.u32 %s21, 8
      %s259 = smul.u32 %s258, 3
      %s260 = smul.addr %s259, 4
      %s261 = scalar_lea.vmem %s227, %s260
      %v262 = vld [vmem:[%s261] sm:$0xf]
      %v263 = vld [vmem:[%s261 + $0x4] sm:$0xf]
      %v264 = vld [vmem:[%s261 + $0x8] sm:$0x1]
      %v265 = vld [vmem:[%s261 + $0xc] sm:$0xf]
      %v266 = vld [vmem:[%s261 + $0x10] sm:$0xf]
      %v267 = vld [vmem:[%s261 + $0x14] sm:$0x1]
      %v268 = vld [vmem:[%s261 + $0x18] sm:$0xf]
      %v269 = vld [vmem:[%s261 + $0x1c] sm:$0xf]
      %v270 = vld [vmem:[%s261 + $0x20] sm:$0x1]
      %v271 = vld [vmem:[%s261 + $0x24] sm:$0xf]
      %v272 = vld [vmem:[%s261 + $0x28] sm:$0xf]
      %v273 = vld [vmem:[%s261 + $0x2c] sm:$0x1]
      %v274 = vld [vmem:[%s261 + $0x30] sm:$0xf]
      %v275 = vld [vmem:[%s261 + $0x34] sm:$0xf]
      %v276 = vld [vmem:[%s261 + $0x38] sm:$0x1]
      %v277 = vld [vmem:[%s261 + $0x3c] sm:$0xf]
      %v278 = vld [vmem:[%s261 + $0x40] sm:$0xf]
      %v279 = vld [vmem:[%s261 + $0x44] sm:$0x1]
      %v280 = vld [vmem:[%s261 + $0x48] sm:$0xf]
      %v281 = vld [vmem:[%s261 + $0x4c] sm:$0xf]
      %v282 = vld [vmem:[%s261 + $0x50] sm:$0x1]
      %v283 = vld [vmem:[%s261 + $0x54] sm:$0xf]
      %v284 = vld [vmem:[%s261 + $0x58] sm:$0xf]
      %v285 = vld [vmem:[%s261 + $0x5c] sm:$0x1]
      %v286 = vld [vmem:[%s231] sm:$0x3]
      %vm287 = vsmask.f32 3328
      %vm288 = vsmask.f32 7440
      %vm289 = vmor %vm287, %vm288
      %v291 = vshrl.u32 %v262, 16
      %v293 = vrot.slane %v291, 4
      %v294 = vshll.u32 %v262, 16
      %v296 = vrot.slane %v294, 5
      %v297 = vor.u32 %v293, %v296
      %v298 = vrot.slane %v297, 4
      %v300 = vshll.u32 %v263, 16
      %v302 = vrot.slane %v300, 5
      %v303 = vsel %vm289, %v298, %v302
      %v304 = vshrl.u32 %v263, 16
      %v306 = vrot.slane %v304, 4
      %v307 = vor.u32 %v306, %v302
      %v308 = vrot.slane %v307, 4
      %v310 = vshll.u32 %v264, 16
      %v312 = vrot.slane %v310, 5
      %v313 = vsel %vm289, %v308, %v312
      %v315 = vshrl.u32 %v265, 16
      %v317 = vrot.slane %v315, 4
      %v318 = vshll.u32 %v265, 16
      %v320 = vrot.slane %v318, 5
      %v321 = vor.u32 %v317, %v320
      %v322 = vrot.slane %v321, 4
      %v324 = vshll.u32 %v266, 16
      %v326 = vrot.slane %v324, 5
      %v327 = vsel %vm289, %v322, %v326
      %v328 = vshrl.u32 %v266, 16
      %v330 = vrot.slane %v328, 4
      %v331 = vor.u32 %v330, %v326
      %v332 = vrot.slane %v331, 4
      %v334 = vshll.u32 %v267, 16
      %v336 = vrot.slane %v334, 5
      %v337 = vsel %vm289, %v332, %v336
      %v339 = vshrl.u32 %v268, 16
      %v341 = vrot.slane %v339, 4
      %v342 = vshll.u32 %v268, 16
      %v344 = vrot.slane %v342, 5
      %v345 = vor.u32 %v341, %v344
      %v346 = vrot.slane %v345, 4
      %v348 = vshll.u32 %v269, 16
      %v350 = vrot.slane %v348, 5
      %v351 = vsel %vm289, %v346, %v350
      %v352 = vshrl.u32 %v269, 16
      %v354 = vrot.slane %v352, 4
      %v355 = vor.u32 %v354, %v350
      %v356 = vrot.slane %v355, 4
      %v358 = vshll.u32 %v270, 16
      %v360 = vrot.slane %v358, 5
      %v361 = vsel %vm289, %v356, %v360
      %v363 = vshrl.u32 %v271, 16
      %v365 = vrot.slane %v363, 4
      %v366 = vshll.u32 %v271, 16
      %v368 = vrot.slane %v366, 5
      %v369 = vor.u32 %v365, %v368
      %v370 = vrot.slane %v369, 4
      %v372 = vshll.u32 %v272, 16
      %v374 = vrot.slane %v372, 5
      %v375 = vsel %vm289, %v370, %v374
      %v376 = vshrl.u32 %v272, 16
      %v378 = vrot.slane %v376, 4
      %v379 = vor.u32 %v378, %v374
      %v380 = vrot.slane %v379, 4
      %v382 = vshll.u32 %v273, 16
      %v384 = vrot.slane %v382, 5
      %v385 = vsel %vm289, %v380, %v384
      %v387 = vshrl.u32 %v274, 16
      %v389 = vrot.slane %v387, 4
      %v390 = vshll.u32 %v274, 16
      %v392 = vrot.slane %v390, 5
      %v393 = vor.u32 %v389, %v392
      %v394 = vrot.slane %v393, 4
      %v396 = vshll.u32 %v275, 16
      %v398 = vrot.slane %v396, 5
      %v399 = vsel %vm289, %v394, %v398
      %v400 = vshrl.u32 %v275, 16
      %v402 = vrot.slane %v400, 4
      %v403 = vor.u32 %v402, %v398
      %v404 = vrot.slane %v403, 4
      %v406 = vshll.u32 %v276, 16
      %v408 = vrot.slane %v406, 5
      %v409 = vsel %vm289, %v404, %v408
      %v411 = vshrl.u32 %v277, 16
      %v413 = vrot.slane %v411, 4
      %v414 = vshll.u32 %v277, 16
      %v416 = vrot.slane %v414, 5
      %v417 = vor.u32 %v413, %v416
      %v418 = vrot.slane %v417, 4
      %v420 = vshll.u32 %v278, 16
      %v422 = vrot.slane %v420, 5
      %v423 = vsel %vm289, %v418, %v422
      %v424 = vshrl.u32 %v278, 16
      %v426 = vrot.slane %v424, 4
      %v427 = vor.u32 %v426, %v422
      %v428 = vrot.slane %v427, 4
      %v430 = vshll.u32 %v279, 16
      %v432 = vrot.slane %v430, 5
      %v433 = vsel %vm289, %v428, %v432
      %v435 = vshrl.u32 %v280, 16
      %v437 = vrot.slane %v435, 4
      %v438 = vshll.u32 %v280, 16
      %v440 = vrot.slane %v438, 5
      %v441 = vor.u32 %v437, %v440
      %v442 = vrot.slane %v441, 4
      %v444 = vshll.u32 %v281, 16
      %v446 = vrot.slane %v444, 5
      %v447 = vsel %vm289, %v442, %v446
      %v448 = vshrl.u32 %v281, 16
      %v450 = vrot.slane %v448, 4
      %v451 = vor.u32 %v450, %v446
      %v452 = vrot.slane %v451, 4
      %v454 = vshll.u32 %v282, 16
      %v456 = vrot.slane %v454, 5
      %v457 = vsel %vm289, %v452, %v456
      %v459 = vshrl.u32 %v283, 16
      %v461 = vrot.slane %v459, 4
      %v462 = vshll.u32 %v283, 16
      %v464 = vrot.slane %v462, 5
      %v465 = vor.u32 %v461, %v464
      %v466 = vrot.slane %v465, 4
      %v468 = vshll.u32 %v284, 16
      %v470 = vrot.slane %v468, 5
      %v471 = vsel %vm289, %v466, %v470
      %v472 = vshrl.u32 %v284, 16
      %v474 = vrot.slane %v472, 4
      %v475 = vor.u32 %v474, %v470
      %v476 = vrot.slane %v475, 4
      %v478 = vshll.u32 %v285, 16
      %v480 = vrot.slane %v478, 5
      %v481 = vsel %vm289, %v476, %v480
      %s482 = scalar_lea.vmem %s231, 2
      %v483 = vld [vmem:[%s482] sm:$0x3]
      %v484 = vunpack.c.l.b16 %v303
      %v485 = vunpack.c.l.b16 %v313
      %v486 = vunpack.c.l.b16 %v327
      %v487 = vunpack.c.l.b16 %v337
      %v488 = vunpack.c.l.b16 %v351
      %v489 = vunpack.c.l.b16 %v361
      %v490 = vunpack.c.l.b16 %v375
      %v491 = vunpack.c.l.b16 %v385
      %v492 = vunpack.c.l.b16 %v399
      %v493 = vunpack.c.l.b16 %v409
      %v494 = vunpack.c.l.b16 %v423
      %v495 = vunpack.c.l.b16 %v433
      %v496 = vunpack.c.l.b16 %v447
      %v497 = vunpack.c.l.b16 %v457
      %v498 = vunpack.c.l.b16 %v471
      %v499 = vunpack.c.l.b16 %v481
      %v500 = vpack.c.b16 %v485, %v484
      %v501 = vpack.c.b16 %v487, %v486
      %v502 = vpack.c.b16 %v489, %v488
      %v503 = vpack.c.b16 %v491, %v490
      %v504 = vpack.c.b16 %v493, %v492
      %v505 = vpack.c.b16 %v495, %v494
      %v506 = vpack.c.b16 %v497, %v496
      %v507 = vpack.c.b16 %v499, %v498
      %vm508 = vcmask 31744
      %v510 = vsel %vm508, %v500, 0
      %v513 = vsel %vm508, %v501, 0
      %v516 = vsel %vm508, %v502, 0
      %v519 = vsel %vm508, %v503, 0
      %v522 = vsel %vm508, %v504, 0
      %v525 = vsel %vm508, %v505, 0
      %v528 = vsel %vm508, %v506, 0
      %v531 = vsel %vm508, %v507, 0
      %vm533 = vcmask 1041408
      %v535 = vsel %vm533, %v483, 0
      %537 = vmatprep.subr.bf16.mxu0 0
      %538 = vmatpush1.bf16.msra.mxu0 %v535
      %539 = vmatprep.subr.bf16.mxu0 0
      %540 = vmatpush1.bf16.msra.mxu0 0
      %541 = vmatprep.subr.bf16.mxu0 0
      %542 = vmatpush1.bf16.msra.mxu0 0
      %543 = vmatprep.subr.bf16.mxu0 0
      %544 = vmatpush1.bf16.msra.mxu0 0
      %545 = vmatprep.subr.bf16.mxu0 0
      %546 = vmatpush1.bf16.msra.mxu0 0
      %547 = vmatprep.subr.bf16.mxu0 0
      %548 = vmatpush1.bf16.msra.mxu0 0
      %549 = vmatprep.subr.bf16.mxu0 0
      %550 = vmatpush1.bf16.msra.mxu0 0
      %551 = vmatprep.subr.bf16.mxu0 0
      %552 = vmatpush1.bf16.msra.mxu0 0
      %553 = vmatprep.subr.bf16.mxu0 0
      %554 = vmatpush1.bf16.msra.mxu0 0
      %555 = vmatprep.subr.bf16.mxu0 0
      %556 = vmatpush1.bf16.msra.mxu0 0
      %557 = vmatprep.subr.bf16.mxu0 0
      %558 = vmatpush1.bf16.msra.mxu0 0
      %559 = vmatprep.subr.bf16.mxu0 0
      %560 = vmatpush1.bf16.msra.mxu0 0
      %561 = vmatprep.subr.bf16.mxu0 0
      %562 = vmatpush1.bf16.msra.mxu0 0
      %563 = vmatprep.subr.bf16.mxu0 0
      %564 = vmatpush1.bf16.msra.mxu0 0
      %565 = vmatprep.subr.bf16.mxu0 0
      %566 = vmatpush1.bf16.msra.mxu0 0
      %567 = vmatprep.subr.bf16.mxu0 0
      %568 = vmatpush1.bf16.msra.mxu0 0
      %569 = vmatprep.mubr.bf16.mxu0 0
      %570 = vmatmul.mubr.bf16.gmra.mrb[0].mxu0 %v510
      %v571 = vpop.f32.mrb[0].mxu0
      %v572 = vadd.f32 0.0, %v571
      %v573 = vpop.f32.mrb[0].mxu0
      %v574 = vpop.f32.mrb[0].mxu0
      %v575 = vadd.f32 0.0, %v574
      %v576 = vpop.f32.mrb[0].mxu0
      %577 = vmatprep.mubr.bf16.mxu0 0
      %578 = vmatmul.mubr.bf16.gmra.mrb[0].mxu0 %v513
      %v579 = vpop.f32.mrb[0].mxu0
      %v580 = vadd.f32 0.0, %v579
      %v581 = vpop.f32.mrb[0].mxu0
      %v582 = vpop.f32.mrb[0].mxu0
      %v583 = vadd.f32 0.0, %v582
      %v584 = vpop.f32.mrb[0].mxu0
      %585 = vmatprep.mubr.bf16.mxu0 0
      %586 = vmatmul.mubr.bf16.gmra.mrb[0].mxu0 %v516
      %v587 = vpop.f32.mrb[0].mxu0
      %v588 = vadd.f32 0.0, %v587
      %v589 = vpop.f32.mrb[0].mxu0
      %v590 = vpop.f32.mrb[0].mxu0
      %v591 = vadd.f32 0.0, %v590
      %v592 = vpop.f32.mrb[0].mxu0
      %593 = vmatprep.mubr.bf16.mxu0 0
      %594 = vmatmul.mubr.bf16.gmra.mrb[0].mxu0 %v519
      %v595 = vpop.f32.mrb[0].mxu0
      %v596 = vadd.f32 0.0, %v595
      %v597 = vpop.f32.mrb[0].mxu0
      %v598 = vpop.f32.mrb[0].mxu0
      %v599 = vadd.f32 0.0, %v598
      %v600 = vpop.f32.mrb[0].mxu0
      %601 = vmatprep.mubr.bf16.mxu0 0
      %602 = vmatmul.mubr.bf16.gmra.mrb[0].mxu0 %v522
      %v603 = vpop.f32.mrb[0].mxu0
      %v604 = vadd.f32 0.0, %v603
      %v605 = vpop.f32.mrb[0].mxu0
      %v606 = vpop.f32.mrb[0].mxu0
      %v607 = vadd.f32 0.0, %v606
      %v608 = vpop.f32.mrb[0].mxu0
      %609 = vmatprep.mubr.bf16.mxu0 0
      %610 = vmatmul.mubr.bf16.gmra.mrb[0].mxu0 %v525
      %v611 = vpop.f32.mrb[0].mxu0
      %v612 = vadd.f32 0.0, %v611
      %v613 = vpop.f32.mrb[0].mxu0
      %v614 = vpop.f32.mrb[0].mxu0
      %v615 = vadd.f32 0.0, %v614
      %v616 = vpop.f32.mrb[0].mxu0
      %617 = vmatprep.mubr.bf16.mxu0 0
      %618 = vmatmul.mubr.bf16.gmra.mrb[0].mxu0 %v528
      %v619 = vpop.f32.mrb[0].mxu0
      %v620 = vadd.f32 0.0, %v619
      %v621 = vpop.f32.mrb[0].mxu0
      %v622 = vpop.f32.mrb[0].mxu0
      %v623 = vadd.f32 0.0, %v622
      %v624 = vpop.f32.mrb[0].mxu0
      %625 = vmatprep.mubr.bf16.mxu0 0
      %626 = vmatmul.mubr.bf16.gmra.mrb[0].mxu0 %v531
      %v627 = vpop.f32.mrb[0].mxu0
      %v628 = vadd.f32 0.0, %v627
      %v629 = vpop.f32.mrb[0].mxu0
      %v630 = vpop.f32.mrb[0].mxu0
      %v631 = vadd.f32 0.0, %v630
      %v632 = vpop.f32.mrb[0].mxu0
      %633 = vdwg.mxu0
      %v650 = vunpack.c.l.b16 %v262
      %v651 = vunpack.c.l.b16 %v263
      %v652 = vunpack.c.l.b16 %v265
      %v653 = vunpack.c.l.b16 %v266
      %v654 = vunpack.c.l.b16 %v268
      %v655 = vunpack.c.l.b16 %v269
      %v656 = vunpack.c.l.b16 %v271
      %v657 = vunpack.c.l.b16 %v272
      %v658 = vunpack.c.l.b16 %v274
      %v659 = vunpack.c.l.b16 %v275
      %v660 = vunpack.c.l.b16 %v277
      %v661 = vunpack.c.l.b16 %v278
      %v662 = vunpack.c.l.b16 %v280
      %v663 = vunpack.c.l.b16 %v281
      %v664 = vunpack.c.l.b16 %v283
      %v665 = vunpack.c.l.b16 %v284
      %v666 = vpack.c.b16 %v651, %v650
      %v667 = vpack.c.b16 %v653, %v652
      %v668 = vpack.c.b16 %v655, %v654
      %v669 = vpack.c.b16 %v657, %v656
      %v670 = vpack.c.b16 %v659, %v658
      %v671 = vpack.c.b16 %v661, %v660
      %v672 = vpack.c.b16 %v663, %v662
      %v673 = vpack.c.b16 %v665, %v664
      %v675 = vsel %vm508, %v666, 0
      %v678 = vsel %vm508, %v667, 0
      %v681 = vsel %vm508, %v668, 0
      %v684 = vsel %vm508, %v669, 0
      %v687 = vsel %vm508, %v670, 0
      %v690 = vsel %vm508, %v671, 0
      %v693 = vsel %vm508, %v672, 0
      %v696 = vsel %vm508, %v673, 0
      %v699 = vsel %vm533, %v286, 0
      %701 = vmatprep.subr.bf16.mxu0 0
      %702 = vmatpush1.bf16.msra.mxu0 %v699
      %703 = vmatprep.subr.bf16.mxu0 0
      %704 = vmatpush1.bf16.msra.mxu0 0
      %705 = vmatprep.subr.bf16.mxu0 0
      %706 = vmatpush1.bf16.msra.mxu0 0
      %707 = vmatprep.subr.bf16.mxu0 0
      %708 = vmatpush1.bf16.msra.mxu0 0
      %709 = vmatprep.subr.bf16.mxu0 0
      %710 = vmatpush1.bf16.msra.mxu0 0
      %711 = vmatprep.subr.bf16.mxu0 0
      %712 = vmatpush1.bf16.msra.mxu0 0
      %713 = vmatprep.subr.bf16.mxu0 0
      %714 = vmatpush1.bf16.msra.mxu0 0
      %715 = vmatprep.subr.bf16.mxu0 0
      %716 = vmatpush1.bf16.msra.mxu0 0
      %717 = vmatprep.subr.bf16.mxu0 0
      %718 = vmatpush1.bf16.msra.mxu0 0
      %719 = vmatprep.subr.bf16.mxu0 0
      %720 = vmatpush1.bf16.msra.mxu0 0
      %721 = vmatprep.subr.bf16.mxu0 0
      %722 = vmatpush1.bf16.msra.mxu0 0
      %723 = vmatprep.subr.bf16.mxu0 0
      %724 = vmatpush1.bf16.msra.mxu0 0
      %725 = vmatprep.subr.bf16.mxu0 0
      %726 = vmatpush1.bf16.msra.mxu0 0
      %727 = vmatprep.subr.bf16.mxu0 0
      %728 = vmatpush1.bf16.msra.mxu0 0
      %729 = vmatprep.subr.bf16.mxu0 0
      %730 = vmatpush1.bf16.msra.mxu0 0
      %731 = vmatprep.subr.bf16.mxu0 0
      %732 = vmatpush1.bf16.msra.mxu0 0
      %733 = vmatprep.mubr.bf16.mxu0 0
      %734 = vmatmul.mubr.bf16.gmra.mrb[0].mxu0 %v675
      %v735 = vpop.f32.mrb[0].mxu0
      %v736 = vadd.f32 %v572, %v735
      %v737 = vpop.f32.mrb[0].mxu0
      %v738 = vpop.f32.mrb[0].mxu0
      %v739 = vadd.f32 %v575, %v738
      %v740 = vpop.f32.mrb[0].mxu0
      %741 = vmatprep.mubr.bf16.mxu0 0
      %742 = vmatmul.mubr.bf16.gmra.mrb[0].mxu0 %v678
      %v743 = vpop.f32.mrb[0].mxu0
      %v744 = vadd.f32 %v580, %v743
      %v745 = vpop.f32.mrb[0].mxu0
      %v746 = vpop.f32.mrb[0].mxu0
      %v747 = vadd.f32 %v583, %v746
      %v748 = vpop.f32.mrb[0].mxu0
      %749 = vmatprep.mubr.bf16.mxu0 0
      %750 = vmatmul.mubr.bf16.gmra.mrb[0].mxu0 %v681
      %v751 = vpop.f32.mrb[0].mxu0
      %v752 = vadd.f32 %v588, %v751
      %v753 = vpop.f32.mrb[0].mxu0
      %v754 = vpop.f32.mrb[0].mxu0
      %v755 = vadd.f32 %v591, %v754
      %v756 = vpop.f32.mrb[0].mxu0
      %757 = vmatprep.mubr.bf16.mxu0 0
      %758 = vmatmul.mubr.bf16.gmra.mrb[0].mxu0 %v684
      %v759 = vpop.f32.mrb[0].mxu0
      %v760 = vadd.f32 %v596, %v759
      %v761 = vpop.f32.mrb[0].mxu0
      %v762 = vpop.f32.mrb[0].mxu0
      %v763 = vadd.f32 %v599, %v762
      %v764 = vpop.f32.mrb[0].mxu0
      %765 = vmatprep.mubr.bf16.mxu0 0
      %766 = vmatmul.mubr.bf16.gmra.mrb[0].mxu0 %v687
      %v767 = vpop.f32.mrb[0].mxu0
      %v768 = vadd.f32 %v604, %v767
      %v769 = vpop.f32.mrb[0].mxu0
      %v770 = vpop.f32.mrb[0].mxu0
      %v771 = vadd.f32 %v607, %v770
      %v772 = vpop.f32.mrb[0].mxu0
      %773 = vmatprep.mubr.bf16.mxu0 0
      %774 = vmatmul.mubr.bf16.gmra.mrb[0].mxu0 %v690
      %v775 = vpop.f32.mrb[0].mxu0
      %v776 = vadd.f32 %v612, %v775
      %v777 = vpop.f32.mrb[0].mxu0
      %v778 = vpop.f32.mrb[0].mxu0
      %v779 = vadd.f32 %v615, %v778
      %v780 = vpop.f32.mrb[0].mxu0
      %781 = vmatprep.mubr.bf16.mxu0 0
      %782 = vmatmul.mubr.bf16.gmra.mrb[0].mxu0 %v693
      %v783 = vpop.f32.mrb[0].mxu0
      %v784 = vadd.f32 %v620, %v783
      %v785 = vpop.f32.mrb[0].mxu0
      %v786 = vpop.f32.mrb[0].mxu0
      %v787 = vadd.f32 %v623, %v786
      %v788 = vpop.f32.mrb[0].mxu0
      %789 = vmatprep.mubr.bf16.mxu0 0
      %790 = vmatmul.mubr.bf16.gmra.mrb[0].mxu0 %v696
      %v791 = vpop.f32.mrb[0].mxu0
      %v792 = vadd.f32 %v628, %v791
      %v793 = vpop.f32.mrb[0].mxu0
      %v794 = vpop.f32.mrb[0].mxu0
      %v795 = vadd.f32 %v631, %v794
      %v796 = vpop.f32.mrb[0].mxu0
      %797 = vdwg.mxu0
      %vm806 = vcmask 1042432
      %vm807 = vcmask 1046532
      %vm808 = vmor %vm806, %vm807
      %v809 = vrot.slane %v262, 5
      %v810 = vrot.slane %v809, 4
      %v811 = vrot.slane %v263, 5
      %v812 = vsel %vm808, %v810, %v811
      %v813 = vrot.slane %v811, 4
      %v814 = vrot.slane %v264, 5
      %v815 = vsel %vm808, %v813, %v814
      %v816 = vrot.slane %v265, 5
      %v817 = vrot.slane %v816, 4
      %v818 = vrot.slane %v266, 5
      %v819 = vsel %vm808, %v817, %v818
      %v820 = vrot.slane %v818, 4
      %v821 = vrot.slane %v267, 5
      %v822 = vsel %vm808, %v820, %v821
      %v823 = vrot.slane %v268, 5
      %v824 = vrot.slane %v823, 4
      %v825 = vrot.slane %v269, 5
      %v826 = vsel %vm808, %v824, %v825
      %v827 = vrot.slane %v825, 4
      %v828 = vrot.slane %v270, 5
      %v829 = vsel %vm808, %v827, %v828
      %v830 = vrot.slane %v271, 5
      %v831 = vrot.slane %v830, 4
      %v832 = vrot.slane %v272, 5
      %v833 = vsel %vm808, %v831, %v832
      %v834 = vrot.slane %v832, 4
      %v835 = vrot.slane %v273, 5
      %v836 = vsel %vm808, %v834, %v835
      %v837 = vrot.slane %v274, 5
      %v838 = vrot.slane %v837, 4
      %v839 = vrot.slane %v275, 5
      %v840 = vsel %vm808, %v838, %v839
      %v841 = vrot.slane %v839, 4
      %v842 = vrot.slane %v276, 5
      %v843 = vsel %vm808, %v841, %v842
      %v844 = vrot.slane %v277, 5
      %v845 = vrot.slane %v844, 4
      %v846 = vrot.slane %v278, 5
      %v847 = vsel %vm808, %v845, %v846
      %v848 = vrot.slane %v846, 4
      %v849 = vrot.slane %v279, 5
      %v850 = vsel %vm808, %v848, %v849
      %v851 = vrot.slane %v280, 5
      %v852 = vrot.slane %v851, 4
      %v853 = vrot.slane %v281, 5
      %v854 = vsel %vm808, %v852, %v853
      %v855 = vrot.slane %v853, 4
      %v856 = vrot.slane %v282, 5
      %v857 = vsel %vm808, %v855, %v856
      %v858 = vrot.slane %v283, 5
      %v859 = vrot.slane %v858, 4
      %v860 = vrot.slane %v284, 5
      %v861 = vsel %vm808, %v859, %v860
      %v862 = vrot.slane %v860, 4
      %v863 = vrot.slane %v285, 5
      %v864 = vsel %vm808, %v862, %v863
      %s865 = scalar_lea.vmem %s231, 4
      %v866 = vld [vmem:[%s865] sm:$0x3]
      %v867 = vunpack.c.l.b16 %v812
      %v868 = vunpack.c.l.b16 %v815
      %v869 = vunpack.c.l.b16 %v819
      %v870 = vunpack.c.l.b16 %v822
      %v871 = vunpack.c.l.b16 %v826
      %v872 = vunpack.c.l.b16 %v829
      %v873 = vunpack.c.l.b16 %v833
      %v874 = vunpack.c.l.b16 %v836
      %v875 = vunpack.c.l.b16 %v840
      %v876 = vunpack.c.l.b16 %v843
      %v877 = vunpack.c.l.b16 %v847
      %v878 = vunpack.c.l.b16 %v850
      %v879 = vunpack.c.l.b16 %v854
      %v880 = vunpack.c.l.b16 %v857
      %v881 = vunpack.c.l.b16 %v861
      %v882 = vunpack.c.l.b16 %v864
      %v883 = vpack.c.b16 %v868, %v867
      %v884 = vpack.c.b16 %v870, %v869
      %v885 = vpack.c.b16 %v872, %v871
      %v886 = vpack.c.b16 %v874, %v873
      %v887 = vpack.c.b16 %v876, %v875
      %v888 = vpack.c.b16 %v878, %v877
      %v889 = vpack.c.b16 %v880, %v879
      %v890 = vpack.c.b16 %v882, %v881
      %v892 = vsel %vm508, %v883, 0
      %v895 = vsel %vm508, %v884, 0
      %v898 = vsel %vm508, %v885, 0
      %v901 = vsel %vm508, %v886, 0
      %v904 = vsel %vm508, %v887, 0
      %v907 = vsel %vm508, %v888, 0
      %v910 = vsel %vm508, %v889, 0
      %v913 = vsel %vm508, %v890, 0
      %v916 = vsel %vm533, %v866, 0
      %918 = vmatprep.subr.bf16.mxu0 0
      %919 = vmatpush1.bf16.msra.mxu0 %v916
      %920 = vmatprep.subr.bf16.mxu0 0
      %921 = vmatpush1.bf16.msra.mxu0 0
      %922 = vmatprep.subr.bf16.mxu0 0
      %923 = vmatpush1.bf16.msra.mxu0 0
      %924 = vmatprep.subr.bf16.mxu0 0
      %925 = vmatpush1.bf16.msra.mxu0 0
      %926 = vmatprep.subr.bf16.mxu0 0
      %927 = vmatpush1.bf16.msra.mxu0 0
      %928 = vmatprep.subr.bf16.mxu0 0
      %929 = vmatpush1.bf16.msra.mxu0 0
      %930 = vmatprep.subr.bf16.mxu0 0
      %931 = vmatpush1.bf16.msra.mxu0 0
      %932 = vmatprep.subr.bf16.mxu0 0
      %933 = vmatpush1.bf16.msra.mxu0 0
      %934 = vmatprep.subr.bf16.mxu0 0
      %935 = vmatpush1.bf16.msra.mxu0 0
      %936 = vmatprep.subr.bf16.mxu0 0
      %937 = vmatpush1.bf16.msra.mxu0 0
      %938 = vmatprep.subr.bf16.mxu0 0
      %939 = vmatpush1.bf16.msra.mxu0 0
      %940 = vmatprep.subr.bf16.mxu0 0
      %941 = vmatpush1.bf16.msra.mxu0 0
      %942 = vmatprep.subr.bf16.mxu0 0
      %943 = vmatpush1.bf16.msra.mxu0 0
      %944 = vmatprep.subr.bf16.mxu0 0
      %945 = vmatpush1.bf16.msra.mxu0 0
      %946 = vmatprep.subr.bf16.mxu0 0
      %947 = vmatpush1.bf16.msra.mxu0 0
      %948 = vmatprep.subr.bf16.mxu0 0
      %949 = vmatpush1.bf16.msra.mxu0 0
      %950 = vmatprep.mubr.bf16.mxu0 0
      %951 = vmatmul.mubr.bf16.gmra.mrb[0].mxu0 %v892
      %v952 = vpop.f32.mrb[0].mxu0
      %v953 = vadd.f32 0.0, %v952
      %v954 = vpop.f32.mrb[0].mxu0
      %v955 = vpop.f32.mrb[0].mxu0
      %v956 = vadd.f32 0.0, %v955
      %v957 = vpop.f32.mrb[0].mxu0
      %958 = vmatprep.mubr.bf16.mxu0 0
      %959 = vmatmul.mubr.bf16.gmra.mrb[0].mxu0 %v895
      %v960 = vpop.f32.mrb[0].mxu0
      %v961 = vadd.f32 0.0, %v960
      %v962 = vpop.f32.mrb[0].mxu0
      %v963 = vpop.f32.mrb[0].mxu0
      %v964 = vadd.f32 0.0, %v963
      %v965 = vpop.f32.mrb[0].mxu0
      %966 = vmatprep.mubr.bf16.mxu0 0
      %967 = vmatmul.mubr.bf16.gmra.mrb[0].mxu0 %v898
      %v968 = vpop.f32.mrb[0].mxu0
      %v969 = vadd.f32 0.0, %v968
      %v970 = vpop.f32.mrb[0].mxu0
      %v971 = vpop.f32.mrb[0].mxu0
      %v972 = vadd.f32 0.0, %v971
      %v973 = vpop.f32.mrb[0].mxu0
      %974 = vmatprep.mubr.bf16.mxu0 0
      %975 = vmatmul.mubr.bf16.gmra.mrb[0].mxu0 %v901
      %v976 = vpop.f32.mrb[0].mxu0
      %v977 = vadd.f32 0.0, %v976
      %v978 = vpop.f32.mrb[0].mxu0
      %v979 = vpop.f32.mrb[0].mxu0
      %v980 = vadd.f32 0.0, %v979
      %v981 = vpop.f32.mrb[0].mxu0
      %982 = vmatprep.mubr.bf16.mxu0 0
      %983 = vmatmul.mubr.bf16.gmra.mrb[0].mxu0 %v904
      %v984 = vpop.f32.mrb[0].mxu0
      %v985 = vadd.f32 0.0, %v984
      %v986 = vpop.f32.mrb[0].mxu0
      %v987 = vpop.f32.mrb[0].mxu0
      %v988 = vadd.f32 0.0, %v987
      %v989 = vpop.f32.mrb[0].mxu0
      %990 = vmatprep.mubr.bf16.mxu0 0
      %991 = vmatmul.mubr.bf16.gmra.mrb[0].mxu0 %v907
      %v992 = vpop.f32.mrb[0].mxu0
      %v993 = vadd.f32 0.0, %v992
      %v994 = vpop.f32.mrb[0].mxu0
      %v995 = vpop.f32.mrb[0].mxu0
      %v996 = vadd.f32 0.0, %v995
      %v997 = vpop.f32.mrb[0].mxu0
      %998 = vmatprep.mubr.bf16.mxu0 0
      %999 = vmatmul.mubr.bf16.gmra.mrb[0].mxu0 %v910
      %v1000 = vpop.f32.mrb[0].mxu0
      %v1001 = vadd.f32 0.0, %v1000
      %v1002 = vpop.f32.mrb[0].mxu0
      %v1003 = vpop.f32.mrb[0].mxu0
      %v1004 = vadd.f32 0.0, %v1003
      %v1005 = vpop.f32.mrb[0].mxu0
      %1006 = vmatprep.mubr.bf16.mxu0 0
      %1007 = vmatmul.mubr.bf16.gmra.mrb[0].mxu0 %v913
      %v1008 = vpop.f32.mrb[0].mxu0
      %v1009 = vadd.f32 0.0, %v1008
      %v1010 = vpop.f32.mrb[0].mxu0
      %v1011 = vpop.f32.mrb[0].mxu0
      %v1012 = vadd.f32 0.0, %v1011
      %v1013 = vpop.f32.mrb[0].mxu0
      %1014 = vdwg.mxu0
      %v1015 = vadd.f32 %v736, %v953
      %v1016 = vadd.f32 %v739, %v956
      %v1017 = vadd.f32 %v744, %v961
      %v1018 = vadd.f32 %v747, %v964
      %v1019 = vadd.f32 %v752, %v969
      %v1020 = vadd.f32 %v755, %v972
      %v1021 = vadd.f32 %v760, %v977
      %v1022 = vadd.f32 %v763, %v980
      %v1023 = vadd.f32 %v768, %v985
      %v1024 = vadd.f32 %v771, %v988
      %v1025 = vadd.f32 %v776, %v993
      %v1026 = vadd.f32 %v779, %v996
      %v1027 = vadd.f32 %v784, %v1001
      %v1028 = vadd.f32 %v787, %v1004
      %v1029 = vadd.f32 %v792, %v1009
      %v1030 = vadd.f32 %v795, %v1012
      %s1031 = sadd.s32 %s258, 1
      %s1032 = smul.u32 %s1031, 3
      %s1033 = smul.addr %s1032, 4
      %s1034 = scalar_lea.vmem %s227, %s1033
      %v1035 = vld [vmem:[%s1034] sm:$0xf]
      %v1036 = vld [vmem:[%s1034 + $0x4] sm:$0xf]
      %v1037 = vld [vmem:[%s1034 + $0x8] sm:$0x1]
      %v1038 = vld [vmem:[%s1034 + $0xc] sm:$0xf]
      %v1039 = vld [vmem:[%s1034 + $0x10] sm:$0xf]
      %v1040 = vld [vmem:[%s1034 + $0x14] sm:$0x1]
      %v1041 = vld [vmem:[%s1034 + $0x18] sm:$0xf]
      %v1042 = vld [vmem:[%s1034 + $0x1c] sm:$0xf]
      %v1043 = vld [vmem:[%s1034 + $0x20] sm:$0x1]
      %v1044 = vld [vmem:[%s1034 + $0x24] sm:$0xf]
      %v1045 = vld [vmem:[%s1034 + $0x28] sm:$0xf]
      %v1046 = vld [vmem:[%s1034 + $0x2c] sm:$0x1]
      %v1047 = vld [vmem:[%s1034 + $0x30] sm:$0xf]
      %v1048 = vld [vmem:[%s1034 + $0x34] sm:$0xf]
      %v1049 = vld [vmem:[%s1034 + $0x38] sm:$0x1]
      %v1050 = vld [vmem:[%s1034 + $0x3c] sm:$0xf]
      %v1051 = vld [vmem:[%s1034 + $0x40] sm:$0xf]
      %v1052 = vld [vmem:[%s1034 + $0x44] sm:$0x1]
      %v1053 = vld [vmem:[%s1034 + $0x48] sm:$0xf]
      %v1054 = vld [vmem:[%s1034 + $0x4c] sm:$0xf]
      %v1055 = vld [vmem:[%s1034 + $0x50] sm:$0x1]
      %v1056 = vld [vmem:[%s1034 + $0x54] sm:$0xf]
      %v1057 = vld [vmem:[%s1034 + $0x58] sm:$0xf]
      %v1058 = vld [vmem:[%s1034 + $0x5c] sm:$0x1]
      %s1059 = scalar_lea.vmem %s231, 6
      %v1060 = vld [vmem:[%s1059] sm:$0x3]
      %v1077 = vunpack.c.l.b16 %v1035
      %v1078 = vunpack.c.l.b16 %v1036
      %v1079 = vunpack.c.l.b16 %v1038
      %v1080 = vunpack.c.l.b16 %v1039
      %v1081 = vunpack.c.l.b16 %v1041
      %v1082 = vunpack.c.l.b16 %v1042
      %v1083 = vunpack.c.l.b16 %v1044
      %v1084 = vunpack.c.l.b16 %v1045
      %v1085 = vunpack.c.l.b16 %v1047
      %v1086 = vunpack.c.l.b16 %v1048
      %v1087 = vunpack.c.l.b16 %v1050
      %v1088 = vunpack.c.l.b16 %v1051
      %v1089 = vunpack.c.l.b16 %v1053
      %v1090 = vunpack.c.l.b16 %v1054
      %v1091 = vunpack.c.l.b16 %v1056
      %v1092 = vunpack.c.l.b16 %v1057
      %v1093 = vpack.c.b16 %v1078, %v1077
      %v1094 = vpack.c.b16 %v1080, %v1079
      %v1095 = vpack.c.b16 %v1082, %v1081
      %v1096 = vpack.c.b16 %v1084, %v1083
      %v1097 = vpack.c.b16 %v1086, %v1085
      %v1098 = vpack.c.b16 %v1088, %v1087
      %v1099 = vpack.c.b16 %v1090, %v1089
      %v1100 = vpack.c.b16 %v1092, %v1091
      %v1102 = vsel %vm508, %v1093, 0
      %v1105 = vsel %vm508, %v1094, 0
      %v1108 = vsel %vm508, %v1095, 0
      %v1111 = vsel %vm508, %v1096, 0
      %v1114 = vsel %vm508, %v1097, 0
      %v1117 = vsel %vm508, %v1098, 0
      %v1120 = vsel %vm508, %v1099, 0
      %v1123 = vsel %vm508, %v1100, 0
      %v1126 = vsel %vm533, %v1060, 0
      %1128 = vmatprep.subr.bf16.mxu0 0
      %1129 = vmatpush1.bf16.msra.mxu0 %v1126
      %1130 = vmatprep.subr.bf16.mxu0 0
      %1131 = vmatpush1.bf16.msra.mxu0 0
      %1132 = vmatprep.subr.bf16.mxu0 0
      %1133 = vmatpush1.bf16.msra.mxu0 0
      %1134 = vmatprep.subr.bf16.mxu0 0
      %1135 = vmatpush1.bf16.msra.mxu0 0
      %1136 = vmatprep.subr.bf16.mxu0 0
      %1137 = vmatpush1.bf16.msra.mxu0 0
      %1138 = vmatprep.subr.bf16.mxu0 0
      %1139 = vmatpush1.bf16.msra.mxu0 0
      %1140 = vmatprep.subr.bf16.mxu0 0
      %1141 = vmatpush1.bf16.msra.mxu0 0
      %1142 = vmatprep.subr.bf16.mxu0 0
      %1143 = vmatpush1.bf16.msra.mxu0 0
      %1144 = vmatprep.subr.bf16.mxu0 0
      %1145 = vmatpush1.bf16.msra.mxu0 0
      %1146 = vmatprep.subr.bf16.mxu0 0
      %1147 = vmatpush1.bf16.msra.mxu0 0
      %1148 = vmatprep.subr.bf16.mxu0 0
      %1149 = vmatpush1.bf16.msra.mxu0 0
      %1150 = vmatprep.subr.bf16.mxu0 0
      %1151 = vmatpush1.bf16.msra.mxu0 0
      %1152 = vmatprep.subr.bf16.mxu0 0
      %1153 = vmatpush1.bf16.msra.mxu0 0
      %1154 = vmatprep.subr.bf16.mxu0 0
      %1155 = vmatpush1.bf16.msra.mxu0 0
      %1156 = vmatprep.subr.bf16.mxu0 0
      %1157 = vmatpush1.bf16.msra.mxu0 0
      %1158 = vmatprep.subr.bf16.mxu0 0
      %1159 = vmatpush1.bf16.msra.mxu0 0
      %1160 = vmatprep.mubr.bf16.mxu0 0
      %1161 = vmatmul.mubr.bf16.gmra.mrb[0].mxu0 %v1102
      %v1162 = vpop.f32.mrb[0].mxu0
      %v1163 = vadd.f32 0.0, %v1162
      %v1164 = vpop.f32.mrb[0].mxu0
      %v1165 = vpop.f32.mrb[0].mxu0
      %v1166 = vadd.f32 0.0, %v1165
      %v1167 = vpop.f32.mrb[0].mxu0
      %1168 = vmatprep.mubr.bf16.mxu0 0
      %1169 = vmatmul.mubr.bf16.gmra.mrb[0].mxu0 %v1105
      %v1170 = vpop.f32.mrb[0].mxu0
      %v1171 = vadd.f32 0.0, %v1170
      %v1172 = vpop.f32.mrb[0].mxu0
      %v1173 = vpop.f32.mrb[0].mxu0
      %v1174 = vadd.f32 0.0, %v1173
      %v1175 = vpop.f32.mrb[0].mxu0
      %1176 = vmatprep.mubr.bf16.mxu0 0
      %1177 = vmatmul.mubr.bf16.gmra.mrb[0].mxu0 %v1108
      %v1178 = vpop.f32.mrb[0].mxu0
      %v1179 = vadd.f32 0.0, %v1178
      %v1180 = vpop.f32.mrb[0].mxu0
      %v1181 = vpop.f32.mrb[0].mxu0
      %v1182 = vadd.f32 0.0, %v1181
      %v1183 = vpop.f32.mrb[0].mxu0
      %1184 = vmatprep.mubr.bf16.mxu0 0
      %1185 = vmatmul.mubr.bf16.gmra.mrb[0].mxu0 %v1111
      %v1186 = vpop.f32.mrb[0].mxu0
      %v1187 = vadd.f32 0.0, %v1186
      %v1188 = vpop.f32.mrb[0].mxu0
      %v1189 = vpop.f32.mrb[0].mxu0
      %v1190 = vadd.f32 0.0, %v1189
      %v1191 = vpop.f32.mrb[0].mxu0
      %1192 = vmatprep.mubr.bf16.mxu0 0
      %1193 = vmatmul.mubr.bf16.gmra.mrb[0].mxu0 %v1114
      %v1194 = vpop.f32.mrb[0].mxu0
      %v1195 = vadd.f32 0.0, %v1194
      %v1196 = vpop.f32.mrb[0].mxu0
      %v1197 = vpop.f32.mrb[0].mxu0
      %v1198 = vadd.f32 0.0, %v1197
      %v1199 = vpop.f32.mrb[0].mxu0
      %1200 = vmatprep.mubr.bf16.mxu0 0
      %1201 = vmatmul.mubr.bf16.gmra.mrb[0].mxu0 %v1117
      %v1202 = vpop.f32.mrb[0].mxu0
      %v1203 = vadd.f32 0.0, %v1202
      %v1204 = vpop.f32.mrb[0].mxu0
      %v1205 = vpop.f32.mrb[0].mxu0
      %v1206 = vadd.f32 0.0, %v1205
      %v1207 = vpop.f32.mrb[0].mxu0
      %1208 = vmatprep.mubr.bf16.mxu0 0
      %1209 = vmatmul.mubr.bf16.gmra.mrb[0].mxu0 %v1120
      %v1210 = vpop.f32.mrb[0].mxu0
      %v1211 = vadd.f32 0.0, %v1210
      %v1212 = vpop.f32.mrb[0].mxu0
      %v1213 = vpop.f32.mrb[0].mxu0
      %v1214 = vadd.f32 0.0, %v1213
      %v1215 = vpop.f32.mrb[0].mxu0
      %1216 = vmatprep.mubr.bf16.mxu0 0
      %1217 = vmatmul.mubr.bf16.gmra.mrb[0].mxu0 %v1123
      %v1218 = vpop.f32.mrb[0].mxu0
      %v1219 = vadd.f32 0.0, %v1218
      %v1220 = vpop.f32.mrb[0].mxu0
      %v1221 = vpop.f32.mrb[0].mxu0
      %v1222 = vadd.f32 0.0, %v1221
      %v1223 = vpop.f32.mrb[0].mxu0
      %1224 = vdwg.mxu0
      %v1225 = vadd.f32 %v1015, %v1163
      %v1226 = vadd.f32 %v1016, %v1166
      %v1227 = vadd.f32 %v1017, %v1171
      %v1228 = vadd.f32 %v1018, %v1174
      %v1229 = vadd.f32 %v1019, %v1179
      %v1230 = vadd.f32 %v1020, %v1182
      %v1231 = vadd.f32 %v1021, %v1187
      %v1232 = vadd.f32 %v1022, %v1190
      %v1233 = vadd.f32 %v1023, %v1195
      %v1234 = vadd.f32 %v1024, %v1198
      %v1235 = vadd.f32 %v1025, %v1203
      %v1236 = vadd.f32 %v1026, %v1206
      %v1237 = vadd.f32 %v1027, %v1211
      %v1238 = vadd.f32 %v1028, %v1214
      %v1239 = vadd.f32 %v1029, %v1219
      %v1240 = vadd.f32 %v1030, %v1222
      %v1242 = vshrl.u32 %v1035, 16
      %v1244 = vrot.slane %v1242, 4
      %v1245 = vshll.u32 %v1035, 16
      %v1247 = vrot.slane %v1245, 5
      %v1248 = vor.u32 %v1244, %v1247
      %v1249 = vrot.slane %v1248, 4
      %v1251 = vshll.u32 %v1036, 16
      %v1253 = vrot.slane %v1251, 5
      %v1254 = vsel %vm289, %v1249, %v1253
      %v1255 = vshrl.u32 %v1036, 16
      %v1257 = vrot.slane %v1255, 4
      %v1258 = vor.u32 %v1257, %v1253
      %v1259 = vrot.slane %v1258, 4
      %v1261 = vshll.u32 %v1037, 16
      %v1263 = vrot.slane %v1261, 5
      %v1264 = vsel %vm289, %v1259, %v1263
      %v1266 = vshrl.u32 %v1038, 16
      %v1268 = vrot.slane %v1266, 4
      %v1269 = vshll.u32 %v1038, 16
      %v1271 = vrot.slane %v1269, 5
      %v1272 = vor.u32 %v1268, %v1271
      %v1273 = vrot.slane %v1272, 4
      %v1275 = vshll.u32 %v1039, 16
      %v1277 = vrot.slane %v1275, 5
      %v1278 = vsel %vm289, %v1273, %v1277
      %v1279 = vshrl.u32 %v1039, 16
      %v1281 = vrot.slane %v1279, 4
      %v1282 = vor.u32 %v1281, %v1277
      %v1283 = vrot.slane %v1282, 4
      %v1285 = vshll.u32 %v1040, 16
      %v1287 = vrot.slane %v1285, 5
      %v1288 = vsel %vm289, %v1283, %v1287
      %v1290 = vshrl.u32 %v1041, 16
      %v1292 = vrot.slane %v1290, 4
      %v1293 = vshll.u32 %v1041, 16
      %v1295 = vrot.slane %v1293, 5
      %v1296 = vor.u32 %v1292, %v1295
      %v1297 = vrot.slane %v1296, 4
      %v1299 = vshll.u32 %v1042, 16
      %v1301 = vrot.slane %v1299, 5
      %v1302 = vsel %vm289, %v1297, %v1301
      %v1303 = vshrl.u32 %v1042, 16
      %v1305 = vrot.slane %v1303, 4
      %v1306 = vor.u32 %v1305, %v1301
      %v1307 = vrot.slane %v1306, 4
      %v1309 = vshll.u32 %v1043, 16
      %v1311 = vrot.slane %v1309, 5
      %v1312 = vsel %vm289, %v1307, %v1311
      %v1314 = vshrl.u32 %v1044, 16
      %v1316 = vrot.slane %v1314, 4
      %v1317 = vshll.u32 %v1044, 16
      %v1319 = vrot.slane %v1317, 5
      %v1320 = vor.u32 %v1316, %v1319
      %v1321 = vrot.slane %v1320, 4
      %v1323 = vshll.u32 %v1045, 16
      %v1325 = vrot.slane %v1323, 5
      %v1326 = vsel %vm289, %v1321, %v1325
      %v1327 = vshrl.u32 %v1045, 16
      %v1329 = vrot.slane %v1327, 4
      %v1330 = vor.u32 %v1329, %v1325
      %v1331 = vrot.slane %v1330, 4
      %v1333 = vshll.u32 %v1046, 16
      %v1335 = vrot.slane %v1333, 5
      %v1336 = vsel %vm289, %v1331, %v1335
      %v1338 = vshrl.u32 %v1047, 16
      %v1340 = vrot.slane %v1338, 4
      %v1341 = vshll.u32 %v1047, 16
      %v1343 = vrot.slane %v1341, 5
      %v1344 = vor.u32 %v1340, %v1343
      %v1345 = vrot.slane %v1344, 4
      %v1347 = vshll.u32 %v1048, 16
      %v1349 = vrot.slane %v1347, 5
      %v1350 = vsel %vm289, %v1345, %v1349
      %v1351 = vshrl.u32 %v1048, 16
      %v1353 = vrot.slane %v1351, 4
      %v1354 = vor.u32 %v1353, %v1349
      %v1355 = vrot.slane %v1354, 4
      %v1357 = vshll.u32 %v1049, 16
      %v1359 = vrot.slane %v1357, 5
      %v1360 = vsel %vm289, %v1355, %v1359
      %v1362 = vshrl.u32 %v1050, 16
      %v1364 = vrot.slane %v1362, 4
      %v1365 = vshll.u32 %v1050, 16
      %v1367 = vrot.slane %v1365, 5
      %v1368 = vor.u32 %v1364, %v1367
      %v1369 = vrot.slane %v1368, 4
      %v1371 = vshll.u32 %v1051, 16
      %v1373 = vrot.slane %v1371, 5
      %v1374 = vsel %vm289, %v1369, %v1373
      %v1375 = vshrl.u32 %v1051, 16
      %v1377 = vrot.slane %v1375, 4
      %v1378 = vor.u32 %v1377, %v1373
      %v1379 = vrot.slane %v1378, 4
      %v1381 = vshll.u32 %v1052, 16
      %v1383 = vrot.slane %v1381, 5
      %v1384 = vsel %vm289, %v1379, %v1383
      %v1386 = vshrl.u32 %v1053, 16
      %v1388 = vrot.slane %v1386, 4
      %v1389 = vshll.u32 %v1053, 16
      %v1391 = vrot.slane %v1389, 5
      %v1392 = vor.u32 %v1388, %v1391
      %v1393 = vrot.slane %v1392, 4
      %v1395 = vshll.u32 %v1054, 16
      %v1397 = vrot.slane %v1395, 5
      %v1398 = vsel %vm289, %v1393, %v1397
      %v1399 = vshrl.u32 %v1054, 16
      %v1401 = vrot.slane %v1399, 4
      %v1402 = vor.u32 %v1401, %v1397
      %v1403 = vrot.slane %v1402, 4
      %v1405 = vshll.u32 %v1055, 16
      %v1407 = vrot.slane %v1405, 5
      %v1408 = vsel %vm289, %v1403, %v1407
      %v1410 = vshrl.u32 %v1056, 16
      %v1412 = vrot.slane %v1410, 4
      %v1413 = vshll.u32 %v1056, 16
      %v1415 = vrot.slane %v1413, 5
      %v1416 = vor.u32 %v1412, %v1415
      %v1417 = vrot.slane %v1416, 4
      %v1419 = vshll.u32 %v1057, 16
      %v1421 = vrot.slane %v1419, 5
      %v1422 = vsel %vm289, %v1417, %v1421
      %v1423 = vshrl.u32 %v1057, 16
      %v1425 = vrot.slane %v1423, 4
      %v1426 = vor.u32 %v1425, %v1421
      %v1427 = vrot.slane %v1426, 4
      %v1429 = vshll.u32 %v1058, 16
      %v1431 = vrot.slane %v1429, 5
      %v1432 = vsel %vm289, %v1427, %v1431
      %s1433 = scalar_lea.vmem %s231, 8
      %v1434 = vld [vmem:[%s1433] sm:$0x3]
      %v1435 = vunpack.c.l.b16 %v1254
      %v1436 = vunpack.c.l.b16 %v1264
      %v1437 = vunpack.c.l.b16 %v1278
      %v1438 = vunpack.c.l.b16 %v1288
      %v1439 = vunpack.c.l.b16 %v1302
      %v1440 = vunpack.c.l.b16 %v1312
      %v1441 = vunpack.c.l.b16 %v1326
      %v1442 = vunpack.c.l.b16 %v1336
      %v1443 = vunpack.c.l.b16 %v1350
      %v1444 = vunpack.c.l.b16 %v1360
      %v1445 = vunpack.c.l.b16 %v1374
      %v1446 = vunpack.c.l.b16 %v1384
      %v1447 = vunpack.c.l.b16 %v1398
      %v1448 = vunpack.c.l.b16 %v1408
      %v1449 = vunpack.c.l.b16 %v1422
      %v1450 = vunpack.c.l.b16 %v1432
      %v1451 = vpack.c.b16 %v1436, %v1435
      %v1452 = vpack.c.b16 %v1438, %v1437
      %v1453 = vpack.c.b16 %v1440, %v1439
      %v1454 = vpack.c.b16 %v1442, %v1441
      %v1455 = vpack.c.b16 %v1444, %v1443
      %v1456 = vpack.c.b16 %v1446, %v1445
      %v1457 = vpack.c.b16 %v1448, %v1447
      %v1458 = vpack.c.b16 %v1450, %v1449
      %v1460 = vsel %vm508, %v1451, 0
      %v1463 = vsel %vm508, %v1452, 0
      %v1466 = vsel %vm508, %v1453, 0
      %v1469 = vsel %vm508, %v1454, 0
      %v1472 = vsel %vm508, %v1455, 0
      %v1475 = vsel %vm508, %v1456, 0
      %v1478 = vsel %vm508, %v1457, 0
      %v1481 = vsel %vm508, %v1458, 0
      %v1484 = vsel %vm533, %v1434, 0
      %1486 = vmatprep.subr.bf16.mxu0 0
      %1487 = vmatpush1.bf16.msra.mxu0 %v1484
      %1488 = vmatprep.subr.bf16.mxu0 0
      %1489 = vmatpush1.bf16.msra.mxu0 0
      %1490 = vmatprep.subr.bf16.mxu0 0
      %1491 = vmatpush1.bf16.msra.mxu0 0
      %1492 = vmatprep.subr.bf16.mxu0 0
      %1493 = vmatpush1.bf16.msra.mxu0 0
      %1494 = vmatprep.subr.bf16.mxu0 0
      %1495 = vmatpush1.bf16.msra.mxu0 0
      %1496 = vmatprep.subr.bf16.mxu0 0
      %1497 = vmatpush1.bf16.msra.mxu0 0
      %1498 = vmatprep.subr.bf16.mxu0 0
      %1499 = vmatpush1.bf16.msra.mxu0 0
      %1500 = vmatprep.subr.bf16.mxu0 0
      %1501 = vmatpush1.bf16.msra.mxu0 0
      %1502 = vmatprep.subr.bf16.mxu0 0
      %1503 = vmatpush1.bf16.msra.mxu0 0
      %1504 = vmatprep.subr.bf16.mxu0 0
      %1505 = vmatpush1.bf16.msra.mxu0 0
      %1506 = vmatprep.subr.bf16.mxu0 0
      %1507 = vmatpush1.bf16.msra.mxu0 0
      %1508 = vmatprep.subr.bf16.mxu0 0
      %1509 = vmatpush1.bf16.msra.mxu0 0
      %1510 = vmatprep.subr.bf16.mxu0 0
      %1511 = vmatpush1.bf16.msra.mxu0 0
      %1512 = vmatprep.subr.bf16.mxu0 0
      %1513 = vmatpush1.bf16.msra.mxu0 0
      %1514 = vmatprep.subr.bf16.mxu0 0
      %1515 = vmatpush1.bf16.msra.mxu0 0
      %1516 = vmatprep.subr.bf16.mxu0 0
      %1517 = vmatpush1.bf16.msra.mxu0 0
      %1518 = vmatprep.mubr.bf16.mxu0 0
      %1519 = vmatmul.mubr.bf16.gmra.mrb[0].mxu0 %v1460
      %v1520 = vpop.f32.mrb[0].mxu0
      %v1521 = vadd.f32 0.0, %v1520
      %v1522 = vpop.f32.mrb[0].mxu0
      %v1523 = vpop.f32.mrb[0].mxu0
      %v1524 = vadd.f32 0.0, %v1523
      %v1525 = vpop.f32.mrb[0].mxu0
      %1526 = vmatprep.mubr.bf16.mxu0 0
      %1527 = vmatmul.mubr.bf16.gmra.mrb[0].mxu0 %v1463
      %v1528 = vpop.f32.mrb[0].mxu0
      %v1529 = vadd.f32 0.0, %v1528
      %v1530 = vpop.f32.mrb[0].mxu0
      %v1531 = vpop.f32.mrb[0].mxu0
      %v1532 = vadd.f32 0.0, %v1531
      %v1533 = vpop.f32.mrb[0].mxu0
      %1534 = vmatprep.mubr.bf16.mxu0 0
      %1535 = vmatmul.mubr.bf16.gmra.mrb[0].mxu0 %v1466
      %v1536 = vpop.f32.mrb[0].mxu0
      %v1537 = vadd.f32 0.0, %v1536
      %v1538 = vpop.f32.mrb[0].mxu0
      %v1539 = vpop.f32.mrb[0].mxu0
      %v1540 = vadd.f32 0.0, %v1539
      %v1541 = vpop.f32.mrb[0].mxu0
      %1542 = vmatprep.mubr.bf16.mxu0 0
      %1543 = vmatmul.mubr.bf16.gmra.mrb[0].mxu0 %v1469
      %v1544 = vpop.f32.mrb[0].mxu0
      %v1545 = vadd.f32 0.0, %v1544
      %v1546 = vpop.f32.mrb[0].mxu0
      %v1547 = vpop.f32.mrb[0].mxu0
      %v1548 = vadd.f32 0.0, %v1547
      %v1549 = vpop.f32.mrb[0].mxu0
      %1550 = vmatprep.mubr.bf16.mxu0 0
      %1551 = vmatmul.mubr.bf16.gmra.mrb[0].mxu0 %v1472
      %v1552 = vpop.f32.mrb[0].mxu0
      %v1553 = vadd.f32 0.0, %v1552
      %v1554 = vpop.f32.mrb[0].mxu0
      %v1555 = vpop.f32.mrb[0].mxu0
      %v1556 = vadd.f32 0.0, %v1555
      %v1557 = vpop.f32.mrb[0].mxu0
      %1558 = vmatprep.mubr.bf16.mxu0 0
      %1559 = vmatmul.mubr.bf16.gmra.mrb[0].mxu0 %v1475
      %v1560 = vpop.f32.mrb[0].mxu0
      %v1561 = vadd.f32 0.0, %v1560
      %v1562 = vpop.f32.mrb[0].mxu0
      %v1563 = vpop.f32.mrb[0].mxu0
      %v1564 = vadd.f32 0.0, %v1563
      %v1565 = vpop.f32.mrb[0].mxu0
      %1566 = vmatprep.mubr.bf16.mxu0 0
      %1567 = vmatmul.mubr.bf16.gmra.mrb[0].mxu0 %v1478
      %v1568 = vpop.f32.mrb[0].mxu0
      %v1569 = vadd.f32 0.0, %v1568
      %v1570 = vpop.f32.mrb[0].mxu0
      %v1571 = vpop.f32.mrb[0].mxu0
      %v1572 = vadd.f32 0.0, %v1571
      %v1573 = vpop.f32.mrb[0].mxu0
      %1574 = vmatprep.mubr.bf16.mxu0 0
      %1575 = vmatmul.mubr.bf16.gmra.mrb[0].mxu0 %v1481
      %v1576 = vpop.f32.mrb[0].mxu0
      %v1577 = vadd.f32 0.0, %v1576
      %v1578 = vpop.f32.mrb[0].mxu0
      %v1579 = vpop.f32.mrb[0].mxu0
      %v1580 = vadd.f32 0.0, %v1579
      %v1581 = vpop.f32.mrb[0].mxu0
      %1582 = vdwg.mxu0
      %v1583 = vadd.f32 %v1225, %v1521
      %v1584 = vadd.f32 %v1226, %v1524
      %v1585 = vadd.f32 %v1227, %v1529
      %v1586 = vadd.f32 %v1228, %v1532
      %v1587 = vadd.f32 %v1229, %v1537
      %v1588 = vadd.f32 %v1230, %v1540
      %v1589 = vadd.f32 %v1231, %v1545
      %v1590 = vadd.f32 %v1232, %v1548
      %v1591 = vadd.f32 %v1233, %v1553
      %v1592 = vadd.f32 %v1234, %v1556
      %v1593 = vadd.f32 %v1235, %v1561
      %v1594 = vadd.f32 %v1236, %v1564
      %v1595 = vadd.f32 %v1237, %v1569
      %v1596 = vadd.f32 %v1238, %v1572
      %v1597 = vadd.f32 %v1239, %v1577
      %v1598 = vadd.f32 %v1240, %v1580
      %v1607 = vrot.slane %v1035, 5
      %v1608 = vrot.slane %v1607, 4
      %v1609 = vrot.slane %v1036, 5
      %v1610 = vsel %vm808, %v1608, %v1609
      %v1611 = vrot.slane %v1609, 4
      %v1612 = vrot.slane %v1037, 5
      %v1613 = vsel %vm808, %v1611, %v1612
      %v1614 = vrot.slane %v1038, 5
      %v1615 = vrot.slane %v1614, 4
      %v1616 = vrot.slane %v1039, 5
      %v1617 = vsel %vm808, %v1615, %v1616
      %v1618 = vrot.slane %v1616, 4
      %v1619 = vrot.slane %v1040, 5
      %v1620 = vsel %vm808, %v1618, %v1619
      %v1621 = vrot.slane %v1041, 5
      %v1622 = vrot.slane %v1621, 4
      %v1623 = vrot.slane %v1042, 5
      %v1624 = vsel %vm808, %v1622, %v1623
      %v1625 = vrot.slane %v1623, 4
      %v1626 = vrot.slane %v1043, 5
      %v1627 = vsel %vm808, %v1625, %v1626
      %v1628 = vrot.slane %v1044, 5
      %v1629 = vrot.slane %v1628, 4
      %v1630 = vrot.slane %v1045, 5
      %v1631 = vsel %vm808, %v1629, %v1630
      %v1632 = vrot.slane %v1630, 4
      %v1633 = vrot.slane %v1046, 5
      %v1634 = vsel %vm808, %v1632, %v1633
      %v1635 = vrot.slane %v1047, 5
      %v1636 = vrot.slane %v1635, 4
      %v1637 = vrot.slane %v1048, 5
      %v1638 = vsel %vm808, %v1636, %v1637
      %v1639 = vrot.slane %v1637, 4
      %v1640 = vrot.slane %v1049, 5
      %v1641 = vsel %vm808, %v1639, %v1640
      %v1642 = vrot.slane %v1050, 5
      %v1643 = vrot.slane %v1642, 4
      %v1644 = vrot.slane %v1051, 5
      %v1645 = vsel %vm808, %v1643, %v1644
      %v1646 = vrot.slane %v1644, 4
      %v1647 = vrot.slane %v1052, 5
      %v1648 = vsel %vm808, %v1646, %v1647
      %v1649 = vrot.slane %v1053, 5
      %v1650 = vrot.slane %v1649, 4
      %v1651 = vrot.slane %v1054, 5
      %v1652 = vsel %vm808, %v1650, %v1651
      %v1653 = vrot.slane %v1651, 4
      %v1654 = vrot.slane %v1055, 5
      %v1655 = vsel %vm808, %v1653, %v1654
      %v1656 = vrot.slane %v1056, 5
      %v1657 = vrot.slane %v1656, 4
      %v1658 = vrot.slane %v1057, 5
      %v1659 = vsel %vm808, %v1657, %v1658
      %v1660 = vrot.slane %v1658, 4
      %v1661 = vrot.slane %v1058, 5
      %v1662 = vsel %vm808, %v1660, %v1661
      %s1663 = scalar_lea.vmem %s231, 10
      %v1664 = vld [vmem:[%s1663] sm:$0x3]
      %v1665 = vunpack.c.l.b16 %v1610
      %v1666 = vunpack.c.l.b16 %v1613
      %v1667 = vunpack.c.l.b16 %v1617
      %v1668 = vunpack.c.l.b16 %v1620
      %v1669 = vunpack.c.l.b16 %v1624
      %v1670 = vunpack.c.l.b16 %v1627
      %v1671 = vunpack.c.l.b16 %v1631
      %v1672 = vunpack.c.l.b16 %v1634
      %v1673 = vunpack.c.l.b16 %v1638
      %v1674 = vunpack.c.l.b16 %v1641
      %v1675 = vunpack.c.l.b16 %v1645
      %v1676 = vunpack.c.l.b16 %v1648
      %v1677 = vunpack.c.l.b16 %v1652
      %v1678 = vunpack.c.l.b16 %v1655
      %v1679 = vunpack.c.l.b16 %v1659
      %v1680 = vunpack.c.l.b16 %v1662
      %v1681 = vpack.c.b16 %v1666, %v1665
      %v1682 = vpack.c.b16 %v1668, %v1667
      %v1683 = vpack.c.b16 %v1670, %v1669
      %v1684 = vpack.c.b16 %v1672, %v1671
      %v1685 = vpack.c.b16 %v1674, %v1673
      %v1686 = vpack.c.b16 %v1676, %v1675
      %v1687 = vpack.c.b16 %v1678, %v1677
      %v1688 = vpack.c.b16 %v1680, %v1679
      %v1690 = vsel %vm508, %v1681, 0
      %v1693 = vsel %vm508, %v1682, 0
      %v1696 = vsel %vm508, %v1683, 0
      %v1699 = vsel %vm508, %v1684, 0
      %v1702 = vsel %vm508, %v1685, 0
      %v1705 = vsel %vm508, %v1686, 0
      %v1708 = vsel %vm508, %v1687, 0
      %v1711 = vsel %vm508, %v1688, 0
      %v1714 = vsel %vm533, %v1664, 0
      %1716 = vmatprep.subr.bf16.mxu0 0
      %1717 = vmatpush1.bf16.msra.mxu0 %v1714
      %1718 = vmatprep.subr.bf16.mxu0 0
      %1719 = vmatpush1.bf16.msra.mxu0 0
      %1720 = vmatprep.subr.bf16.mxu0 0
      %1721 = vmatpush1.bf16.msra.mxu0 0
      %1722 = vmatprep.subr.bf16.mxu0 0
      %1723 = vmatpush1.bf16.msra.mxu0 0
      %1724 = vmatprep.subr.bf16.mxu0 0
      %1725 = vmatpush1.bf16.msra.mxu0 0
      %1726 = vmatprep.subr.bf16.mxu0 0
      %1727 = vmatpush1.bf16.msra.mxu0 0
      %1728 = vmatprep.subr.bf16.mxu0 0
      %1729 = vmatpush1.bf16.msra.mxu0 0
      %1730 = vmatprep.subr.bf16.mxu0 0
      %1731 = vmatpush1.bf16.msra.mxu0 0
      %1732 = vmatprep.subr.bf16.mxu0 0
      %1733 = vmatpush1.bf16.msra.mxu0 0
      %1734 = vmatprep.subr.bf16.mxu0 0
      %1735 = vmatpush1.bf16.msra.mxu0 0
      %1736 = vmatprep.subr.bf16.mxu0 0
      %1737 = vmatpush1.bf16.msra.mxu0 0
      %1738 = vmatprep.subr.bf16.mxu0 0
      %1739 = vmatpush1.bf16.msra.mxu0 0
      %1740 = vmatprep.subr.bf16.mxu0 0
      %1741 = vmatpush1.bf16.msra.mxu0 0
      %1742 = vmatprep.subr.bf16.mxu0 0
      %1743 = vmatpush1.bf16.msra.mxu0 0
      %1744 = vmatprep.subr.bf16.mxu0 0
      %1745 = vmatpush1.bf16.msra.mxu0 0
      %1746 = vmatprep.subr.bf16.mxu0 0
      %1747 = vmatpush1.bf16.msra.mxu0 0
      %1748 = vmatprep.mubr.bf16.mxu0 0
      %1749 = vmatmul.mubr.bf16.gmra.mrb[0].mxu0 %v1690
      %v1750 = vpop.f32.mrb[0].mxu0
      %v1751 = vadd.f32 0.0, %v1750
      %v1752 = vpop.f32.mrb[0].mxu0
      %v1753 = vpop.f32.mrb[0].mxu0
      %v1754 = vadd.f32 0.0, %v1753
      %v1755 = vpop.f32.mrb[0].mxu0
      %1756 = vmatprep.mubr.bf16.mxu0 0
      %1757 = vmatmul.mubr.bf16.gmra.mrb[0].mxu0 %v1693
      %v1758 = vpop.f32.mrb[0].mxu0
      %v1759 = vadd.f32 0.0, %v1758
      %v1760 = vpop.f32.mrb[0].mxu0
      %v1761 = vpop.f32.mrb[0].mxu0
      %v1762 = vadd.f32 0.0, %v1761
      %v1763 = vpop.f32.mrb[0].mxu0
      %1764 = vmatprep.mubr.bf16.mxu0 0
      %1765 = vmatmul.mubr.bf16.gmra.mrb[0].mxu0 %v1696
      %v1766 = vpop.f32.mrb[0].mxu0
      %v1767 = vadd.f32 0.0, %v1766
      %v1768 = vpop.f32.mrb[0].mxu0
      %v1769 = vpop.f32.mrb[0].mxu0
      %v1770 = vadd.f32 0.0, %v1769
      %v1771 = vpop.f32.mrb[0].mxu0
      %1772 = vmatprep.mubr.bf16.mxu0 0
      %1773 = vmatmul.mubr.bf16.gmra.mrb[0].mxu0 %v1699
      %v1774 = vpop.f32.mrb[0].mxu0
      %v1775 = vadd.f32 0.0, %v1774
      %v1776 = vpop.f32.mrb[0].mxu0
      %v1777 = vpop.f32.mrb[0].mxu0
      %v1778 = vadd.f32 0.0, %v1777
      %v1779 = vpop.f32.mrb[0].mxu0
      %1780 = vmatprep.mubr.bf16.mxu0 0
      %1781 = vmatmul.mubr.bf16.gmra.mrb[0].mxu0 %v1702
      %v1782 = vpop.f32.mrb[0].mxu0
      %v1783 = vadd.f32 0.0, %v1782
      %v1784 = vpop.f32.mrb[0].mxu0
      %v1785 = vpop.f32.mrb[0].mxu0
      %v1786 = vadd.f32 0.0, %v1785
      %v1787 = vpop.f32.mrb[0].mxu0
      %1788 = vmatprep.mubr.bf16.mxu0 0
      %1789 = vmatmul.mubr.bf16.gmra.mrb[0].mxu0 %v1705
      %v1790 = vpop.f32.mrb[0].mxu0
      %v1791 = vadd.f32 0.0, %v1790
      %v1792 = vpop.f32.mrb[0].mxu0
      %v1793 = vpop.f32.mrb[0].mxu0
      %v1794 = vadd.f32 0.0, %v1793
      %v1795 = vpop.f32.mrb[0].mxu0
      %1796 = vmatprep.mubr.bf16.mxu0 0
      %1797 = vmatmul.mubr.bf16.gmra.mrb[0].mxu0 %v1708
      %v1798 = vpop.f32.mrb[0].mxu0
      %v1799 = vadd.f32 0.0, %v1798
      %v1800 = vpop.f32.mrb[0].mxu0
      %v1801 = vpop.f32.mrb[0].mxu0
      %v1802 = vadd.f32 0.0, %v1801
      %v1803 = vpop.f32.mrb[0].mxu0
      %1804 = vmatprep.mubr.bf16.mxu0 0
      %1805 = vmatmul.mubr.bf16.gmra.mrb[0].mxu0 %v1711
      %v1806 = vpop.f32.mrb[0].mxu0
      %v1807 = vadd.f32 0.0, %v1806
      %v1808 = vpop.f32.mrb[0].mxu0
      %v1809 = vpop.f32.mrb[0].mxu0
      %v1810 = vadd.f32 0.0, %v1809
      %v1811 = vpop.f32.mrb[0].mxu0
      %1812 = vdwg.mxu0
      %v1813 = vadd.f32 %v1583, %v1751
      %v1814 = vadd.f32 %v1584, %v1754
      %v1815 = vadd.f32 %v1585, %v1759
      %v1816 = vadd.f32 %v1586, %v1762
      %v1817 = vadd.f32 %v1587, %v1767
      %v1818 = vadd.f32 %v1588, %v1770
      %v1819 = vadd.f32 %v1589, %v1775
      %v1820 = vadd.f32 %v1590, %v1778
      %v1821 = vadd.f32 %v1591, %v1783
      %v1822 = vadd.f32 %v1592, %v1786
      %v1823 = vadd.f32 %v1593, %v1791
      %v1824 = vadd.f32 %v1594, %v1794
      %v1825 = vadd.f32 %v1595, %v1799
      %v1826 = vadd.f32 %v1596, %v1802
      %v1827 = vadd.f32 %v1597, %v1807
      %v1828 = vadd.f32 %v1598, %v1810
      %s1829 = sadd.s32 %s258, 2
      %s1830 = smul.u32 %s1829, 3
      %s1831 = smul.addr %s1830, 4
      %s1832 = scalar_lea.vmem %s227, %s1831
      %v1833 = vld [vmem:[%s1832] sm:$0xf]
      %v1834 = vld [vmem:[%s1832 + $0x4] sm:$0xf]
      %v1835 = vld [vmem:[%s1832 + $0x8] sm:$0x1]
      %v1836 = vld [vmem:[%s1832 + $0xc] sm:$0xf]
      %v1837 = vld [vmem:[%s1832 + $0x10] sm:$0xf]
      %v1838 = vld [vmem:[%s1832 + $0x14] sm:$0x1]
      %v1839 = vld [vmem:[%s1832 + $0x18] sm:$0xf]
      %v1840 = vld [vmem:[%s1832 + $0x1c] sm:$0xf]
      %v1841 = vld [vmem:[%s1832 + $0x20] sm:$0x1]
      %v1842 = vld [vmem:[%s1832 + $0x24] sm:$0xf]
      %v1843 = vld [vmem:[%s1832 + $0x28] sm:$0xf]
      %v1844 = vld [vmem:[%s1832 + $0x2c] sm:$0x1]
      %v1845 = vld [vmem:[%s1832 + $0x30] sm:$0xf]
      %v1846 = vld [vmem:[%s1832 + $0x34] sm:$0xf]
      %v1847 = vld [vmem:[%s1832 + $0x38] sm:$0x1]
      %v1848 = vld [vmem:[%s1832 + $0x3c] sm:$0xf]
      %v1849 = vld [vmem:[%s1832 + $0x40] sm:$0xf]
      %v1850 = vld [vmem:[%s1832 + $0x44] sm:$0x1]
      %v1851 = vld [vmem:[%s1832 + $0x48] sm:$0xf]
      %v1852 = vld [vmem:[%s1832 + $0x4c] sm:$0xf]
      %v1853 = vld [vmem:[%s1832 + $0x50] sm:$0x1]
      %v1854 = vld [vmem:[%s1832 + $0x54] sm:$0xf]
      %v1855 = vld [vmem:[%s1832 + $0x58] sm:$0xf]
      %v1856 = vld [vmem:[%s1832 + $0x5c] sm:$0x1]
      %s1857 = scalar_lea.vmem %s231, 12
      %v1858 = vld [vmem:[%s1857] sm:$0x3]
      %v1875 = vunpack.c.l.b16 %v1833
      %v1876 = vunpack.c.l.b16 %v1834
      %v1877 = vunpack.c.l.b16 %v1836
      %v1878 = vunpack.c.l.b16 %v1837
      %v1879 = vunpack.c.l.b16 %v1839
      %v1880 = vunpack.c.l.b16 %v1840
      %v1881 = vunpack.c.l.b16 %v1842
      %v1882 = vunpack.c.l.b16 %v1843
      %v1883 = vunpack.c.l.b16 %v1845
      %v1884 = vunpack.c.l.b16 %v1846
      %v1885 = vunpack.c.l.b16 %v1848
      %v1886 = vunpack.c.l.b16 %v1849
      %v1887 = vunpack.c.l.b16 %v1851
      %v1888 = vunpack.c.l.b16 %v1852
      %v1889 = vunpack.c.l.b16 %v1854
      %v1890 = vunpack.c.l.b16 %v1855
      %v1891 = vpack.c.b16 %v1876, %v1875
      %v1892 = vpack.c.b16 %v1878, %v1877
      %v1893 = vpack.c.b16 %v1880, %v1879
      %v1894 = vpack.c.b16 %v1882, %v1881
      %v1895 = vpack.c.b16 %v1884, %v1883
      %v1896 = vpack.c.b16 %v1886, %v1885
      %v1897 = vpack.c.b16 %v1888, %v1887
      %v1898 = vpack.c.b16 %v1890, %v1889
      %v1900 = vsel %vm508, %v1891, 0
      %v1903 = vsel %vm508, %v1892, 0
      %v1906 = vsel %vm508, %v1893, 0
      %v1909 = vsel %vm508, %v1894, 0
      %v1912 = vsel %vm508, %v1895, 0
      %v1915 = vsel %vm508, %v1896, 0
      %v1918 = vsel %vm508, %v1897, 0
      %v1921 = vsel %vm508, %v1898, 0
      %v1924 = vsel %vm533, %v1858, 0
      %1926 = vmatprep.subr.bf16.mxu0 0
      %1927 = vmatpush1.bf16.msra.mxu0 %v1924
      %1928 = vmatprep.subr.bf16.mxu0 0
      %1929 = vmatpush1.bf16.msra.mxu0 0
      %1930 = vmatprep.subr.bf16.mxu0 0
      %1931 = vmatpush1.bf16.msra.mxu0 0
      %1932 = vmatprep.subr.bf16.mxu0 0
      %1933 = vmatpush1.bf16.msra.mxu0 0
      %1934 = vmatprep.subr.bf16.mxu0 0
      %1935 = vmatpush1.bf16.msra.mxu0 0
      %1936 = vmatprep.subr.bf16.mxu0 0
      %1937 = vmatpush1.bf16.msra.mxu0 0
      %1938 = vmatprep.subr.bf16.mxu0 0
      %1939 = vmatpush1.bf16.msra.mxu0 0
      %1940 = vmatprep.subr.bf16.mxu0 0
      %1941 = vmatpush1.bf16.msra.mxu0 0
      %1942 = vmatprep.subr.bf16.mxu0 0
      %1943 = vmatpush1.bf16.msra.mxu0 0
      %1944 = vmatprep.subr.bf16.mxu0 0
      %1945 = vmatpush1.bf16.msra.mxu0 0
      %1946 = vmatprep.subr.bf16.mxu0 0
      %1947 = vmatpush1.bf16.msra.mxu0 0
      %1948 = vmatprep.subr.bf16.mxu0 0
      %1949 = vmatpush1.bf16.msra.mxu0 0
      %1950 = vmatprep.subr.bf16.mxu0 0
      %1951 = vmatpush1.bf16.msra.mxu0 0
      %1952 = vmatprep.subr.bf16.mxu0 0
      %1953 = vmatpush1.bf16.msra.mxu0 0
      %1954 = vmatprep.subr.bf16.mxu0 0
      %1955 = vmatpush1.bf16.msra.mxu0 0
      %1956 = vmatprep.subr.bf16.mxu0 0
      %1957 = vmatpush1.bf16.msra.mxu0 0
      %1958 = vmatprep.mubr.bf16.mxu0 0
      %1959 = vmatmul.mubr.bf16.gmra.mrb[0].mxu0 %v1900
      %v1960 = vpop.f32.mrb[0].mxu0
      %v1961 = vadd.f32 0.0, %v1960
      %v1962 = vpop.f32.mrb[0].mxu0
      %v1963 = vpop.f32.mrb[0].mxu0
      %v1964 = vadd.f32 0.0, %v1963
      %v1965 = vpop.f32.mrb[0].mxu0
      %1966 = vmatprep.mubr.bf16.mxu0 0
      %1967 = vmatmul.mubr.bf16.gmra.mrb[0].mxu0 %v1903
      %v1968 = vpop.f32.mrb[0].mxu0
      %v1969 = vadd.f32 0.0, %v1968
      %v1970 = vpop.f32.mrb[0].mxu0
      %v1971 = vpop.f32.mrb[0].mxu0
      %v1972 = vadd.f32 0.0, %v1971
      %v1973 = vpop.f32.mrb[0].mxu0
      %1974 = vmatprep.mubr.bf16.mxu0 0
      %1975 = vmatmul.mubr.bf16.gmra.mrb[0].mxu0 %v1906
      %v1976 = vpop.f32.mrb[0].mxu0
      %v1977 = vadd.f32 0.0, %v1976
      %v1978 = vpop.f32.mrb[0].mxu0
      %v1979 = vpop.f32.mrb[0].mxu0
      %v1980 = vadd.f32 0.0, %v1979
      %v1981 = vpop.f32.mrb[0].mxu0
      %1982 = vmatprep.mubr.bf16.mxu0 0
      %1983 = vmatmul.mubr.bf16.gmra.mrb[0].mxu0 %v1909
      %v1984 = vpop.f32.mrb[0].mxu0
      %v1985 = vadd.f32 0.0, %v1984
      %v1986 = vpop.f32.mrb[0].mxu0
      %v1987 = vpop.f32.mrb[0].mxu0
      %v1988 = vadd.f32 0.0, %v1987
      %v1989 = vpop.f32.mrb[0].mxu0
      %1990 = vmatprep.mubr.bf16.mxu0 0
      %1991 = vmatmul.mubr.bf16.gmra.mrb[0].mxu0 %v1912
      %v1992 = vpop.f32.mrb[0].mxu0
      %v1993 = vadd.f32 0.0, %v1992
      %v1994 = vpop.f32.mrb[0].mxu0
      %v1995 = vpop.f32.mrb[0].mxu0
      %v1996 = vadd.f32 0.0, %v1995
      %v1997 = vpop.f32.mrb[0].mxu0
      %1998 = vmatprep.mubr.bf16.mxu0 0
      %1999 = vmatmul.mubr.bf16.gmra.mrb[0].mxu0 %v1915
      %v2000 = vpop.f32.mrb[0].mxu0
      %v2001 = vadd.f32 0.0, %v2000
      %v2002 = vpop.f32.mrb[0].mxu0
      %v2003 = vpop.f32.mrb[0].mxu0
      %v2004 = vadd.f32 0.0, %v2003
      %v2005 = vpop.f32.mrb[0].mxu0
      %2006 = vmatprep.mubr.bf16.mxu0 0
      %2007 = vmatmul.mubr.bf16.gmra.mrb[0].mxu0 %v1918
      %v2008 = vpop.f32.mrb[0].mxu0
      %v2009 = vadd.f32 0.0, %v2008
      %v2010 = vpop.f32.mrb[0].mxu0
      %v2011 = vpop.f32.mrb[0].mxu0
      %v2012 = vadd.f32 0.0, %v2011
      %v2013 = vpop.f32.mrb[0].mxu0
      %2014 = vmatprep.mubr.bf16.mxu0 0
      %2015 = vmatmul.mubr.bf16.gmra.mrb[0].mxu0 %v1921
      %v2016 = vpop.f32.mrb[0].mxu0
      %v2017 = vadd.f32 0.0, %v2016
      %v2018 = vpop.f32.mrb[0].mxu0
      %v2019 = vpop.f32.mrb[0].mxu0
      %v2020 = vadd.f32 0.0, %v2019
      %v2021 = vpop.f32.mrb[0].mxu0
      %2022 = vdwg.mxu0
      %v2023 = vadd.f32 %v1813, %v1961
      %v2024 = vadd.f32 %v1814, %v1964
      %v2025 = vadd.f32 %v1815, %v1969
      %v2026 = vadd.f32 %v1816, %v1972
      %v2027 = vadd.f32 %v1817, %v1977
      %v2028 = vadd.f32 %v1818, %v1980
      %v2029 = vadd.f32 %v1819, %v1985
      %v2030 = vadd.f32 %v1820, %v1988
      %v2031 = vadd.f32 %v1821, %v1993
      %v2032 = vadd.f32 %v1822, %v1996
      %v2033 = vadd.f32 %v1823, %v2001
      %v2034 = vadd.f32 %v1824, %v2004
      %v2035 = vadd.f32 %v1825, %v2009
      %v2036 = vadd.f32 %v1826, %v2012
      %v2037 = vadd.f32 %v1827, %v2017
      %v2038 = vadd.f32 %v1828, %v2020
      %v2040 = vshrl.u32 %v1833, 16
      %v2042 = vrot.slane %v2040, 4
      %v2043 = vshll.u32 %v1833, 16
      %v2045 = vrot.slane %v2043, 5
      %v2046 = vor.u32 %v2042, %v2045
      %v2047 = vrot.slane %v2046, 4
      %v2049 = vshll.u32 %v1834, 16
      %v2051 = vrot.slane %v2049, 5
      %v2052 = vsel %vm289, %v2047, %v2051
      %v2053 = vshrl.u32 %v1834, 16
      %v2055 = vrot.slane %v2053, 4
      %v2056 = vor.u32 %v2055, %v2051
      %v2057 = vrot.slane %v2056, 4
      %v2059 = vshll.u32 %v1835, 16
      %v2061 = vrot.slane %v2059, 5
      %v2062 = vsel %vm289, %v2057, %v2061
      %v2064 = vshrl.u32 %v1836, 16
      %v2066 = vrot.slane %v2064, 4
      %v2067 = vshll.u32 %v1836, 16
      %v2069 = vrot.slane %v2067, 5
      %v2070 = vor.u32 %v2066, %v2069
      %v2071 = vrot.slane %v2070, 4
      %v2073 = vshll.u32 %v1837, 16
      %v2075 = vrot.slane %v2073, 5
      %v2076 = vsel %vm289, %v2071, %v2075
      %v2077 = vshrl.u32 %v1837, 16
      %v2079 = vrot.slane %v2077, 4
      %v2080 = vor.u32 %v2079, %v2075
      %v2081 = vrot.slane %v2080, 4
      %v2083 = vshll.u32 %v1838, 16
      %v2085 = vrot.slane %v2083, 5
      %v2086 = vsel %vm289, %v2081, %v2085
      %v2088 = vshrl.u32 %v1839, 16
      %v2090 = vrot.slane %v2088, 4
      %v2091 = vshll.u32 %v1839, 16
      %v2093 = vrot.slane %v2091, 5
      %v2094 = vor.u32 %v2090, %v2093
      %v2095 = vrot.slane %v2094, 4
      %v2097 = vshll.u32 %v1840, 16
      %v2099 = vrot.slane %v2097, 5
      %v2100 = vsel %vm289, %v2095, %v2099
      %v2101 = vshrl.u32 %v1840, 16
      %v2103 = vrot.slane %v2101, 4
      %v2104 = vor.u32 %v2103, %v2099
      %v2105 = vrot.slane %v2104, 4
      %v2107 = vshll.u32 %v1841, 16
      %v2109 = vrot.slane %v2107, 5
      %v2110 = vsel %vm289, %v2105, %v2109
      %v2112 = vshrl.u32 %v1842, 16
      %v2114 = vrot.slane %v2112, 4
      %v2115 = vshll.u32 %v1842, 16
      %v2117 = vrot.slane %v2115, 5
      %v2118 = vor.u32 %v2114, %v2117
      %v2119 = vrot.slane %v2118, 4
      %v2121 = vshll.u32 %v1843, 16
      %v2123 = vrot.slane %v2121, 5
      %v2124 = vsel %vm289, %v2119, %v2123
      %v2125 = vshrl.u32 %v1843, 16
      %v2127 = vrot.slane %v2125, 4
      %v2128 = vor.u32 %v2127, %v2123
      %v2129 = vrot.slane %v2128, 4
      %v2131 = vshll.u32 %v1844, 16
      %v2133 = vrot.slane %v2131, 5
      %v2134 = vsel %vm289, %v2129, %v2133
      %v2136 = vshrl.u32 %v1845, 16
      %v2138 = vrot.slane %v2136, 4
      %v2139 = vshll.u32 %v1845, 16
      %v2141 = vrot.slane %v2139, 5
      %v2142 = vor.u32 %v2138, %v2141
      %v2143 = vrot.slane %v2142, 4
      %v2145 = vshll.u32 %v1846, 16
      %v2147 = vrot.slane %v2145, 5
      %v2148 = vsel %vm289, %v2143, %v2147
      %v2149 = vshrl.u32 %v1846, 16
      %v2151 = vrot.slane %v2149, 4
      %v2152 = vor.u32 %v2151, %v2147
      %v2153 = vrot.slane %v2152, 4
      %v2155 = vshll.u32 %v1847, 16
      %v2157 = vrot.slane %v2155, 5
      %v2158 = vsel %vm289, %v2153, %v2157
      %v2160 = vshrl.u32 %v1848, 16
      %v2162 = vrot.slane %v2160, 4
      %v2163 = vshll.u32 %v1848, 16
      %v2165 = vrot.slane %v2163, 5
      %v2166 = vor.u32 %v2162, %v2165
      %v2167 = vrot.slane %v2166, 4
      %v2169 = vshll.u32 %v1849, 16
      %v2171 = vrot.slane %v2169, 5
      %v2172 = vsel %vm289, %v2167, %v2171
      %v2173 = vshrl.u32 %v1849, 16
      %v2175 = vrot.slane %v2173, 4
      %v2176 = vor.u32 %v2175, %v2171
      %v2177 = vrot.slane %v2176, 4
      %v2179 = vshll.u32 %v1850, 16
      %v2181 = vrot.slane %v2179, 5
      %v2182 = vsel %vm289, %v2177, %v2181
      %v2184 = vshrl.u32 %v1851, 16
      %v2186 = vrot.slane %v2184, 4
      %v2187 = vshll.u32 %v1851, 16
      %v2189 = vrot.slane %v2187, 5
      %v2190 = vor.u32 %v2186, %v2189
      %v2191 = vrot.slane %v2190, 4
      %v2193 = vshll.u32 %v1852, 16
      %v2195 = vrot.slane %v2193, 5
      %v2196 = vsel %vm289, %v2191, %v2195
      %v2197 = vshrl.u32 %v1852, 16
      %v2199 = vrot.slane %v2197, 4
      %v2200 = vor.u32 %v2199, %v2195
      %v2201 = vrot.slane %v2200, 4
      %v2203 = vshll.u32 %v1853, 16
      %v2205 = vrot.slane %v2203, 5
      %v2206 = vsel %vm289, %v2201, %v2205
      %v2208 = vshrl.u32 %v1854, 16
      %v2210 = vrot.slane %v2208, 4
      %v2211 = vshll.u32 %v1854, 16
      %v2213 = vrot.slane %v2211, 5
      %v2214 = vor.u32 %v2210, %v2213
      %v2215 = vrot.slane %v2214, 4
      %v2217 = vshll.u32 %v1855, 16
      %v2219 = vrot.slane %v2217, 5
      %v2220 = vsel %vm289, %v2215, %v2219
      %v2221 = vshrl.u32 %v1855, 16
      %v2223 = vrot.slane %v2221, 4
      %v2224 = vor.u32 %v2223, %v2219
      %v2225 = vrot.slane %v2224, 4
      %v2227 = vshll.u32 %v1856, 16
      %v2229 = vrot.slane %v2227, 5
      %v2230 = vsel %vm289, %v2225, %v2229
      %s2231 = scalar_lea.vmem %s231, 14
      %v2232 = vld [vmem:[%s2231] sm:$0x3]
      %v2233 = vunpack.c.l.b16 %v2052
      %v2234 = vunpack.c.l.b16 %v2062
      %v2235 = vunpack.c.l.b16 %v2076
      %v2236 = vunpack.c.l.b16 %v2086
      %v2237 = vunpack.c.l.b16 %v2100
      %v2238 = vunpack.c.l.b16 %v2110
      %v2239 = vunpack.c.l.b16 %v2124
      %v2240 = vunpack.c.l.b16 %v2134
      %v2241 = vunpack.c.l.b16 %v2148
      %v2242 = vunpack.c.l.b16 %v2158
      %v2243 = vunpack.c.l.b16 %v2172
      %v2244 = vunpack.c.l.b16 %v2182
      %v2245 = vunpack.c.l.b16 %v2196
      %v2246 = vunpack.c.l.b16 %v2206
      %v2247 = vunpack.c.l.b16 %v2220
      %v2248 = vunpack.c.l.b16 %v2230
      %v2249 = vpack.c.b16 %v2234, %v2233
      %v2250 = vpack.c.b16 %v2236, %v2235
      %v2251 = vpack.c.b16 %v2238, %v2237
      %v2252 = vpack.c.b16 %v2240, %v2239
      %v2253 = vpack.c.b16 %v2242, %v2241
      %v2254 = vpack.c.b16 %v2244, %v2243
      %v2255 = vpack.c.b16 %v2246, %v2245
      %v2256 = vpack.c.b16 %v2248, %v2247
      %v2258 = vsel %vm508, %v2249, 0
      %v2261 = vsel %vm508, %v2250, 0
      %v2264 = vsel %vm508, %v2251, 0
      %v2267 = vsel %vm508, %v2252, 0
      %v2270 = vsel %vm508, %v2253, 0
      %v2273 = vsel %vm508, %v2254, 0
      %v2276 = vsel %vm508, %v2255, 0
      %v2279 = vsel %vm508, %v2256, 0
      %v2282 = vsel %vm533, %v2232, 0
      %2284 = vmatprep.subr.bf16.mxu0 0
      %2285 = vmatpush1.bf16.msra.mxu0 %v2282
      %2286 = vmatprep.subr.bf16.mxu0 0
      %2287 = vmatpush1.bf16.msra.mxu0 0
      %2288 = vmatprep.subr.bf16.mxu0 0
      %2289 = vmatpush1.bf16.msra.mxu0 0
      %2290 = vmatprep.subr.bf16.mxu0 0
      %2291 = vmatpush1.bf16.msra.mxu0 0
      %2292 = vmatprep.subr.bf16.mxu0 0
      %2293 = vmatpush1.bf16.msra.mxu0 0
      %2294 = vmatprep.subr.bf16.mxu0 0
      %2295 = vmatpush1.bf16.msra.mxu0 0
      %2296 = vmatprep.subr.bf16.mxu0 0
      %2297 = vmatpush1.bf16.msra.mxu0 0
      %2298 = vmatprep.subr.bf16.mxu0 0
      %2299 = vmatpush1.bf16.msra.mxu0 0
      %2300 = vmatprep.subr.bf16.mxu0 0
      %2301 = vmatpush1.bf16.msra.mxu0 0
      %2302 = vmatprep.subr.bf16.mxu0 0
      %2303 = vmatpush1.bf16.msra.mxu0 0
      %2304 = vmatprep.subr.bf16.mxu0 0
      %2305 = vmatpush1.bf16.msra.mxu0 0
      %2306 = vmatprep.subr.bf16.mxu0 0
      %2307 = vmatpush1.bf16.msra.mxu0 0
      %2308 = vmatprep.subr.bf16.mxu0 0
      %2309 = vmatpush1.bf16.msra.mxu0 0
      %2310 = vmatprep.subr.bf16.mxu0 0
      %2311 = vmatpush1.bf16.msra.mxu0 0
      %2312 = vmatprep.subr.bf16.mxu0 0
      %2313 = vmatpush1.bf16.msra.mxu0 0
      %2314 = vmatprep.subr.bf16.mxu0 0
      %2315 = vmatpush1.bf16.msra.mxu0 0
      %2316 = vmatprep.mubr.bf16.mxu0 0
      %2317 = vmatmul.mubr.bf16.gmra.mrb[0].mxu0 %v2258
      %v2318 = vpop.f32.mrb[0].mxu0
      %v2319 = vadd.f32 0.0, %v2318
      %v2320 = vpop.f32.mrb[0].mxu0
      %v2321 = vpop.f32.mrb[0].mxu0
      %v2322 = vadd.f32 0.0, %v2321
      %v2323 = vpop.f32.mrb[0].mxu0
      %2324 = vmatprep.mubr.bf16.mxu0 0
      %2325 = vmatmul.mubr.bf16.gmra.mrb[0].mxu0 %v2261
      %v2326 = vpop.f32.mrb[0].mxu0
      %v2327 = vadd.f32 0.0, %v2326
      %v2328 = vpop.f32.mrb[0].mxu0
      %v2329 = vpop.f32.mrb[0].mxu0
      %v2330 = vadd.f32 0.0, %v2329
      %v2331 = vpop.f32.mrb[0].mxu0
      %2332 = vmatprep.mubr.bf16.mxu0 0
      %2333 = vmatmul.mubr.bf16.gmra.mrb[0].mxu0 %v2264
      %v2334 = vpop.f32.mrb[0].mxu0
      %v2335 = vadd.f32 0.0, %v2334
      %v2336 = vpop.f32.mrb[0].mxu0
      %v2337 = vpop.f32.mrb[0].mxu0
      %v2338 = vadd.f32 0.0, %v2337
      %v2339 = vpop.f32.mrb[0].mxu0
      %2340 = vmatprep.mubr.bf16.mxu0 0
      %2341 = vmatmul.mubr.bf16.gmra.mrb[0].mxu0 %v2267
      %v2342 = vpop.f32.mrb[0].mxu0
      %v2343 = vadd.f32 0.0, %v2342
      %v2344 = vpop.f32.mrb[0].mxu0
      %v2345 = vpop.f32.mrb[0].mxu0
      %v2346 = vadd.f32 0.0, %v2345
      %v2347 = vpop.f32.mrb[0].mxu0
      %2348 = vmatprep.mubr.bf16.mxu0 0
      %2349 = vmatmul.mubr.bf16.gmra.mrb[0].mxu0 %v2270
      %v2350 = vpop.f32.mrb[0].mxu0
      %v2351 = vadd.f32 0.0, %v2350
      %v2352 = vpop.f32.mrb[0].mxu0
      %v2353 = vpop.f32.mrb[0].mxu0
      %v2354 = vadd.f32 0.0, %v2353
      %v2355 = vpop.f32.mrb[0].mxu0
      %2356 = vmatprep.mubr.bf16.mxu0 0
      %2357 = vmatmul.mubr.bf16.gmra.mrb[0].mxu0 %v2273
      %v2358 = vpop.f32.mrb[0].mxu0
      %v2359 = vadd.f32 0.0, %v2358
      %v2360 = vpop.f32.mrb[0].mxu0
      %v2361 = vpop.f32.mrb[0].mxu0
      %v2362 = vadd.f32 0.0, %v2361
      %v2363 = vpop.f32.mrb[0].mxu0
      %2364 = vmatprep.mubr.bf16.mxu0 0
      %2365 = vmatmul.mubr.bf16.gmra.mrb[0].mxu0 %v2276
      %v2366 = vpop.f32.mrb[0].mxu0
      %v2367 = vadd.f32 0.0, %v2366
      %v2368 = vpop.f32.mrb[0].mxu0
      %v2369 = vpop.f32.mrb[0].mxu0
      %v2370 = vadd.f32 0.0, %v2369
      %v2371 = vpop.f32.mrb[0].mxu0
      %2372 = vmatprep.mubr.bf16.mxu0 0
      %2373 = vmatmul.mubr.bf16.gmra.mrb[0].mxu0 %v2279
      %v2374 = vpop.f32.mrb[0].mxu0
      %v2375 = vadd.f32 0.0, %v2374
      %v2376 = vpop.f32.mrb[0].mxu0
      %v2377 = vpop.f32.mrb[0].mxu0
      %v2378 = vadd.f32 0.0, %v2377
      %v2379 = vpop.f32.mrb[0].mxu0
      %2380 = vdwg.mxu0
      %v2381 = vadd.f32 %v2023, %v2319
      %v2382 = vadd.f32 %v2024, %v2322
      %v2383 = vadd.f32 %v2025, %v2327
      %v2384 = vadd.f32 %v2026, %v2330
      %v2385 = vadd.f32 %v2027, %v2335
      %v2386 = vadd.f32 %v2028, %v2338
      %v2387 = vadd.f32 %v2029, %v2343
      %v2388 = vadd.f32 %v2030, %v2346
      %v2389 = vadd.f32 %v2031, %v2351
      %v2390 = vadd.f32 %v2032, %v2354
      %v2391 = vadd.f32 %v2033, %v2359
      %v2392 = vadd.f32 %v2034, %v2362
      %v2393 = vadd.f32 %v2035, %v2367
      %v2394 = vadd.f32 %v2036, %v2370
      %v2395 = vadd.f32 %v2037, %v2375
      %v2396 = vadd.f32 %v2038, %v2378
      %v2405 = vrot.slane %v1833, 5
      %v2406 = vrot.slane %v2405, 4
      %v2407 = vrot.slane %v1834, 5
      %v2408 = vsel %vm808, %v2406, %v2407
      %v2409 = vrot.slane %v2407, 4
      %v2410 = vrot.slane %v1835, 5
      %v2411 = vsel %vm808, %v2409, %v2410
      %v2412 = vrot.slane %v1836, 5
      %v2413 = vrot.slane %v2412, 4
      %v2414 = vrot.slane %v1837, 5
      %v2415 = vsel %vm808, %v2413, %v2414
      %v2416 = vrot.slane %v2414, 4
      %v2417 = vrot.slane %v1838, 5
      %v2418 = vsel %vm808, %v2416, %v2417
      %v2419 = vrot.slane %v1839, 5
      %v2420 = vrot.slane %v2419, 4
      %v2421 = vrot.slane %v1840, 5
      %v2422 = vsel %vm808, %v2420, %v2421
      %v2423 = vrot.slane %v2421, 4
      %v2424 = vrot.slane %v1841, 5
      %v2425 = vsel %vm808, %v2423, %v2424
      %v2426 = vrot.slane %v1842, 5
      %v2427 = vrot.slane %v2426, 4
      %v2428 = vrot.slane %v1843, 5
      %v2429 = vsel %vm808, %v2427, %v2428
      %v2430 = vrot.slane %v2428, 4
      %v2431 = vrot.slane %v1844, 5
      %v2432 = vsel %vm808, %v2430, %v2431
      %v2433 = vrot.slane %v1845, 5
      %v2434 = vrot.slane %v2433, 4
      %v2435 = vrot.slane %v1846, 5
      %v2436 = vsel %vm808, %v2434, %v2435
      %v2437 = vrot.slane %v2435, 4
      %v2438 = vrot.slane %v1847, 5
      %v2439 = vsel %vm808, %v2437, %v2438
      %v2440 = vrot.slane %v1848, 5
      %v2441 = vrot.slane %v2440, 4
      %v2442 = vrot.slane %v1849, 5
      %v2443 = vsel %vm808, %v2441, %v2442
      %v2444 = vrot.slane %v2442, 4
      %v2445 = vrot.slane %v1850, 5
      %v2446 = vsel %vm808, %v2444, %v2445
      %v2447 = vrot.slane %v1851, 5
      %v2448 = vrot.slane %v2447, 4
      %v2449 = vrot.slane %v1852, 5
      %v2450 = vsel %vm808, %v2448, %v2449
      %v2451 = vrot.slane %v2449, 4
      %v2452 = vrot.slane %v1853, 5
      %v2453 = vsel %vm808, %v2451, %v2452
      %v2454 = vrot.slane %v1854, 5
      %v2455 = vrot.slane %v2454, 4
      %v2456 = vrot.slane %v1855, 5
      %v2457 = vsel %vm808, %v2455, %v2456
      %v2458 = vrot.slane %v2456, 4
      %v2459 = vrot.slane %v1856, 5
      %v2460 = vsel %vm808, %v2458, %v2459
      %s2461 = scalar_lea.vmem %s231, 16
      %v2462 = vld [vmem:[%s2461] sm:$0x3]
      %v2463 = vunpack.c.l.b16 %v2408
      %v2464 = vunpack.c.l.b16 %v2411
      %v2465 = vunpack.c.l.b16 %v2415
      %v2466 = vunpack.c.l.b16 %v2418
      %v2467 = vunpack.c.l.b16 %v2422
      %v2468 = vunpack.c.l.b16 %v2425
      %v2469 = vunpack.c.l.b16 %v2429
      %v2470 = vunpack.c.l.b16 %v2432
      %v2471 = vunpack.c.l.b16 %v2436
      %v2472 = vunpack.c.l.b16 %v2439
      %v2473 = vunpack.c.l.b16 %v2443
      %v2474 = vunpack.c.l.b16 %v2446
      %v2475 = vunpack.c.l.b16 %v2450
      %v2476 = vunpack.c.l.b16 %v2453
      %v2477 = vunpack.c.l.b16 %v2457
      %v2478 = vunpack.c.l.b16 %v2460
      %v2479 = vpack.c.b16 %v2464, %v2463
      %v2480 = vpack.c.b16 %v2466, %v2465
      %v2481 = vpack.c.b16 %v2468, %v2467
      %v2482 = vpack.c.b16 %v2470, %v2469
      %v2483 = vpack.c.b16 %v2472, %v2471
      %v2484 = vpack.c.b16 %v2474, %v2473
      %v2485 = vpack.c.b16 %v2476, %v2475
      %v2486 = vpack.c.b16 %v2478, %v2477
      %v2488 = vsel %vm508, %v2479, 0
      %v2491 = vsel %vm508, %v2480, 0
      %v2494 = vsel %vm508, %v2481, 0
      %v2497 = vsel %vm508, %v2482, 0
      %v2500 = vsel %vm508, %v2483, 0
      %v2503 = vsel %vm508, %v2484, 0
      %v2506 = vsel %vm508, %v2485, 0
      %v2509 = vsel %vm508, %v2486, 0
      %v2512 = vsel %vm533, %v2462, 0
      %2514 = vmatprep.subr.bf16.mxu0 0
      %2515 = vmatpush1.bf16.msra.mxu0 %v2512
      %2516 = vmatprep.subr.bf16.mxu0 0
      %2517 = vmatpush1.bf16.msra.mxu0 0
      %2518 = vmatprep.subr.bf16.mxu0 0
      %2519 = vmatpush1.bf16.msra.mxu0 0
      %2520 = vmatprep.subr.bf16.mxu0 0
      %2521 = vmatpush1.bf16.msra.mxu0 0
      %2522 = vmatprep.subr.bf16.mxu0 0
      %2523 = vmatpush1.bf16.msra.mxu0 0
      %2524 = vmatprep.subr.bf16.mxu0 0
      %2525 = vmatpush1.bf16.msra.mxu0 0
      %2526 = vmatprep.subr.bf16.mxu0 0
      %2527 = vmatpush1.bf16.msra.mxu0 0
      %2528 = vmatprep.subr.bf16.mxu0 0
      %2529 = vmatpush1.bf16.msra.mxu0 0
      %2530 = vmatprep.subr.bf16.mxu0 0
      %2531 = vmatpush1.bf16.msra.mxu0 0
      %2532 = vmatprep.subr.bf16.mxu0 0
      %2533 = vmatpush1.bf16.msra.mxu0 0
      %2534 = vmatprep.subr.bf16.mxu0 0
      %2535 = vmatpush1.bf16.msra.mxu0 0
      %2536 = vmatprep.subr.bf16.mxu0 0
      %2537 = vmatpush1.bf16.msra.mxu0 0
      %2538 = vmatprep.subr.bf16.mxu0 0
      %2539 = vmatpush1.bf16.msra.mxu0 0
      %2540 = vmatprep.subr.bf16.mxu0 0
      %2541 = vmatpush1.bf16.msra.mxu0 0
      %2542 = vmatprep.subr.bf16.mxu0 0
      %2543 = vmatpush1.bf16.msra.mxu0 0
      %2544 = vmatprep.subr.bf16.mxu0 0
      %2545 = vmatpush1.bf16.msra.mxu0 0
      %2546 = vmatprep.mubr.bf16.mxu0 0
      %2547 = vmatmul.mubr.bf16.gmra.mrb[0].mxu0 %v2488
      %v2548 = vpop.f32.mrb[0].mxu0
      %v2549 = vadd.f32 0.0, %v2548
      %v2550 = vpop.f32.mrb[0].mxu0
      %v2551 = vpop.f32.mrb[0].mxu0
      %v2552 = vadd.f32 0.0, %v2551
      %v2553 = vpop.f32.mrb[0].mxu0
      %2554 = vmatprep.mubr.bf16.mxu0 0
      %2555 = vmatmul.mubr.bf16.gmra.mrb[0].mxu0 %v2491
      %v2556 = vpop.f32.mrb[0].mxu0
      %v2557 = vadd.f32 0.0, %v2556
      %v2558 = vpop.f32.mrb[0].mxu0
      %v2559 = vpop.f32.mrb[0].mxu0
      %v2560 = vadd.f32 0.0, %v2559
      %v2561 = vpop.f32.mrb[0].mxu0
      %2562 = vmatprep.mubr.bf16.mxu0 0
      %2563 = vmatmul.mubr.bf16.gmra.mrb[0].mxu0 %v2494
      %v2564 = vpop.f32.mrb[0].mxu0
      %v2565 = vadd.f32 0.0, %v2564
      %v2566 = vpop.f32.mrb[0].mxu0
      %v2567 = vpop.f32.mrb[0].mxu0
      %v2568 = vadd.f32 0.0, %v2567
      %v2569 = vpop.f32.mrb[0].mxu0
      %2570 = vmatprep.mubr.bf16.mxu0 0
      %2571 = vmatmul.mubr.bf16.gmra.mrb[0].mxu0 %v2497
      %v2572 = vpop.f32.mrb[0].mxu0
      %v2573 = vadd.f32 0.0, %v2572
      %v2574 = vpop.f32.mrb[0].mxu0
      %v2575 = vpop.f32.mrb[0].mxu0
      %v2576 = vadd.f32 0.0, %v2575
      %v2577 = vpop.f32.mrb[0].mxu0
      %2578 = vmatprep.mubr.bf16.mxu0 0
      %2579 = vmatmul.mubr.bf16.gmra.mrb[0].mxu0 %v2500
      %v2580 = vpop.f32.mrb[0].mxu0
      %v2581 = vadd.f32 0.0, %v2580
      %v2582 = vpop.f32.mrb[0].mxu0
      %v2583 = vpop.f32.mrb[0].mxu0
      %v2584 = vadd.f32 0.0, %v2583
      %v2585 = vpop.f32.mrb[0].mxu0
      %2586 = vmatprep.mubr.bf16.mxu0 0
      %2587 = vmatmul.mubr.bf16.gmra.mrb[0].mxu0 %v2503
      %v2588 = vpop.f32.mrb[0].mxu0
      %v2589 = vadd.f32 0.0, %v2588
      %v2590 = vpop.f32.mrb[0].mxu0
      %v2591 = vpop.f32.mrb[0].mxu0
      %v2592 = vadd.f32 0.0, %v2591
      %v2593 = vpop.f32.mrb[0].mxu0
      %2594 = vmatprep.mubr.bf16.mxu0 0
      %2595 = vmatmul.mubr.bf16.gmra.mrb[0].mxu0 %v2506
      %v2596 = vpop.f32.mrb[0].mxu0
      %v2597 = vadd.f32 0.0, %v2596
      %v2598 = vpop.f32.mrb[0].mxu0
      %v2599 = vpop.f32.mrb[0].mxu0
      %v2600 = vadd.f32 0.0, %v2599
      %v2601 = vpop.f32.mrb[0].mxu0
      %2602 = vmatprep.mubr.bf16.mxu0 0
      %2603 = vmatmul.mubr.bf16.gmra.mrb[0].mxu0 %v2509
      %v2604 = vpop.f32.mrb[0].mxu0
      %v2605 = vadd.f32 0.0, %v2604
      %v2606 = vpop.f32.mrb[0].mxu0
      %v2607 = vpop.f32.mrb[0].mxu0
      %v2608 = vadd.f32 0.0, %v2607
      %v2609 = vpop.f32.mrb[0].mxu0
      %2610 = vdwg.mxu0
      %v2611 = vadd.f32 %v2381, %v2549
      %v2612 = vadd.f32 %v2382, %v2552
      %v2613 = vadd.f32 %v2383, %v2557
      %v2614 = vadd.f32 %v2384, %v2560
      %v2615 = vadd.f32 %v2385, %v2565
      %v2616 = vadd.f32 %v2386, %v2568
      %v2617 = vadd.f32 %v2387, %v2573
      %v2618 = vadd.f32 %v2388, %v2576
      %v2619 = vadd.f32 %v2389, %v2581
      %v2620 = vadd.f32 %v2390, %v2584
      %v2621 = vadd.f32 %v2391, %v2589
      %v2622 = vadd.f32 %v2392, %v2592
      %v2623 = vadd.f32 %v2393, %v2597
      %v2624 = vadd.f32 %v2394, %v2600
      %v2625 = vadd.f32 %v2395, %v2605
      %v2626 = vadd.f32 %v2396, %v2608
      %v2627 = vpack.c.bf16 %v2612, %v2611
      %v2628 = vpack.c.bf16 %v2614, %v2613
      %v2629 = vpack.c.bf16 %v2616, %v2615
      %v2630 = vpack.c.bf16 %v2618, %v2617
      %v2631 = vpack.c.bf16 %v2620, %v2619
      %v2632 = vpack.c.bf16 %v2622, %v2621
      %v2633 = vpack.c.bf16 %v2624, %v2623
      %v2634 = vpack.c.bf16 %v2626, %v2625
      %v2643 = vunpack.c.l.b16 %v2627
      %v2644 = vunpack.c.h.b16 %v2627
      %v2645 = vunpack.c.l.b16 %v2628
      %v2646 = vunpack.c.h.b16 %v2628
      %v2647 = vunpack.c.l.b16 %v2629
      %v2648 = vunpack.c.h.b16 %v2629
      %v2649 = vunpack.c.l.b16 %v2630
      %v2650 = vunpack.c.h.b16 %v2630
      %v2651 = vunpack.c.l.b16 %v2631
      %v2652 = vunpack.c.h.b16 %v2631
      %v2653 = vunpack.c.l.b16 %v2632
      %v2654 = vunpack.c.h.b16 %v2632
      %v2655 = vunpack.c.l.b16 %v2633
      %v2656 = vunpack.c.h.b16 %v2633
      %v2657 = vunpack.c.l.b16 %v2634
      %v2658 = vunpack.c.h.b16 %v2634
      %v2659 = vpack.c.b16 %v2643, %v2643
      %v2660 = vpack.c.b16 %v2644, %v2644
      %v2661 = vpack.c.b16 %v2645, %v2645
      %v2662 = vpack.c.b16 %v2646, %v2646
      %v2663 = vpack.c.b16 %v2647, %v2647
      %v2664 = vpack.c.b16 %v2648, %v2648
      %v2665 = vpack.c.b16 %v2649, %v2649
      %v2666 = vpack.c.b16 %v2650, %v2650
      %v2667 = vpack.c.b16 %v2651, %v2651
      %v2668 = vpack.c.b16 %v2652, %v2652
      %v2669 = vpack.c.b16 %v2653, %v2653
      %v2670 = vpack.c.b16 %v2654, %v2654
      %v2671 = vpack.c.b16 %v2655, %v2655
      %v2672 = vpack.c.b16 %v2656, %v2656
      %v2673 = vpack.c.b16 %v2657, %v2657
      %v2674 = vpack.c.b16 %v2658, %v2658
      %2691 = vst [vmem:[%s244] sm:$0xf] %v2659
      %2692 = vst [vmem:[%s244 + $0x4] sm:$0xf] %v2660
      %2693 = vst [vmem:[%s244 + $0x8] sm:$0xf] %v2661
      %2694 = vst [vmem:[%s244 + $0xc] sm:$0xf] %v2662
      %2695 = vst [vmem:[%s244 + $0x10] sm:$0xf] %v2663
      %2696 = vst [vmem:[%s244 + $0x14] sm:$0xf] %v2664
      %2697 = vst [vmem:[%s244 + $0x18] sm:$0xf] %v2665
      %2698 = vst [vmem:[%s244 + $0x1c] sm:$0xf] %v2666
      %2699 = vst [vmem:[%s244 + $0x20] sm:$0xf] %v2667
      %2700 = vst [vmem:[%s244 + $0x24] sm:$0xf] %v2668
      %2701 = vst [vmem:[%s244 + $0x28] sm:$0xf] %v2669
      %2702 = vst [vmem:[%s244 + $0x2c] sm:$0xf] %v2670
      %2703 = vst [vmem:[%s244 + $0x30] sm:$0xf] %v2671
      %2704 = vst [vmem:[%s244 + $0x34] sm:$0xf] %v2672
      %2705 = vst [vmem:[%s244 + $0x38] sm:$0xf] %v2673
      %2706 = vst [vmem:[%s244 + $0x3c] sm:$0xf] %v2674
      %v2707 = vadd.f32 %v2611, %v2612
      %v2708 = vadd.f32 %v2707, %v2613
      %v2709 = vadd.f32 %v2708, %v2614
      %v2710 = vadd.f32 %v2709, %v2615
      %v2711 = vadd.f32 %v2710, %v2616
      %v2712 = vadd.f32 %v2711, %v2617
      %v2713 = vadd.f32 %v2712, %v2618
      %v2714 = vadd.f32 %v2713, %v2619
      %v2715 = vadd.f32 %v2714, %v2620
      %v2716 = vadd.f32 %v2715, %v2621
      %v2717 = vadd.f32 %v2716, %v2622
      %v2718 = vadd.f32 %v2717, %v2623
      %v2719 = vadd.f32 %v2718, %v2624
      %v2720 = vadd.f32 %v2719, %v2625
      %v2721 = vadd.f32 %v2720, %v2626
      %v2722 = vrot.slane %v2721, 4
      %v2723 = vadd.f32 %v2721, %v2722
      %v2724 = vrot.slane %v2723, 2
      %v2725 = vadd.f32 %v2723, %v2724
      %v2726 = vrot.slane %v2725, 1
      %v2727 = vadd.f32 %v2725, %v2726
      %2728 = vst [vmem:[%s256] sm:$0x1] %v2727
      %v2729 = vmul.f32 %v2611, %v2611
      %v2730 = vmul.f32 %v2612, %v2612
      %v2731 = vmul.f32 %v2613, %v2613
      %v2732 = vmul.f32 %v2614, %v2614
      %v2733 = vmul.f32 %v2615, %v2615
      %v2734 = vmul.f32 %v2616, %v2616
      %v2735 = vmul.f32 %v2617, %v2617
      %v2736 = vmul.f32 %v2618, %v2618
      %v2737 = vmul.f32 %v2619, %v2619
      %v2738 = vmul.f32 %v2620, %v2620
      %v2739 = vmul.f32 %v2621, %v2621
      %v2740 = vmul.f32 %v2622, %v2622
      %v2741 = vmul.f32 %v2623, %v2623
      %v2742 = vmul.f32 %v2624, %v2624
      %v2743 = vmul.f32 %v2625, %v2625
      %v2744 = vmul.f32 %v2626, %v2626
      %v2745 = vadd.f32 %v2729, %v2730
      %v2746 = vadd.f32 %v2745, %v2731
      %v2747 = vadd.f32 %v2746, %v2732
      %v2748 = vadd.f32 %v2747, %v2733
      %v2749 = vadd.f32 %v2748, %v2734
      %v2750 = vadd.f32 %v2749, %v2735
      %v2751 = vadd.f32 %v2750, %v2736
      %v2752 = vadd.f32 %v2751, %v2737
      %v2753 = vadd.f32 %v2752, %v2738
      %v2754 = vadd.f32 %v2753, %v2739
      %v2755 = vadd.f32 %v2754, %v2740
      %v2756 = vadd.f32 %v2755, %v2741
      %v2757 = vadd.f32 %v2756, %v2742
      %v2758 = vadd.f32 %v2757, %v2743
      %v2759 = vadd.f32 %v2758, %v2744
      %v2760 = vrot.slane %v2759, 4
      %v2761 = vadd.f32 %v2759, %v2760
      %v2762 = vrot.slane %v2761, 2
      %v2763 = vadd.f32 %v2761, %v2762
      %v2764 = vrot.slane %v2763, 1
      %v2765 = vadd.f32 %v2763, %v2764
      %2766 = vst [vmem:[%s256 + $0x1] sm:$0x1] %v2765
      %s2767 = smul.u32 8, %s21
      %p2768 = scmp.lt.s32.totalorder %s20, 1
      %s2769 = scalar_select %p2768, %s20, 1
      %p2770 = scmp.lt.s32.totalorder %s2767, 15
      %s2771 = scalar_select %p2770, %s2767, 15
      %p2772 = scmp.lt.s32.totalorder %s22, 0
      %s2773 = scalar_select %p2772, %s22, 0
      %s2774 = smul.addr %s2771, 2
      %s2775 = sadd.s32 %s2773, %s2774
      %s2776 = smul.addr %s2769, 32
      %s2777 = sadd.s32 %s2775, %s2776
      %s2778 = smul.addr %s2777, 4
      %s2779 = scalar_lea.vmem %s2, %s2778
      %p2780 = scmp.lt.s32.totalorder %s20, 1
      %s2781 = scalar_select %p2780, %s20, 1
      %p2782 = scmp.lt.s32.totalorder %s21, 1
      %s2783 = scalar_select %p2782, %s21, 1
      %p2784 = scmp.lt.s32.totalorder %s22, 0
      %s2785 = scalar_select %p2784, %s22, 0
      %s2786 = sadd.s32 %s2785, %s2783
      %s2787 = smul.addr %s2781, 2
      %s2788 = sadd.s32 %s2786, %s2787
      %s2789 = smul.addr %s2788, 2
      %s2790 = scalar_lea.vmem %s3, %s2789
      // Predicated region
      $region29: #{conv_bn_relu.2} parent=27 // pred_check
        %p2791 = pneg %p108
      $region30: #{conv_bn_relu.2} parent=27 // pred_check_branch
        %2793 = sbr.rel (%p2791) target = $region32
      $region31: #{conv_bn_relu.2} parent=27 // pred_region
        %s2794 = smul.u32 8, %s21
      $region32: #{conv_bn_relu.2} parent=27 // pred_fallthru
        _
      // Predicated region
      $region33: #{conv_bn_relu.2} parent=27 // pred_check
        %p2795 = pneg %p138
      $region34: #{conv_bn_relu.2} parent=27 // pred_check_branch
        %2797 = sbr.rel (%p2795) target = $region36
      $region35: #{conv_bn_relu.2} parent=27 // pred_region
        _
      $region36: #{conv_bn_relu.2} parent=27 // pred_fallthru
        _
    $region28: #{conv_bn_relu.2} parent=5 // pred_fallthru
      _
    %p2798 = scmp.le.s32.totalorder 2, %s10
    // Predicated region
    $region37: #{conv_bn_relu.2} parent=5 // pred_check
      %p2799 = pneg %p2798
    $region38: #{conv_bn_relu.2} parent=5 // pred_check_branch
      %2801 = sbr.rel (%p2799) target = $region40
    $region39: #{conv_bn_relu.2} parent=5 // pred_region
      %s2802 = ssub.s32 %s10, 2
      // Predicated region
      $region41: #{conv_bn_relu.2} parent=39 // pred_check
        %p2803 = pneg %p114
      $region42: #{conv_bn_relu.2} parent=39 // pred_check_branch
        %2805 = sbr.rel (%p2803) target = $region44
      $region43: #{conv_bn_relu.2} parent=39 // pred_region
        %s2806 = smul.u32 8, %s24
        %p2807 = scmp.lt.s32.totalorder %s23, 1
        %s2808 = scalar_select %p2807, %s23, 1
        %p2809 = scmp.lt.s32.totalorder %s2806, 15
        %s2810 = scalar_select %p2809, %s2806, 15
        %p2811 = scmp.lt.s32.totalorder %s25, 0
        %s2812 = scalar_select %p2811, %s25, 0
        %s2813 = smul.addr %s2810, 2
        %s2814 = sadd.s32 %s2812, %s2813
        %s2815 = smul.addr %s2808, 32
        %s2816 = sadd.s32 %s2814, %s2815
        %s2817 = smul.addr %s2816, 4
        %s2818 = scalar_lea.vmem %s2, %s2817
      $region44: #{conv_bn_relu.2} parent=39 // pred_fallthru
        _
      // Predicated region
      $region45: #{conv_bn_relu.2} parent=39 // pred_check
        %p2819 = pneg %p144
      $region46: #{conv_bn_relu.2} parent=39 // pred_check_branch
        %2821 = sbr.rel (%p2819) target = $region48
      $region47: #{conv_bn_relu.2} parent=39 // pred_region
        %p2822 = scmp.lt.s32.totalorder %s23, 1
        %s2823 = scalar_select %p2822, %s23, 1
        %p2824 = scmp.lt.s32.totalorder %s24, 1
        %s2825 = scalar_select %p2824, %s24, 1
        %p2826 = scmp.lt.s32.totalorder %s25, 0
        %s2827 = scalar_select %p2826, %s25, 0
        %s2828 = sadd.s32 %s2827, %s2825
        %s2829 = smul.addr %s2823, 2
        %s2830 = sadd.s32 %s2828, %s2829
        %s2831 = smul.addr %s2830, 2
        %s2832 = scalar_lea.vmem %s3, %s2831
      $region48: #{conv_bn_relu.2} parent=39 // pred_fallthru
        _
    $region40: #{conv_bn_relu.2} parent=5 // pred_fallthru
      _
  $region6: #{conv_bn_relu.2} parent=0 // loop_footer
    %s14 = sadd.s32 1, %s10
  $region7: #{conv_bn_relu.2} parent=0 // loop_footer_branch
    %9 = sbr.rel target = $region3
  $region8: #{conv_bn_relu.2} parent=0 // loop_exit
    _

</llo_original>
